<compile_context>
chip_gen: v6e
topology: v6e:2x2x1
jax: 0.10.0
libtpu: 0.0.40
codegen_flags: <defaults>
</compile_context>

<pallas_src>
import math
import numpy as np
import jax
import jax.numpy as jnp
from jax.experimental import pallas as pl
from jax.experimental.pallas import tpu as pltpu

# -------------------- static configuration (small shapes) --------------------
N = 2                    # batch
STATE_DIM = 8            # state_input_shape
H = W = 16               # visual grid (values in {-1,0,1,2})
EMB = 8                  # encoder.in_channels  (8 not in [4,12] -> second=True)
PATCH = 4                # synthetic encoder conv kernel = stride
NPATCH = (H // PATCH) * (W // PATCH)     # 16 visual tokens
PM = NPATCH // 2                          # per_modal_tokens = 8
T = 1 + 2 * PM                            # 17 tokens per batch element
NT = N * T                                # 34 stacked tokens
D = 32                   # encoder.visual_dim
HEADS = 2
HD = D // HEADS
FF = 64                  # transformer dim_feedforward
L = 2                    # transformer_params = [(2, 64), (2, 64)]
HIDDEN = 32              # append_hidden_shapes = [32]
OUT = 6                  # output_shape
CK = EMB * PATCH * PATCH                  # 128 im2col feature size
NVALS = 4                                 # embedding classes for values {-1,0,1,2}
GRID = H * W                              # 256 grid cells
WIDEC = NVALS * GRID                      # 1024 columns of the encoder constants
EPS = 1e-5                                # PyTorch LayerNorm eps
NEG = -1e30                               # additive mask value (finite, bf16-safe)
WIDE_ROWS = -(-(NPATCH + 1) // 8) * 8     # 24 rows: membership matrix + class row


# ---------------- packed-parameter slab layout (static offsets) ---------------
def _build_layout():
    layout = {}
    off = 0

    def add(name, rows, cols, align=8):
        nonlocal off
        layout[name] = (off, rows, cols)
        off += -(-rows // align) * align

    # matrices (row counts are naturally multiples of 8)
    add('wstate', STATE_DIM, D)
    for l in range(L):
        add(f'wqkv{l}', D, 3 * D)
        add(f'wo{l}', D, D)
        add(f'w1{l}', D, FF)
        add(f'w2{l}', FF, D)
    add('wh', 3 * D, HIDDEN)
    add('wlast', HIDDEN, OUT)
    # precomputed constants (attention mask + stacked pooling matrices)
    add('mask', NT, NT)
    add('pools', 3 * N, NT)
    # bias / gain vectors: one row each, no 8-row alignment padding
    vec_list = [('bpatch', D), ('bstate', D), ('bh', HIDDEN), ('blast', OUT)]
    for l in range(L):
        vec_list += [(f'bqkv{l}', 3 * D), (f'bo{l}', D),
                     (f'g1{l}', D), (f'be1{l}', D),
                     (f'b1{l}', FF), (f'b2{l}', D),
                     (f'g2{l}', D), (f'be2{l}', D)]
    for name, cols in vec_list:
        add(name, 1, cols, align=1)
    return layout, -(-off // 8) * 8


LAYOUT, SLAB_ROWS = _build_layout()


# ------------------------------- the kernel -----------------------------------
def loco_kernel(x_ref, wide_ref, mall_ref, slab_ref, out_ref, xbuf):
    f32 = jnp.float32
    bf16 = jnp.bfloat16

    def ld(name):                                 # bf16 matmul operand
        r, rows, cols = LAYOUT[name]
        return slab_ref[r:r + rows, 0:cols]

    def ldf(name):                                # f32 (bias / gain / mask)
        return ld(name).astype(f32)

    def layernorm(v, g, b):
        mu = jnp.mean(v, axis=-1, keepdims=True)
        c = v - mu
        var = jnp.mean(c * c, axis=-1, keepdims=True)
        return c * jax.lax.rsqrt(var + EPS) * g + b

    # ---- state tokens (both batch elements at once) ----
    st = jnp.maximum(
        jnp.dot(x_ref[:, 0:STATE_DIM].astype(bf16), ld('wstate'),
                preferred_element_type=f32) + ldf('bstate'), 0.0)           # (N, D)

    # ---- fused value-embedding + stride-4 patch conv, batch-stacked ----
    # token scratch row layout (all writes 8-aligned):
    #   rows [0,16)  visual tokens of batch 0
    #   rows [16,32) visual tokens of batch 1
    #   rows 32,33   state tokens of batch 0,1
    memb = wide_ref[0:NPATCH, :]                               # (16, 1024) bf16 0/1
    cls = wide_ref[NPATCH:NPATCH + 1, :].astype(f32)           # (1, 1024) class values
    v_rows = x_ref[:, STATE_DIM:]                              # (2, 256)
    v_tiled = jnp.concatenate([v_rows, v_rows, v_rows, v_rows], axis=1)     # (2, 1024)
    # inputs are integer-valued {-1,0,1,2}; floor(v+0.5) == round for them
    match = (jnp.floor(v_tiled + 0.5) == cls).astype(bf16)                  # (2, 1024)
    lhs = jnp.concatenate([memb * match[0:1, :],
                           memb * match[1:2, :]], axis=0)                   # (32, 1024) bf16
    vis = jnp.dot(lhs, mall_ref[...], preferred_element_type=f32)           # (32, D)
    xbuf[0:2 * NPATCH, :] = jnp.maximum(vis + ldf('bpatch'), 0.0)
    xbuf[2 * NPATCH:2 * NPATCH + N, :] = st

    x = xbuf[...]                                              # (34, D) f32

    # precomputed block-diagonal (per-batch) additive attention mask
    attn_mask = ldf('mask')                                    # (34, 34) f32
    scale = 1.0 / math.sqrt(HD)

    # ---- L x nn.TransformerEncoderLayer (post-norm, dropout=0, ReLU) ----
    for l in range(L):
        x_b = x.astype(bf16)
        qkv = jnp.dot(x_b, ld(f'wqkv{l}'),
                      preferred_element_type=f32) + ldf(f'bqkv{l}')         # (34, 3D) f32
        qkv_b = qkv.astype(bf16)
        wo = ld(f'wo{l}')
        attn = None
        for h in range(HEADS):
            q = qkv_b[:, h * HD:(h + 1) * HD]
            k = qkv_b[:, D + h * HD:D + (h + 1) * HD]
            v = qkv_b[:, 2 * D + h * HD:2 * D + (h + 1) * HD]
            s = jax.lax.dot_general(q, k, (((1,), (1,)), ((), ())),
                                    preferred_element_type=f32) * scale + attn_mask
            s = s - jnp.max(s, axis=-1, keepdims=True)
            e = jnp.exp(s)
            # approx reciprocal (EUP): ~2^-12 rel. error, covered by test tolerance
            p = e * pl.reciprocal(jnp.sum(e, axis=-1, keepdims=True), approx=True)
            ctx = jnp.dot(p.astype(bf16), v, preferred_element_type=f32)    # (34, HD)
            part = jnp.dot(ctx.astype(bf16), wo[h * HD:(h + 1) * HD, :],
                           preferred_element_type=f32)                      # (34, D)
            attn = part if attn is None else attn + part
        x = layernorm(x + attn + ldf(f'bo{l}'), ldf(f'g1{l}'), ldf(f'be1{l}'))
        x_b = x.astype(bf16)
        ff = jnp.maximum(jnp.dot(x_b, ld(f'w1{l}'),
                                 preferred_element_type=f32) + ldf(f'b1{l}'), 0.0)
        ff = jnp.dot(ff.astype(bf16), ld(f'w2{l}'),
                     preferred_element_type=f32) + ldf(f'b2{l}')
        x = layernorm(x + ff, ldf(f'g2{l}'), ldf(f'be2{l}'))

    # ---- pooling: one constant (6, 34) x (34, D) matmul ----
    # rows [0:N] state token, [N:2N] first-group mean, [2N:3N] second-group mean
    pooled = jnp.dot(ld('pools'), x.astype(bf16),
                     preferred_element_type=f32)               # (6, D)
    pooled_b = pooled.astype(bf16)

    # ---- visual_seq_append_fcs: Linear -> ReLU -> Linear ----
    wh = ld('wh')                                              # (3D, HIDDEN) bf16
    hidden = jnp.maximum(
        jnp.dot(pooled_b[0:N, :], wh[0:D, :], preferred_element_type=f32)
        + jnp.dot(pooled_b[N:2 * N, :], wh[D:2 * D, :], preferred_element_type=f32)
        + jnp.dot(pooled_b[2 * N:3 * N, :], wh[2 * D:3 * D, :], preferred_element_type=f32)
        + ldf('bh'), 0.0)                                      # (N, HIDDEN)
    out_ref[...] = jnp.dot(hidden.astype(bf16), ld('wlast'),
                           preferred_element_type=f32) + ldf('blast')


# ------------------------------- parameters -----------------------------------
def init_params(key):
    ks = iter(jax.random.split(key, 32))

    def nrm(shape, s=0.1):
        return jax.random.normal(next(ks), shape, jnp.float32) * s

    # nn.Embedding(4, EMB) init N(0,1); then weight[3]*=3.0, weight[:3]*=0.5
    emb = jax.random.normal(next(ks), (4, EMB), jnp.float32)
    emb = emb.at[3].multiply(3.0)
    emb = emb.at[:3].multiply(0.5)

    return dict(
        emb=emb,
        wpatch=nrm((CK, D)), bpatch=nrm((1, D), 0.01),
        wstate=nrm((STATE_DIM, D)), bstate=nrm((1, D), 0.01),
        wqkv=nrm((L, D, 3 * D)), bqkv=nrm((L, 1, 3 * D), 0.01),
        wo=nrm((L, D, D)), bo=nrm((L, 1, D), 0.01),
        g1=jnp.ones((L, 1, D), jnp.float32), be1=jnp.zeros((L, 1, D), jnp.float32),
        w1=nrm((L, D, FF)), bf1=nrm((L, 1, FF), 0.01),
        w2=nrm((L, FF, D)), bf2=nrm((L, 1, D), 0.01),
        g2=jnp.ones((L, 1, D), jnp.float32), be2=jnp.zeros((L, 1, D), jnp.float32),
        wh=nrm((3 * D, HIDDEN)), bh=nrm((1, HIDDEN), 0.01),
        wlast=nrm((HIDDEN, OUT), 0.003), blast=jnp.zeros((1, OUT), jnp.float32),
    )


def prepare_params(p):
    """One-time packing of parameters + constants into 3 bf16 lane-dense slabs."""
    emb = np.asarray(p['emb'], np.float32)                       # (4, EMB)
    wpatch = np.asarray(p['wpatch'], np.float32)                 # (CK, D)
    wp3 = wpatch.reshape(PATCH * PATCH, EMB, D)                  # [pos, ch, d]
    q = np.einsum('ce,ped->cpd', emb, wp3)                       # (4, 16, D)

    g = np.arange(GRID)
    gh, gw = g // W, g % W
    pos = (gh % PATCH) * PATCH + (gw % PATCH)                    # position within patch
    pid = (gh // PATCH) * (W // PATCH) + (gw // PATCH)           # patch index

    # fused value-embedding + patch-conv table: row c*256+g = emb[c] @ Wconv[pos(g)]
    mall = q[:, pos, :].reshape(NVALS * GRID, D)                 # (1024, D)

    member = (pid[None, :] == np.arange(NPATCH)[:, None]).astype(np.float32)  # (16,256)
    wide = np.zeros((WIDE_ROWS, WIDEC), np.float32)
    wide[0:NPATCH] = np.tile(member, (1, NVALS))                 # membership, tiled x4
    wide[NPATCH] = np.repeat(np.arange(NVALS, dtype=np.float32) - 1.0, GRID)  # raw values

    slab = np.zeros((SLAB_ROWS, 128), np.float32)

    def put(name, val):
        r, rows, cols = LAYOUT[name]
        slab[r:r + rows, 0:cols] = np.asarray(val, np.float32).reshape(rows, cols)

    put('wstate', p['wstate'])
    for l in range(L):
        put(f'wqkv{l}', p['wqkv'][l]); put(f'wo{l}', p['wo'][l])
        put(f'w1{l}', p['w1'][l]);     put(f'w2{l}', p['w2'][l])
        put(f'bqkv{l}', p['bqkv'][l]); put(f'bo{l}', p['bo'][l])
        put(f'g1{l}', p['g1'][l]);     put(f'be1{l}', p['be1'][l])
        put(f'b1{l}', p['bf1'][l]);    put(f'b2{l}', p['bf2'][l])
        put(f'g2{l}', p['g2'][l]);     put(f'be2{l}', p['be2'][l])
    put('wh', p['wh']); put('wlast', p['wlast'])
    put('bpatch', p['bpatch']); put('bstate', p['bstate'])
    put('bh', p['bh']); put('blast', p['blast'])

    # constant block-diagonal (per-batch) additive attention mask
    rows = np.arange(NT)
    bid = np.where(rows >= 2 * NPATCH, rows - 2 * NPATCH, rows // NPATCH)
    put('mask', np.where(bid[:, None] == bid[None, :], 0.0, NEG))

    # stacked pooling matrices (state token, first-group mean, second-group mean)
    pools = np.zeros((3 * N, NT), np.float32)
    for n in range(N):
        pools[n, 2 * NPATCH + n] = 1.0
        pools[N + n, n * NPATCH: n * NPATCH + PM] = 1.0 / PM
        pools[2 * N + n, n * NPATCH + PM: n * NPATCH + 2 * PM] = 1.0 / PM
    put('pools', pools)

    bf = jnp.bfloat16
    return (jnp.asarray(wide).astype(bf),
            jnp.asarray(mall).astype(bf),
            jnp.asarray(slab).astype(bf))


# --------------------------------- wrapper -------------------------------------
@jax.jit
def forward(x, wide, mall, slab):
    vspec = pl.BlockSpec(memory_space=pltpu.MemorySpace.VMEM)    # whole array in VMEM
    return pl.pallas_call(
        loco_kernel,
        out_shape=jax.ShapeDtypeStruct((N, OUT), jnp.float32),
        in_specs=[vspec] * 4,
        out_specs=vspec,
        scratch_shapes=[pltpu.VMEM((NT, D), jnp.float32)],       # token matrix scratch
    )(x, wide, mall, slab)
# TODO(synk): on v7x a grid=(N,) with dimension_semantics=("parallel",) could split the
# two 17-token streams across both TensorCores (modest win); pure overhead on single-TC
# v5e/v6e, so it stays disabled here.


# -------------------------- pure-JAX reference (checking) ----------------------
def _ln_ref(v, g, b):
    mu = jnp.mean(v, axis=-1, keepdims=True)
    var = jnp.mean((v - mu) ** 2, axis=-1, keepdims=True)
    return (v - mu) * jax.lax.rsqrt(var + EPS) * g + b


def reference(x, params):
    state = x[:, :STATE_DIM]
    visual = x[:, STATE_DIM:].reshape(N, H, W)
    idx = jnp.round(visual).astype(jnp.int32) + 1
    emb = jnp.take(params['emb'], idx, axis=0)                   # (N, H, W, EMB)
    pch = emb.reshape(N, H // PATCH, PATCH, W // PATCH, PATCH, EMB)
    patches = pch.transpose(0, 1, 3, 2, 4, 5).reshape(N, NPATCH, CK)
    outs = []
    for n in range(N):
        vis = jax.nn.relu(patches[n] @ params['wpatch'] + params['bpatch'])
        stt = jax.nn.relu(state[n:n + 1] @ params['wstate'] + params['bstate'])
        xt = jnp.concatenate([stt, vis], axis=0)                 # (T, D)
        for l in range(L):
            qkv = xt @ params['wqkv'][l] + params['bqkv'][l]
            heads = []
            for h in range(HEADS):
                qh = qkv[:, h * HD:(h + 1) * HD]
                kh = qkv[:, D + h * HD:D + (h + 1) * HD]
                vh = qkv[:, 2 * D + h * HD:2 * D + (h + 1) * HD]
                sc = (qh @ kh.T) / math.sqrt(HD)
                heads.append(jax.nn.softmax(sc, axis=-1) @ vh)
            ctx = jnp.concatenate(heads, axis=-1)
            att = ctx @ params['wo'][l] + params['bo'][l]
            xt = _ln_ref(xt + att, params['g1'][l], params['be1'][l])
            ffh = jax.nn.relu(xt @ params['w1'][l] + params['bf1'][l])
            ffh = ffh @ params['w2'][l] + params['bf2'][l]
            xt = _ln_ref(xt + ffh, params['g2'][l], params['be2'][l])
        o_s = xt[0:1]
        o_f = jnp.mean(xt[1:1 + PM], axis=0, keepdims=True)
        o_2 = jnp.mean(xt[1 + PM:1 + 2 * PM], axis=0, keepdims=True)
        outs.append(jnp.concatenate([o_s, o_f, o_2], axis=-1))
    feats = jnp.concatenate(outs, axis=0)
    hid = jax.nn.relu(feats @ params['wh'] + params['bh'])
    return hid @ params['wlast'] + params['blast']


if __name__ == "__main__":
    key = jax.random.PRNGKey(0)
    kp, kx1, kx2 = jax.random.split(key, 3)
    params = init_params(kp)
    wide, mall, slab = prepare_params(params)

    state_in = jax.random.normal(kx1, (N, STATE_DIM), jnp.float32)
    visual_in = jax.random.randint(kx2, (N, H * W), -1, 3).astype(jnp.float32)
    x = jnp.concatenate([state_in, visual_in], axis=-1)          # (N, 8 + 256)

    out = jax.block_until_ready(forward(x, wide, mall, slab))
    assert out.shape == (N, OUT)
    assert bool(jnp.all(jnp.isfinite(out)))

    ref = reference(x, params)
    # tolerance covers bf16 MXU operands + approx EUP reciprocal in the softmax
    np.testing.assert_allclose(np.asarray(out), np.asarray(ref), rtol=5e-2, atol=5e-3)
    # TODO(synk): detach/state_detach are autograd-only flags; no effect on forward values.
    print("KERNEL_OK")
</pallas_src>

<mosaic_0001>
module attributes {stable_mosaic.version = 11 : i64} {
  func.func @loco_kernel(%arg0: memref<2x264xf32, #tpu.memory_space<vmem>>, %arg1: memref<24x1024xbf16, #tpu.memory_space<vmem>>, %arg2: memref<1024x32xbf16, #tpu.memory_space<vmem>>, %arg3: memref<528x128xbf16, #tpu.memory_space<vmem>>, %arg4: memref<2x6xf32, #tpu.memory_space<vmem>>, %arg5: memref<34x32xf32, #tpu.memory_space<vmem>>) attributes {dimension_semantics = [], scalar_prefetch = 0 : i64, scratch_operands = 1 : i64, tpu.core_type = #tpu.core_type<tc>} {
    %c0 = arith.constant 0 : index
    %c0_0 = arith.constant 0 : index
    %0 = vector.load %arg0[%c0, %c0_0] : memref<2x264xf32, #tpu.memory_space<vmem>>, vector<2x8xf32>
    %1 = arith.truncf %0 : vector<2x8xf32> to vector<2x8xbf16>
    %c0_1 = arith.constant 0 : index
    %c0_2 = arith.constant 0 : index
    %2 = vector.load %arg3[%c0_1, %c0_2] : memref<528x128xbf16, #tpu.memory_space<vmem>>, vector<8x32xbf16>
    %cst = arith.constant dense<0.000000e+00> : vector<2x32xf32>
    %3 = tpu.matmul %1, %2, %cst {dimension_numbers = #tpu.dot_dimension_numbers<[1], [0], [0], [1], [0, 0, 1, 1], [], []>} : vector<2x8xbf16>, vector<8x32xbf16>, vector<2x32xf32> -> vector<2x32xf32>
    %c505 = arith.constant 505 : index
    %c0_3 = arith.constant 0 : index
    %4 = vector.load %arg3[%c505, %c0_3] : memref<528x128xbf16, #tpu.memory_space<vmem>>, vector<1x32xbf16>
    %5 = arith.extf %4 : vector<1x32xbf16> to vector<1x32xf32>
    %6 = vector.broadcast %5 : vector<1x32xf32> to vector<2x32xf32>
    %7 = arith.addf %3, %6 : vector<2x32xf32>
    %cst_4 = arith.constant 0.000000e+00 : f32
    %8 = vector.broadcast %cst_4 : f32 to vector<2x32xf32>
    %9 = arith.maximumf %7, %8 : vector<2x32xf32>
    %c0_5 = arith.constant 0 : index
    %c0_6 = arith.constant 0 : index
    %10 = vector.load %arg1[%c0_5, %c0_6] : memref<24x1024xbf16, #tpu.memory_space<vmem>>, vector<16x1024xbf16>
    %c16 = arith.constant 16 : index
    %c0_7 = arith.constant 0 : index
    %11 = vector.load %arg1[%c16, %c0_7] : memref<24x1024xbf16, #tpu.memory_space<vmem>>, vector<1x1024xbf16>
    %12 = arith.extf %11 : vector<1x1024xbf16> to vector<1x1024xf32>
    %c0_8 = arith.constant 0 : index
    %c8 = arith.constant 8 : index
    %13 = vector.load %arg0[%c0_8, %c8] : memref<2x264xf32, #tpu.memory_space<vmem>>, vector<2x256xf32>
    %14 = tpu.concatenate %13, %13, %13, %13 in 1 : vector<2x256xf32>, vector<2x256xf32>, vector<2x256xf32>, vector<2x256xf32> -> vector<2x1024xf32>
    %cst_9 = arith.constant 5.000000e-01 : f32
    %15 = vector.broadcast %cst_9 : f32 to vector<2x1024xf32>
    %16 = arith.addf %14, %15 : vector<2x1024xf32>
    %17 = math.floor %16 : vector<2x1024xf32>
    %18 = vector.broadcast %12 : vector<1x1024xf32> to vector<2x1024xf32>
    %19 = arith.cmpf oeq, %17, %18 : vector<2x1024xf32>
    %20 = arith.extui %19 : vector<2x1024xi1> to vector<2x1024xi32>
    %21 = arith.sitofp %20 : vector<2x1024xi32> to vector<2x1024xf32>
    %22 = arith.truncf %21 : vector<2x1024xf32> to vector<2x1024xbf16>
    %23 = vector.extract_strided_slice %22 {offsets = [0, 0], sizes = [1, 1024], strides = [1, 1]} : vector<2x1024xbf16> to vector<1x1024xbf16>
    %24 = vector.broadcast %23 : vector<1x1024xbf16> to vector<16x1024xbf16>
    %25 = arith.mulf %10, %24 : vector<16x1024xbf16>
    %26 = vector.extract_strided_slice %22 {offsets = [1, 0], sizes = [1, 1024], strides = [1, 1]} : vector<2x1024xbf16> to vector<1x1024xbf16>
    %27 = vector.broadcast %26 : vector<1x1024xbf16> to vector<16x1024xbf16>
    %28 = arith.mulf %10, %27 : vector<16x1024xbf16>
    %29 = tpu.concatenate %25, %28 in 0 : vector<16x1024xbf16>, vector<16x1024xbf16> -> vector<32x1024xbf16>
    %c0_10 = arith.constant 0 : index
    %c0_11 = arith.constant 0 : index
    %30 = vector.load %arg2[%c0_10, %c0_11] : memref<1024x32xbf16, #tpu.memory_space<vmem>>, vector<1024x32xbf16>
    %cst_12 = arith.constant dense<0.000000e+00> : vector<32x32xf32>
    %31 = tpu.matmul %29, %30, %cst_12 {dimension_numbers = #tpu.dot_dimension_numbers<[1], [0], [0], [1], [0, 0, 1, 1], [], []>} : vector<32x1024xbf16>, vector<1024x32xbf16>, vector<32x32xf32> -> vector<32x32xf32>
    %c504 = arith.constant 504 : index
    %c0_13 = arith.constant 0 : index
    %32 = vector.load %arg3[%c504, %c0_13] : memref<528x128xbf16, #tpu.memory_space<vmem>>, vector<1x32xbf16>
    %33 = arith.extf %32 : vector<1x32xbf16> to vector<1x32xf32>
    %34 = vector.broadcast %33 : vector<1x32xf32> to vector<32x32xf32>
    %35 = arith.addf %31, %34 : vector<32x32xf32>
    %cst_14 = arith.constant 0.000000e+00 : f32
    %36 = vector.broadcast %cst_14 : f32 to vector<32x32xf32>
    %37 = arith.maximumf %35, %36 : vector<32x32xf32>
    %c0_15 = arith.constant 0 : index
    %c0_16 = arith.constant 0 : index
    %38 = vector.load %arg5[%c0_15, %c0_16] : memref<34x32xf32, #tpu.memory_space<vmem>>, vector<32x32xf32>
    tpu.vector_store %arg5[%c0_15, %c0_16], %37 {strides = array<i32>} : memref<34x32xf32, #tpu.memory_space<vmem>>, vector<32x32xf32>,
    %c32 = arith.constant 32 : index
    %c0_17 = arith.constant 0 : index
    %39 = vector.load %arg5[%c32, %c0_17] : memref<34x32xf32, #tpu.memory_space<vmem>>, vector<2x32xf32>
    tpu.vector_store %arg5[%c32, %c0_17], %9 {strides = array<i32>} : memref<34x32xf32, #tpu.memory_space<vmem>>, vector<2x32xf32>,
    %c0_18 = arith.constant 0 : index
    %c0_19 = arith.constant 0 : index
    %40 = vector.load %arg5[%c0_18, %c0_19] : memref<34x32xf32, #tpu.memory_space<vmem>>, vector<34x32xf32>
    %c456 = arith.constant 456 : index
    %c0_20 = arith.constant 0 : index
    %41 = vector.load %arg3[%c456, %c0_20] : memref<528x128xbf16, #tpu.memory_space<vmem>>, vector<34x34xbf16>
    %42 = arith.extf %41 : vector<34x34xbf16> to vector<34x34xf32>
    %43 = arith.truncf %40 : vector<34x32xf32> to vector<34x32xbf16>
    %c8_21 = arith.constant 8 : index
    %c0_22 = arith.constant 0 : index
    %44 = vector.load %arg3[%c8_21, %c0_22] : memref<528x128xbf16, #tpu.memory_space<vmem>>, vector<32x96xbf16>
    %cst_23 = arith.constant dense<0.000000e+00> : vector<34x96xf32>
    %45 = tpu.matmul %43, %44, %cst_23 {dimension_numbers = #tpu.dot_dimension_numbers<[1], [0], [0], [1], [0, 0, 1, 1], [], []>} : vector<34x32xbf16>, vector<32x96xbf16>, vector<34x96xf32> -> vector<34x96xf32>
    %c508 = arith.constant 508 : index
    %c0_24 = arith.constant 0 : index
    %46 = vector.load %arg3[%c508, %c0_24] : memref<528x128xbf16, #tpu.memory_space<vmem>>, vector<1x96xbf16>
    %47 = arith.extf %46 : vector<1x96xbf16> to vector<1x96xf32>
    %48 = vector.broadcast %47 : vector<1x96xf32> to vector<34x96xf32>
    %49 = arith.addf %45, %48 : vector<34x96xf32>
    %50 = arith.truncf %49 : vector<34x96xf32> to vector<34x96xbf16>
    %c40 = arith.constant 40 : index
    %c0_25 = arith.constant 0 : index
    %51 = vector.load %arg3[%c40, %c0_25] : memref<528x128xbf16, #tpu.memory_space<vmem>>, vector<32x32xbf16>
    %52 = vector.extract_strided_slice %50 {offsets = [0, 0], sizes = [34, 16], strides = [1, 1]} : vector<34x96xbf16> to vector<34x16xbf16>
    %53 = vector.extract_strided_slice %50 {offsets = [0, 32], sizes = [34, 16], strides = [1, 1]} : vector<34x96xbf16> to vector<34x16xbf16>
    %54 = vector.extract_strided_slice %50 {offsets = [0, 64], sizes = [34, 16], strides = [1, 1]} : vector<34x96xbf16> to vector<34x16xbf16>
    %cst_26 = arith.constant dense<0.000000e+00> : vector<34x34xf32>
    %55 = tpu.matmul %52, %53, %cst_26 {dimension_numbers = #tpu.dot_dimension_numbers<[1], [1], [0], [0], [0, 0, 1, 0], [], []>} : vector<34x16xbf16>, vector<34x16xbf16>, vector<34x34xf32> -> vector<34x34xf32>
    %cst_27 = arith.constant 2.500000e-01 : f32
    %56 = vector.broadcast %cst_27 : f32 to vector<34x34xf32>
    %57 = arith.mulf %55, %56 : vector<34x34xf32>
    %58 = arith.addf %57, %42 : vector<34x34xf32>
    %cst_28 = arith.constant dense<0xFF800000> : vector<34xf32>
    %59 = vector.multi_reduction <maximumf>, %58, %cst_28 [1] : vector<34x34xf32> to vector<34xf32>
    %60 = vector.shape_cast %59 : vector<34xf32> to vector<34x1xf32>
    %61 = vector.broadcast %60 : vector<34x1xf32> to vector<34x34xf32>
    %62 = arith.subf %58, %61 : vector<34x34xf32>
    %63 = math.exp %62 : vector<34x34xf32>
    %cst_29 = arith.constant dense<0.000000e+00> : vector<34xf32>
    %64 = vector.multi_reduction <add>, %63, %cst_29 [1] : vector<34x34xf32> to vector<34xf32>
    %65 = vector.shape_cast %64 : vector<34xf32> to vector<34x1xf32>
    %66 = tpu.reciprocal %65 {approx = true} : vector<34x1xf32> -> vector<34x1xf32>
    %67 = vector.broadcast %66 : vector<34x1xf32> to vector<34x34xf32>
    %68 = arith.mulf %63, %67 : vector<34x34xf32>
    %69 = arith.truncf %68 : vector<34x34xf32> to vector<34x34xbf16>
    %cst_30 = arith.constant dense<0.000000e+00> : vector<34x16xf32>
    %70 = tpu.matmul %69, %54, %cst_30 {dimension_numbers = #tpu.dot_dimension_numbers<[1], [0], [0], [1], [0, 0, 1, 1], [], []>} : vector<34x34xbf16>, vector<34x16xbf16>, vector<34x16xf32> -> vector<34x16xf32>
    %71 = arith.truncf %70 : vector<34x16xf32> to vector<34x16xbf16>
    %72 = vector.extract_strided_slice %51 {offsets = [0, 0], sizes = [16, 32], strides = [1, 1]} : vector<32x32xbf16> to vector<16x32xbf16>
    %cst_31 = arith.constant dense<0.000000e+00> : vector<34x32xf32>
    %73 = tpu.matmul %71, %72, %cst_31 {dimension_numbers = #tpu.dot_dimension_numbers<[1], [0], [0], [1], [0, 0, 1, 1], [], []>} : vector<34x16xbf16>, vector<16x32xbf16>, vector<34x32xf32> -> vector<34x32xf32>
    %74 = vector.extract_strided_slice %50 {offsets = [0, 16], sizes = [34, 16], strides = [1, 1]} : vector<34x96xbf16> to vector<34x16xbf16>
    %75 = vector.extract_strided_slice %50 {offsets = [0, 48], sizes = [34, 16], strides = [1, 1]} : vector<34x96xbf16> to vector<34x16xbf16>
    %76 = vector.extract_strided_slice %50 {offsets = [0, 80], sizes = [34, 16], strides = [1, 1]} : vector<34x96xbf16> to vector<34x16xbf16>
    %cst_32 = arith.constant dense<0.000000e+00> : vector<34x34xf32>
    %77 = tpu.matmul %74, %75, %cst_32 {dimension_numbers = #tpu.dot_dimension_numbers<[1], [1], [0], [0], [0, 0, 1, 0], [], []>} : vector<34x16xbf16>, vector<34x16xbf16>, vector<34x34xf32> -> vector<34x34xf32>
    %cst_33 = arith.constant 2.500000e-01 : f32
    %78 = vector.broadcast %cst_33 : f32 to vector<34x34xf32>
    %79 = arith.mulf %77, %78 : vector<34x34xf32>
    %80 = arith.addf %79, %42 : vector<34x34xf32>
    %cst_34 = arith.constant dense<0xFF800000> : vector<34xf32>
    %81 = vector.multi_reduction <maximumf>, %80, %cst_34 [1] : vector<34x34xf32> to vector<34xf32>
    %82 = vector.shape_cast %81 : vector<34xf32> to vector<34x1xf32>
    %83 = vector.broadcast %82 : vector<34x1xf32> to vector<34x34xf32>
    %84 = arith.subf %80, %83 : vector<34x34xf32>
    %85 = math.exp %84 : vector<34x34xf32>
    %cst_35 = arith.constant dense<0.000000e+00> : vector<34xf32>
    %86 = vector.multi_reduction <add>, %85, %cst_35 [1] : vector<34x34xf32> to vector<34xf32>
    %87 = vector.shape_cast %86 : vector<34xf32> to vector<34x1xf32>
    %88 = tpu.reciprocal %87 {approx = true} : vector<34x1xf32> -> vector<34x1xf32>
    %89 = vector.broadcast %88 : vector<34x1xf32> to vector<34x34xf32>
    %90 = arith.mulf %85, %89 : vector<34x34xf32>
    %91 = arith.truncf %90 : vector<34x34xf32> to vector<34x34xbf16>
    %cst_36 = arith.constant dense<0.000000e+00> : vector<34x16xf32>
    %92 = tpu.matmul %91, %76, %cst_36 {dimension_numbers = #tpu.dot_dimension_numbers<[1], [0], [0], [1], [0, 0, 1, 1], [], []>} : vector<34x34xbf16>, vector<34x16xbf16>, vector<34x16xf32> -> vector<34x16xf32>
    %93 = arith.truncf %92 : vector<34x16xf32> to vector<34x16xbf16>
    %94 = vector.extract_strided_slice %51 {offsets = [16, 0], sizes = [16, 32], strides = [1, 1]} : vector<32x32xbf16> to vector<16x32xbf16>
    %cst_37 = arith.constant dense<0.000000e+00> : vector<34x32xf32>
    %95 = tpu.matmul %93, %94, %cst_37 {dimension_numbers = #tpu.dot_dimension_numbers<[1], [0], [0], [1], [0, 0, 1, 1], [], []>} : vector<34x16xbf16>, vector<16x32xbf16>, vector<34x32xf32> -> vector<34x32xf32>
    %96 = arith.addf %73, %95 : vector<34x32xf32>
    %97 = arith.addf %40, %96 : vector<34x32xf32>
    %c509 = arith.constant 509 : index
    %c0_38 = arith.constant 0 : index
    %98 = vector.load %arg3[%c509, %c0_38] : memref<528x128xbf16, #tpu.memory_space<vmem>>, vector<1x32xbf16>
    %99 = arith.extf %98 : vector<1x32xbf16> to vector<1x32xf32>
    %100 = vector.broadcast %99 : vector<1x32xf32> to vector<34x32xf32>
    %101 = arith.addf %97, %100 : vector<34x32xf32>
    %c510 = arith.constant 510 : index
    %c0_39 = arith.constant 0 : index
    %102 = vector.load %arg3[%c510, %c0_39] : memref<528x128xbf16, #tpu.memory_space<vmem>>, vector<1x32xbf16>
    %103 = arith.extf %102 : vector<1x32xbf16> to vector<1x32xf32>
    %c511 = arith.constant 511 : index
    %c0_40 = arith.constant 0 : index
    %104 = vector.load %arg3[%c511, %c0_40] : memref<528x128xbf16, #tpu.memory_space<vmem>>, vector<1x32xbf16>
    %105 = arith.extf %104 : vector<1x32xbf16> to vector<1x32xf32>
    %cst_41 = arith.constant dense<0.000000e+00> : vector<34xf32>
    %106 = vector.multi_reduction <add>, %101, %cst_41 [1] : vector<34x32xf32> to vector<34xf32>
    %107 = vector.shape_cast %106 : vector<34xf32> to vector<34x1xf32>
    %cst_42 = arith.constant 3.200000e+01 : f32
    %108 = vector.broadcast %cst_42 : f32 to vector<34x1xf32>
    %109 = arith.divf %107, %108 : vector<34x1xf32>
    %110 = vector.broadcast %109 : vector<34x1xf32> to vector<34x32xf32>
    %111 = arith.subf %101, %110 : vector<34x32xf32>
    %112 = arith.mulf %111, %111 : vector<34x32xf32>
    %cst_43 = arith.constant dense<0.000000e+00> : vector<34xf32>
    %113 = vector.multi_reduction <add>, %112, %cst_43 [1] : vector<34x32xf32> to vector<34xf32>
    %114 = vector.shape_cast %113 : vector<34xf32> to vector<34x1xf32>
    %cst_44 = arith.constant 3.200000e+01 : f32
    %115 = vector.broadcast %cst_44 : f32 to vector<34x1xf32>
    %116 = arith.divf %114, %115 : vector<34x1xf32>
    %cst_45 = arith.constant 9.99999974E-6 : f32
    %117 = vector.broadcast %cst_45 : f32 to vector<34x1xf32>
    %118 = arith.addf %116, %117 : vector<34x1xf32>
    %119 = math.rsqrt %118 : vector<34x1xf32>
    %120 = vector.broadcast %119 : vector<34x1xf32> to vector<34x32xf32>
    %121 = arith.mulf %111, %120 : vector<34x32xf32>
    %122 = vector.broadcast %103 : vector<1x32xf32> to vector<34x32xf32>
    %123 = arith.mulf %121, %122 : vector<34x32xf32>
    %124 = vector.broadcast %105 : vector<1x32xf32> to vector<34x32xf32>
    %125 = arith.addf %123, %124 : vector<34x32xf32>
    %126 = arith.truncf %125 : vector<34x32xf32> to vector<34x32xbf16>
    %c72 = arith.constant 72 : index
    %c0_46 = arith.constant 0 : index
    %127 = vector.load %arg3[%c72, %c0_46] : memref<528x128xbf16, #tpu.memory_space<vmem>>, vector<32x64xbf16>
    %cst_47 = arith.constant dense<0.000000e+00> : vector<34x64xf32>
    %128 = tpu.matmul %126, %127, %cst_47 {dimension_numbers = #tpu.dot_dimension_numbers<[1], [0], [0], [1], [0, 0, 1, 1], [], []>} : vector<34x32xbf16>, vector<32x64xbf16>, vector<34x64xf32> -> vector<34x64xf32>
    %c512 = arith.constant 512 : index
    %c0_48 = arith.constant 0 : index
    %129 = vector.load %arg3[%c512, %c0_48] : memref<528x128xbf16, #tpu.memory_space<vmem>>, vector<1x64xbf16>
    %130 = arith.extf %129 : vector<1x64xbf16> to vector<1x64xf32>
    %131 = vector.broadcast %130 : vector<1x64xf32> to vector<34x64xf32>
    %132 = arith.addf %128, %131 : vector<34x64xf32>
    %cst_49 = arith.constant 0.000000e+00 : f32
    %133 = vector.broadcast %cst_49 : f32 to vector<34x64xf32>
    %134 = arith.maximumf %132, %133 : vector<34x64xf32>
    %135 = arith.truncf %134 : vector<34x64xf32> to vector<34x64xbf16>
    %c104 = arith.constant 104 : index
    %c0_50 = arith.constant 0 : index
    %136 = vector.load %arg3[%c104, %c0_50] : memref<528x128xbf16, #tpu.memory_space<vmem>>, vector<64x32xbf16>
    %cst_51 = arith.constant dense<0.000000e+00> : vector<34x32xf32>
    %137 = tpu.matmul %135, %136, %cst_51 {dimension_numbers = #tpu.dot_dimension_numbers<[1], [0], [0], [1], [0, 0, 1, 1], [], []>} : vector<34x64xbf16>, vector<64x32xbf16>, vector<34x32xf32> -> vector<34x32xf32>
    %c513 = arith.constant 513 : index
    %c0_52 = arith.constant 0 : index
    %138 = vector.load %arg3[%c513, %c0_52] : memref<528x128xbf16, #tpu.memory_space<vmem>>, vector<1x32xbf16>
    %139 = arith.extf %138 : vector<1x32xbf16> to vector<1x32xf32>
    %140 = vector.broadcast %139 : vector<1x32xf32> to vector<34x32xf32>
    %141 = arith.addf %137, %140 : vector<34x32xf32>
    %142 = arith.addf %125, %141 : vector<34x32xf32>
    %c514 = arith.constant 514 : index
    %c0_53 = arith.constant 0 : index
    %143 = vector.load %arg3[%c514, %c0_53] : memref<528x128xbf16, #tpu.memory_space<vmem>>, vector<1x32xbf16>
    %144 = arith.extf %143 : vector<1x32xbf16> to vector<1x32xf32>
    %c515 = arith.constant 515 : index
    %c0_54 = arith.constant 0 : index
    %145 = vector.load %arg3[%c515, %c0_54] : memref<528x128xbf16, #tpu.memory_space<vmem>>, vector<1x32xbf16>
    %146 = arith.extf %145 : vector<1x32xbf16> to vector<1x32xf32>
    %cst_55 = arith.constant dense<0.000000e+00> : vector<34xf32>
    %147 = vector.multi_reduction <add>, %142, %cst_55 [1] : vector<34x32xf32> to vector<34xf32>
    %148 = vector.shape_cast %147 : vector<34xf32> to vector<34x1xf32>
    %cst_56 = arith.constant 3.200000e+01 : f32
    %149 = vector.broadcast %cst_56 : f32 to vector<34x1xf32>
    %150 = arith.divf %148, %149 : vector<34x1xf32>
    %151 = vector.broadcast %150 : vector<34x1xf32> to vector<34x32xf32>
    %152 = arith.subf %142, %151 : vector<34x32xf32>
    %153 = arith.mulf %152, %152 : vector<34x32xf32>
    %cst_57 = arith.constant dense<0.000000e+00> : vector<34xf32>
    %154 = vector.multi_reduction <add>, %153, %cst_57 [1] : vector<34x32xf32> to vector<34xf32>
    %155 = vector.shape_cast %154 : vector<34xf32> to vector<34x1xf32>
    %cst_58 = arith.constant 3.200000e+01 : f32
    %156 = vector.broadcast %cst_58 : f32 to vector<34x1xf32>
    %157 = arith.divf %155, %156 : vector<34x1xf32>
    %cst_59 = arith.constant 9.99999974E-6 : f32
    %158 = vector.broadcast %cst_59 : f32 to vector<34x1xf32>
    %159 = arith.addf %157, %158 : vector<34x1xf32>
    %160 = math.rsqrt %159 : vector<34x1xf32>
    %161 = vector.broadcast %160 : vector<34x1xf32> to vector<34x32xf32>
    %162 = arith.mulf %152, %161 : vector<34x32xf32>
    %163 = vector.broadcast %144 : vector<1x32xf32> to vector<34x32xf32>
    %164 = arith.mulf %162, %163 : vector<34x32xf32>
    %165 = vector.broadcast %146 : vector<1x32xf32> to vector<34x32xf32>
    %166 = arith.addf %164, %165 : vector<34x32xf32>
    %167 = arith.truncf %166 : vector<34x32xf32> to vector<34x32xbf16>
    %c168 = arith.constant 168 : index
    %c0_60 = arith.constant 0 : index
    %168 = vector.load %arg3[%c168, %c0_60] : memref<528x128xbf16, #tpu.memory_space<vmem>>, vector<32x96xbf16>
    %cst_61 = arith.constant dense<0.000000e+00> : vector<34x96xf32>
    %169 = tpu.matmul %167, %168, %cst_61 {dimension_numbers = #tpu.dot_dimension_numbers<[1], [0], [0], [1], [0, 0, 1, 1], [], []>} : vector<34x32xbf16>, vector<32x96xbf16>, vector<34x96xf32> -> vector<34x96xf32>
    %c516 = arith.constant 516 : index
    %c0_62 = arith.constant 0 : index
    %170 = vector.load %arg3[%c516, %c0_62] : memref<528x128xbf16, #tpu.memory_space<vmem>>, vector<1x96xbf16>
    %171 = arith.extf %170 : vector<1x96xbf16> to vector<1x96xf32>
    %172 = vector.broadcast %171 : vector<1x96xf32> to vector<34x96xf32>
    %173 = arith.addf %169, %172 : vector<34x96xf32>
    %174 = arith.truncf %173 : vector<34x96xf32> to vector<34x96xbf16>
    %c200 = arith.constant 200 : index
    %c0_63 = arith.constant 0 : index
    %175 = vector.load %arg3[%c200, %c0_63] : memref<528x128xbf16, #tpu.memory_space<vmem>>, vector<32x32xbf16>
    %176 = vector.extract_strided_slice %174 {offsets = [0, 0], sizes = [34, 16], strides = [1, 1]} : vector<34x96xbf16> to vector<34x16xbf16>
    %177 = vector.extract_strided_slice %174 {offsets = [0, 32], sizes = [34, 16], strides = [1, 1]} : vector<34x96xbf16> to vector<34x16xbf16>
    %178 = vector.extract_strided_slice %174 {offsets = [0, 64], sizes = [34, 16], strides = [1, 1]} : vector<34x96xbf16> to vector<34x16xbf16>
    %cst_64 = arith.constant dense<0.000000e+00> : vector<34x34xf32>
    %179 = tpu.matmul %176, %177, %cst_64 {dimension_numbers = #tpu.dot_dimension_numbers<[1], [1], [0], [0], [0, 0, 1, 0], [], []>} : vector<34x16xbf16>, vector<34x16xbf16>, vector<34x34xf32> -> vector<34x34xf32>
    %cst_65 = arith.constant 2.500000e-01 : f32
    %180 = vector.broadcast %cst_65 : f32 to vector<34x34xf32>
    %181 = arith.mulf %179, %180 : vector<34x34xf32>
    %182 = arith.addf %181, %42 : vector<34x34xf32>
    %cst_66 = arith.constant dense<0xFF800000> : vector<34xf32>
    %183 = vector.multi_reduction <maximumf>, %182, %cst_66 [1] : vector<34x34xf32> to vector<34xf32>
    %184 = vector.shape_cast %183 : vector<34xf32> to vector<34x1xf32>
    %185 = vector.broadcast %184 : vector<34x1xf32> to vector<34x34xf32>
    %186 = arith.subf %182, %185 : vector<34x34xf32>
    %187 = math.exp %186 : vector<34x34xf32>
    %cst_67 = arith.constant dense<0.000000e+00> : vector<34xf32>
    %188 = vector.multi_reduction <add>, %187, %cst_67 [1] : vector<34x34xf32> to vector<34xf32>
    %189 = vector.shape_cast %188 : vector<34xf32> to vector<34x1xf32>
    %190 = tpu.reciprocal %189 {approx = true} : vector<34x1xf32> -> vector<34x1xf32>
    %191 = vector.broadcast %190 : vector<34x1xf32> to vector<34x34xf32>
    %192 = arith.mulf %187, %191 : vector<34x34xf32>
    %193 = arith.truncf %192 : vector<34x34xf32> to vector<34x34xbf16>
    %cst_68 = arith.constant dense<0.000000e+00> : vector<34x16xf32>
    %194 = tpu.matmul %193, %178, %cst_68 {dimension_numbers = #tpu.dot_dimension_numbers<[1], [0], [0], [1], [0, 0, 1, 1], [], []>} : vector<34x34xbf16>, vector<34x16xbf16>, vector<34x16xf32> -> vector<34x16xf32>
    %195 = arith.truncf %194 : vector<34x16xf32> to vector<34x16xbf16>
    %196 = vector.extract_strided_slice %175 {offsets = [0, 0], sizes = [16, 32], strides = [1, 1]} : vector<32x32xbf16> to vector<16x32xbf16>
    %cst_69 = arith.constant dense<0.000000e+00> : vector<34x32xf32>
    %197 = tpu.matmul %195, %196, %cst_69 {dimension_numbers = #tpu.dot_dimension_numbers<[1], [0], [0], [1], [0, 0, 1, 1], [], []>} : vector<34x16xbf16>, vector<16x32xbf16>, vector<34x32xf32> -> vector<34x32xf32>
    %198 = vector.extract_strided_slice %174 {offsets = [0, 16], sizes = [34, 16], strides = [1, 1]} : vector<34x96xbf16> to vector<34x16xbf16>
    %199 = vector.extract_strided_slice %174 {offsets = [0, 48], sizes = [34, 16], strides = [1, 1]} : vector<34x96xbf16> to vector<34x16xbf16>
    %200 = vector.extract_strided_slice %174 {offsets = [0, 80], sizes = [34, 16], strides = [1, 1]} : vector<34x96xbf16> to vector<34x16xbf16>
    %cst_70 = arith.constant dense<0.000000e+00> : vector<34x34xf32>
    %201 = tpu.matmul %198, %199, %cst_70 {dimension_numbers = #tpu.dot_dimension_numbers<[1], [1], [0], [0], [0, 0, 1, 0], [], []>} : vector<34x16xbf16>, vector<34x16xbf16>, vector<34x34xf32> -> vector<34x34xf32>
    %cst_71 = arith.constant 2.500000e-01 : f32
    %202 = vector.broadcast %cst_71 : f32 to vector<34x34xf32>
    %203 = arith.mulf %201, %202 : vector<34x34xf32>
    %204 = arith.addf %203, %42 : vector<34x34xf32>
    %cst_72 = arith.constant dense<0xFF800000> : vector<34xf32>
    %205 = vector.multi_reduction <maximumf>, %204, %cst_72 [1] : vector<34x34xf32> to vector<34xf32>
    %206 = vector.shape_cast %205 : vector<34xf32> to vector<34x1xf32>
    %207 = vector.broadcast %206 : vector<34x1xf32> to vector<34x34xf32>
    %208 = arith.subf %204, %207 : vector<34x34xf32>
    %209 = math.exp %208 : vector<34x34xf32>
    %cst_73 = arith.constant dense<0.000000e+00> : vector<34xf32>
    %210 = vector.multi_reduction <add>, %209, %cst_73 [1] : vector<34x34xf32> to vector<34xf32>
    %211 = vector.shape_cast %210 : vector<34xf32> to vector<34x1xf32>
    %212 = tpu.reciprocal %211 {approx = true} : vector<34x1xf32> -> vector<34x1xf32>
    %213 = vector.broadcast %212 : vector<34x1xf32> to vector<34x34xf32>
    %214 = arith.mulf %209, %213 : vector<34x34xf32>
    %215 = arith.truncf %214 : vector<34x34xf32> to vector<34x34xbf16>
    %cst_74 = arith.constant dense<0.000000e+00> : vector<34x16xf32>
    %216 = tpu.matmul %215, %200, %cst_74 {dimension_numbers = #tpu.dot_dimension_numbers<[1], [0], [0], [1], [0, 0, 1, 1], [], []>} : vector<34x34xbf16>, vector<34x16xbf16>, vector<34x16xf32> -> vector<34x16xf32>
    %217 = arith.truncf %216 : vector<34x16xf32> to vector<34x16xbf16>
    %218 = vector.extract_strided_slice %175 {offsets = [16, 0], sizes = [16, 32], strides = [1, 1]} : vector<32x32xbf16> to vector<16x32xbf16>
    %cst_75 = arith.constant dense<0.000000e+00> : vector<34x32xf32>
    %219 = tpu.matmul %217, %218, %cst_75 {dimension_numbers = #tpu.dot_dimension_numbers<[1], [0], [0], [1], [0, 0, 1, 1], [], []>} : vector<34x16xbf16>, vector<16x32xbf16>, vector<34x32xf32> -> vector<34x32xf32>
    %220 = arith.addf %197, %219 : vector<34x32xf32>
    %221 = arith.addf %166, %220 : vector<34x32xf32>
    %c517 = arith.constant 517 : index
    %c0_76 = arith.constant 0 : index
    %222 = vector.load %arg3[%c517, %c0_76] : memref<528x128xbf16, #tpu.memory_space<vmem>>, vector<1x32xbf16>
    %223 = arith.extf %222 : vector<1x32xbf16> to vector<1x32xf32>
    %224 = vector.broadcast %223 : vector<1x32xf32> to vector<34x32xf32>
    %225 = arith.addf %221, %224 : vector<34x32xf32>
    %c518 = arith.constant 518 : index
    %c0_77 = arith.constant 0 : index
    %226 = vector.load %arg3[%c518, %c0_77] : memref<528x128xbf16, #tpu.memory_space<vmem>>, vector<1x32xbf16>
    %227 = arith.extf %226 : vector<1x32xbf16> to vector<1x32xf32>
    %c519 = arith.constant 519 : index
    %c0_78 = arith.constant 0 : index
    %228 = vector.load %arg3[%c519, %c0_78] : memref<528x128xbf16, #tpu.memory_space<vmem>>, vector<1x32xbf16>
    %229 = arith.extf %228 : vector<1x32xbf16> to vector<1x32xf32>
    %cst_79 = arith.constant dense<0.000000e+00> : vector<34xf32>
    %230 = vector.multi_reduction <add>, %225, %cst_79 [1] : vector<34x32xf32> to vector<34xf32>
    %231 = vector.shape_cast %230 : vector<34xf32> to vector<34x1xf32>
    %cst_80 = arith.constant 3.200000e+01 : f32
    %232 = vector.broadcast %cst_80 : f32 to vector<34x1xf32>
    %233 = arith.divf %231, %232 : vector<34x1xf32>
    %234 = vector.broadcast %233 : vector<34x1xf32> to vector<34x32xf32>
    %235 = arith.subf %225, %234 : vector<34x32xf32>
    %236 = arith.mulf %235, %235 : vector<34x32xf32>
    %cst_81 = arith.constant dense<0.000000e+00> : vector<34xf32>
    %237 = vector.multi_reduction <add>, %236, %cst_81 [1] : vector<34x32xf32> to vector<34xf32>
    %238 = vector.shape_cast %237 : vector<34xf32> to vector<34x1xf32>
    %cst_82 = arith.constant 3.200000e+01 : f32
    %239 = vector.broadcast %cst_82 : f32 to vector<34x1xf32>
    %240 = arith.divf %238, %239 : vector<34x1xf32>
    %cst_83 = arith.constant 9.99999974E-6 : f32
    %241 = vector.broadcast %cst_83 : f32 to vector<34x1xf32>
    %242 = arith.addf %240, %241 : vector<34x1xf32>
    %243 = math.rsqrt %242 : vector<34x1xf32>
    %244 = vector.broadcast %243 : vector<34x1xf32> to vector<34x32xf32>
    %245 = arith.mulf %235, %244 : vector<34x32xf32>
    %246 = vector.broadcast %227 : vector<1x32xf32> to vector<34x32xf32>
    %247 = arith.mulf %245, %246 : vector<34x32xf32>
    %248 = vector.broadcast %229 : vector<1x32xf32> to vector<34x32xf32>
    %249 = arith.addf %247, %248 : vector<34x32xf32>
    %250 = arith.truncf %249 : vector<34x32xf32> to vector<34x32xbf16>
    %c232 = arith.constant 232 : index
    %c0_84 = arith.constant 0 : index
    %251 = vector.load %arg3[%c232, %c0_84] : memref<528x128xbf16, #tpu.memory_space<vmem>>, vector<32x64xbf16>
    %cst_85 = arith.constant dense<0.000000e+00> : vector<34x64xf32>
    %252 = tpu.matmul %250, %251, %cst_85 {dimension_numbers = #tpu.dot_dimension_numbers<[1], [0], [0], [1], [0, 0, 1, 1], [], []>} : vector<34x32xbf16>, vector<32x64xbf16>, vector<34x64xf32> -> vector<34x64xf32>
    %c520 = arith.constant 520 : index
    %c0_86 = arith.constant 0 : index
    %253 = vector.load %arg3[%c520, %c0_86] : memref<528x128xbf16, #tpu.memory_space<vmem>>, vector<1x64xbf16>
    %254 = arith.extf %253 : vector<1x64xbf16> to vector<1x64xf32>
    %255 = vector.broadcast %254 : vector<1x64xf32> to vector<34x64xf32>
    %256 = arith.addf %252, %255 : vector<34x64xf32>
    %cst_87 = arith.constant 0.000000e+00 : f32
    %257 = vector.broadcast %cst_87 : f32 to vector<34x64xf32>
    %258 = arith.maximumf %256, %257 : vector<34x64xf32>
    %259 = arith.truncf %258 : vector<34x64xf32> to vector<34x64xbf16>
    %c264 = arith.constant 264 : index
    %c0_88 = arith.constant 0 : index
    %260 = vector.load %arg3[%c264, %c0_88] : memref<528x128xbf16, #tpu.memory_space<vmem>>, vector<64x32xbf16>
    %cst_89 = arith.constant dense<0.000000e+00> : vector<34x32xf32>
    %261 = tpu.matmul %259, %260, %cst_89 {dimension_numbers = #tpu.dot_dimension_numbers<[1], [0], [0], [1], [0, 0, 1, 1], [], []>} : vector<34x64xbf16>, vector<64x32xbf16>, vector<34x32xf32> -> vector<34x32xf32>
    %c521 = arith.constant 521 : index
    %c0_90 = arith.constant 0 : index
    %262 = vector.load %arg3[%c521, %c0_90] : memref<528x128xbf16, #tpu.memory_space<vmem>>, vector<1x32xbf16>
    %263 = arith.extf %262 : vector<1x32xbf16> to vector<1x32xf32>
    %264 = vector.broadcast %263 : vector<1x32xf32> to vector<34x32xf32>
    %265 = arith.addf %261, %264 : vector<34x32xf32>
    %266 = arith.addf %249, %265 : vector<34x32xf32>
    %c522 = arith.constant 522 : index
    %c0_91 = arith.constant 0 : index
    %267 = vector.load %arg3[%c522, %c0_91] : memref<528x128xbf16, #tpu.memory_space<vmem>>, vector<1x32xbf16>
    %268 = arith.extf %267 : vector<1x32xbf16> to vector<1x32xf32>
    %c523 = arith.constant 523 : index
    %c0_92 = arith.constant 0 : index
    %269 = vector.load %arg3[%c523, %c0_92] : memref<528x128xbf16, #tpu.memory_space<vmem>>, vector<1x32xbf16>
    %270 = arith.extf %269 : vector<1x32xbf16> to vector<1x32xf32>
    %cst_93 = arith.constant dense<0.000000e+00> : vector<34xf32>
    %271 = vector.multi_reduction <add>, %266, %cst_93 [1] : vector<34x32xf32> to vector<34xf32>
    %272 = vector.shape_cast %271 : vector<34xf32> to vector<34x1xf32>
    %cst_94 = arith.constant 3.200000e+01 : f32
    %273 = vector.broadcast %cst_94 : f32 to vector<34x1xf32>
    %274 = arith.divf %272, %273 : vector<34x1xf32>
    %275 = vector.broadcast %274 : vector<34x1xf32> to vector<34x32xf32>
    %276 = arith.subf %266, %275 : vector<34x32xf32>
    %277 = arith.mulf %276, %276 : vector<34x32xf32>
    %cst_95 = arith.constant dense<0.000000e+00> : vector<34xf32>
    %278 = vector.multi_reduction <add>, %277, %cst_95 [1] : vector<34x32xf32> to vector<34xf32>
    %279 = vector.shape_cast %278 : vector<34xf32> to vector<34x1xf32>
    %cst_96 = arith.constant 3.200000e+01 : f32
    %280 = vector.broadcast %cst_96 : f32 to vector<34x1xf32>
    %281 = arith.divf %279, %280 : vector<34x1xf32>
    %cst_97 = arith.constant 9.99999974E-6 : f32
    %282 = vector.broadcast %cst_97 : f32 to vector<34x1xf32>
    %283 = arith.addf %281, %282 : vector<34x1xf32>
    %284 = math.rsqrt %283 : vector<34x1xf32>
    %285 = vector.broadcast %284 : vector<34x1xf32> to vector<34x32xf32>
    %286 = arith.mulf %276, %285 : vector<34x32xf32>
    %287 = vector.broadcast %268 : vector<1x32xf32> to vector<34x32xf32>
    %288 = arith.mulf %286, %287 : vector<34x32xf32>
    %289 = vector.broadcast %270 : vector<1x32xf32> to vector<34x32xf32>
    %290 = arith.addf %288, %289 : vector<34x32xf32>
    %c496 = arith.constant 496 : index
    %c0_98 = arith.constant 0 : index
    %291 = vector.load %arg3[%c496, %c0_98] : memref<528x128xbf16, #tpu.memory_space<vmem>>, vector<6x34xbf16>
    %292 = arith.truncf %290 : vector<34x32xf32> to vector<34x32xbf16>
    %cst_99 = arith.constant dense<0.000000e+00> : vector<6x32xf32>
    %293 = tpu.matmul %291, %292, %cst_99 {dimension_numbers = #tpu.dot_dimension_numbers<[1], [0], [0], [1], [0, 0, 1, 1], [], []>} : vector<6x34xbf16>, vector<34x32xbf16>, vector<6x32xf32> -> vector<6x32xf32>
    %294 = arith.truncf %293 : vector<6x32xf32> to vector<6x32xbf16>
    %c328 = arith.constant 328 : index
    %c0_100 = arith.constant 0 : index
    %295 = vector.load %arg3[%c328, %c0_100] : memref<528x128xbf16, #tpu.memory_space<vmem>>, vector<96x32xbf16>
    %296 = vector.extract_strided_slice %294 {offsets = [0, 0], sizes = [2, 32], strides = [1, 1]} : vector<6x32xbf16> to vector<2x32xbf16>
    %297 = vector.extract_strided_slice %295 {offsets = [0, 0], sizes = [32, 32], strides = [1, 1]} : vector<96x32xbf16> to vector<32x32xbf16>
    %cst_101 = arith.constant dense<0.000000e+00> : vector<2x32xf32>
    %298 = tpu.matmul %296, %297, %cst_101 {dimension_numbers = #tpu.dot_dimension_numbers<[1], [0], [0], [1], [0, 0, 1, 1], [], []>} : vector<2x32xbf16>, vector<32x32xbf16>, vector<2x32xf32> -> vector<2x32xf32>
    %299 = vector.extract_strided_slice %294 {offsets = [2, 0], sizes = [2, 32], strides = [1, 1]} : vector<6x32xbf16> to vector<2x32xbf16>
    %300 = vector.extract_strided_slice %295 {offsets = [32, 0], sizes = [32, 32], strides = [1, 1]} : vector<96x32xbf16> to vector<32x32xbf16>
    %cst_102 = arith.constant dense<0.000000e+00> : vector<2x32xf32>
    %301 = tpu.matmul %299, %300, %cst_102 {dimension_numbers = #tpu.dot_dimension_numbers<[1], [0], [0], [1], [0, 0, 1, 1], [], []>} : vector<2x32xbf16>, vector<32x32xbf16>, vector<2x32xf32> -> vector<2x32xf32>
    %302 = arith.addf %298, %301 : vector<2x32xf32>
    %303 = vector.extract_strided_slice %294 {offsets = [4, 0], sizes = [2, 32], strides = [1, 1]} : vector<6x32xbf16> to vector<2x32xbf16>
    %304 = vector.extract_strided_slice %295 {offsets = [64, 0], sizes = [32, 32], strides = [1, 1]} : vector<96x32xbf16> to vector<32x32xbf16>
    %cst_103 = arith.constant dense<0.000000e+00> : vector<2x32xf32>
    %305 = tpu.matmul %303, %304, %cst_103 {dimension_numbers = #tpu.dot_dimension_numbers<[1], [0], [0], [1], [0, 0, 1, 1], [], []>} : vector<2x32xbf16>, vector<32x32xbf16>, vector<2x32xf32> -> vector<2x32xf32>
    %306 = arith.addf %302, %305 : vector<2x32xf32>
    %c506 = arith.constant 506 : index
    %c0_104 = arith.constant 0 : index
    %307 = vector.load %arg3[%c506, %c0_104] : memref<528x128xbf16, #tpu.memory_space<vmem>>, vector<1x32xbf16>
    %308 = arith.extf %307 : vector<1x32xbf16> to vector<1x32xf32>
    %309 = vector.broadcast %308 : vector<1x32xf32> to vector<2x32xf32>
    %310 = arith.addf %306, %309 : vector<2x32xf32>
    %cst_105 = arith.constant 0.000000e+00 : f32
    %311 = vector.broadcast %cst_105 : f32 to vector<2x32xf32>
    %312 = arith.maximumf %310, %311 : vector<2x32xf32>
    %313 = arith.truncf %312 : vector<2x32xf32> to vector<2x32xbf16>
    %c424 = arith.constant 424 : index
    %c0_106 = arith.constant 0 : index
    %314 = vector.load %arg3[%c424, %c0_106] : memref<528x128xbf16, #tpu.memory_space<vmem>>, vector<32x6xbf16>
    %cst_107 = arith.constant dense<0.000000e+00> : vector<2x6xf32>
    %315 = tpu.matmul %313, %314, %cst_107 {dimension_numbers = #tpu.dot_dimension_numbers<[1], [0], [0], [1], [0, 0, 1, 1], [], []>} : vector<2x32xbf16>, vector<32x6xbf16>, vector<2x6xf32> -> vector<2x6xf32>
    %c507 = arith.constant 507 : index
    %c0_108 = arith.constant 0 : index
    %316 = vector.load %arg3[%c507, %c0_108] : memref<528x128xbf16, #tpu.memory_space<vmem>>, vector<1x6xbf16>
    %317 = arith.extf %316 : vector<1x6xbf16> to vector<1x6xf32>
    %318 = vector.broadcast %317 : vector<1x6xf32> to vector<2x6xf32>
    %319 = arith.addf %315, %318 : vector<2x6xf32>
    %c0_109 = arith.constant 0 : index
    %c0_110 = arith.constant 0 : index
    %320 = vector.load %arg4[%c0_109, %c0_110] : memref<2x6xf32, #tpu.memory_space<vmem>>, vector<2x6xf32>
    tpu.vector_store %arg4[%c0_109, %c0_110], %319 {strides = array<i32>} : memref<2x6xf32, #tpu.memory_space<vmem>>, vector<2x6xf32>,
    return
  }
}

</mosaic_0001>

<llo_original>
// kernel: forward.1
$region0: #{forward.1}
  #allocation0 [shape = 'u32[]', space=smem, size = 0x4, offset = 0x4, fixed_abs, tag = 'smem constant byte address 0x4 - core index']
  #allocation1 [shape = 'u32[144,128]{1,0:T(1,128)}', space=vmem, size = 0x12000, scoped, tag = 'internal scratch']
  #allocation2 [shape = 'f32[34,32]{1,0:T(8,128)}', space=vmem, size = 0x5000, scoped, tag = 'scratch operand']
  %s0 = inlined_call_operand.vmem [shape: f32[2,264], index: 0, kind: input, shape index: {}]
  %s1 = inlined_call_operand.vmem [shape: bf16[24,1024], index: 1, kind: input, shape index: {}]
  %s2 = inlined_call_operand.vmem [shape: bf16[1024,32], index: 2, kind: input, shape index: {}]
  %s3 = inlined_call_operand.vmem [shape: bf16[528,128], index: 3, kind: input, shape index: {}]
  %s4 = inlined_call_operand.hbm [shape: f32[2,6], index: 4, kind: output, shape index: {}]
  %s5 = sld [smem:[#allocation0]]
  $region26: #{forward.1} parent=0
    _
  %s7 = ssub.s32 1, %s5
  %s8 = scalar_select 0, %s7, %s5
  $region1: #{forward.1} parent=0
    #allocation3 [shape = 'u8[1024]{0}', space=vmem, size = 0x400, scoped, tag = 'output window, operand 0, single buffered']
    #allocation4 [shape = 's32[1]{0}', space=sflag, size = 0x4, scoped, tag = 'scoped memory for forward.1']
    %9 = vsyncpa [#allocation4], 0
    // Predicated region
    $region2: #{forward.1} parent=1 // pred_check
      _
    $region3: #{forward.1} parent=1 // pred_check_branch
      %11 = sbr.rel (0) target = $region5
    $region4: #{forward.1} parent=1 // pred_region
      _
    $region5: #{forward.1} parent=1 // pred_fallthru
      _
    // Predicated region
    $region6: #{forward.1} parent=1 // pred_check
      _
    $region7: #{forward.1} parent=1 // pred_check_branch
      %13 = sbr.rel (0) target = $region9
    $region8: #{forward.1} parent=1 // pred_region
      _
    $region9: #{forward.1} parent=1 // pred_fallthru
      _
    // Predicated region
    $region10: #{forward.1} parent=1 // pred_check
      _
    $region11: #{forward.1} parent=1 // pred_check_branch
      %15 = sbr.rel (0) target = $region13
    $region12: #{forward.1} parent=1 // pred_region
      _
    $region13: #{forward.1} parent=1 // pred_fallthru
      _
    // Predicated region
    $region14: #{forward.1} parent=1 // pred_check
      _
    $region15: #{forward.1} parent=1 // pred_check_branch
      %17 = sbr.rel (0) target = $region17
    $region16: #{forward.1} parent=1 // pred_region
      _
    $region17: #{forward.1} parent=1 // pred_fallthru
      _
    %v19 = vld [vmem:[%s0] sm:$0x3]
    %v20 = vpack.c.bf16 %v19, %v19
    %v21 = vld [vmem:[%s3] sm:$0xf]
    %v22 = vld [vmem:[%s3 + $0xfc] sm:$0x1]
    %v23 = vunpack.c.l.bf16 %v22
    %v24 = vlaneseq
    %v25 = vshrl.u32 %v24, 7
    %v26 = vsub.s32 1, %v25
    %v27 = vrot.slane %v23, %v26
    %vm28 = vcmask 64512
    %v30 = vsel %vm28, %v20, 0
    %vm32 = vcmask 1043456
    %v34 = vsel %vm32, %v21, 0
    %36 = vmatprep.subr.bf16.mxu0 0
    %37 = vmatpush1.bf16.msra.mxu0 0
    %38 = vmatprep.subr.bf16.mxu0 0
    %39 = vmatpush1.bf16.msra.mxu0 0
    %40 = vmatprep.subr.bf16.mxu0 0
    %41 = vmatpush1.bf16.msra.mxu0 0
    %42 = vmatprep.subr.bf16.mxu0 0
    %43 = vmatpush1.bf16.msra.mxu0 0
    %44 = vmatprep.subr.bf16.mxu0 0
    %45 = vmatpush1.bf16.msra.mxu0 0
    %46 = vmatprep.subr.bf16.mxu0 0
    %47 = vmatpush1.bf16.msra.mxu0 0
    %48 = vmatprep.subr.bf16.mxu0 0
    %49 = vmatpush1.bf16.msra.mxu0 0
    %50 = vmatprep.subr.bf16.mxu0 0
    %51 = vmatpush1.bf16.msra.mxu0 %v34
    %52 = vmatprep.subr.bf16.mxu0 0
    %53 = vmatpush2.bf16.msra.mxu0 0
    %54 = vmatprep.subr.bf16.mxu0 0
    %55 = vmatpush2.bf16.msra.mxu0 0
    %56 = vmatprep.subr.bf16.mxu0 0
    %57 = vmatpush2.bf16.msra.mxu0 0
    %58 = vmatprep.subr.bf16.mxu0 0
    %59 = vmatpush2.bf16.msra.mxu0 0
    %60 = vmatprep.subr.bf16.mxu0 0
    %61 = vmatpush2.bf16.msra.mxu0 0
    %62 = vmatprep.subr.bf16.mxu0 0
    %63 = vmatpush2.bf16.msra.mxu0 0
    %64 = vmatprep.subr.bf16.mxu0 0
    %65 = vmatpush2.bf16.msra.mxu0 0
    %66 = vmatprep.subr.bf16.mxu0 0
    %67 = vmatpush2.bf16.msra.mxu0 0
    %68 = vmatprep.mubr.bf16.mxu0 0
    %69 = vmatmul.mubr.bf16.gmra.mxu0 %v30
    %v70 = vpop.f32.mrf.mxu0
    %v71 = vadd.f32 %v27, %v70
    %v72 = vpop.f32.mrf.mxu0
    %v73 = vpop.f32.mrf.mxu0
    %v74 = vpop.f32.mrf.mxu0
    %75 = vdwg.mxu0
    %v76 = vmax.f32 %v71, 0.0
    %v77 = vld [vmem:[%s1] sm:$0xff]
    %v78 = vld [vmem:[%s1 + $0x8] sm:$0xff]
    %v79 = vld [vmem:[%s1 + $0x10] sm:$0xff]
    %v80 = vld [vmem:[%s1 + $0x18] sm:$0xff]
    %v81 = vld [vmem:[%s1 + $0x20] sm:$0xff]
    %v82 = vld [vmem:[%s1 + $0x28] sm:$0xff]
    %v83 = vld [vmem:[%s1 + $0x30] sm:$0xff]
    %v84 = vld [vmem:[%s1 + $0x38] sm:$0xff]
    %v85 = vld [vmem:[%s1 + $0x40] sm:$0x11]
    %v86 = vld [vmem:[%s1 + $0x48] sm:$0x11]
    %v87 = vld [vmem:[%s1 + $0x50] sm:$0x11]
    %v88 = vld [vmem:[%s1 + $0x58] sm:$0x11]
    %v89 = vunpack.c.l.bf16 %v85
    %v90 = vunpack.c.h.bf16 %v85
    %v91 = vunpack.c.l.bf16 %v86
    %v92 = vunpack.c.h.bf16 %v86
    %v93 = vunpack.c.l.bf16 %v87
    %v94 = vunpack.c.h.bf16 %v87
    %v95 = vunpack.c.l.bf16 %v88
    %v96 = vunpack.c.h.bf16 %v88
    %v97 = vld [vmem:[%s0] sm:$0x3f]
    %v99 = vcombine.high %v97, %v97
    %v101 = vunpack.c.l.s4 1983009808
    %v102 = vunpack.c.0.s8 %v101
    %v103 = vlaneseq
    %v104 = vshrl.u32 %v103, 7
    %v105 = vsub.s32 %v102, %v104
    %v106 = vrot.slane %v97, %v105
    %v108 = vunpack.c.l.s4 1983009808
    %v109 = vunpack.c.0.s8 %v108
    %v110 = vlaneseq
    %v111 = vshrl.u32 %v110, 7
    %v112 = vsub.s32 %v109, %v111
    %v113 = vrot.slane %v99, %v112
    %v114 = vcombine.high %v106, %v106
    %115 = vrot.lane.b32.xlu0 %v106, 120
    %v116 = vpop.permute.xlu0 %115
    %117 = vrot.lane.b32.xlu0 %v114, 120
    %v118 = vpop.permute.xlu0 %117
    %119 = vrot.lane.b32.xlu0 %v113, 120
    %v120 = vpop.permute.xlu0 %119
    %vm121 = vcmask 982016
    %v122 = vsel %vm121, %v116, %v118
    %v123 = vsel %vm121, %v118, %v120
    %v126 = vadd.f32 %v122, 0.5
    %v127 = vadd.f32 %v123, 0.5
    %v128 = vfloor.f32 %v126
    %v129 = vfloor.f32 %v127
    %v130 = vlaneseq
    %v131 = vshrl.u32 %v130, 7
    %v132 = vsub.s32 0, %v131
    %v133 = vrot.slane %v89, %v132
    %v134 = vlaneseq
    %v135 = vshrl.u32 %v134, 7
    %v136 = vsub.s32 0, %v135
    %v137 = vrot.slane %v90, %v136
    %v138 = vlaneseq
    %v139 = vshrl.u32 %v138, 7
    %v140 = vsub.s32 0, %v139
    %v141 = vrot.slane %v91, %v140
    %v142 = vlaneseq
    %v143 = vshrl.u32 %v142, 7
    %v144 = vsub.s32 0, %v143
    %v145 = vrot.slane %v92, %v144
    %v146 = vlaneseq
    %v147 = vshrl.u32 %v146, 7
    %v148 = vsub.s32 0, %v147
    %v149 = vrot.slane %v93, %v148
    %v150 = vlaneseq
    %v151 = vshrl.u32 %v150, 7
    %v152 = vsub.s32 0, %v151
    %v153 = vrot.slane %v94, %v152
    %v154 = vlaneseq
    %v155 = vshrl.u32 %v154, 7
    %v156 = vsub.s32 0, %v155
    %v157 = vrot.slane %v95, %v156
    %v158 = vlaneseq
    %v159 = vshrl.u32 %v158, 7
    %v160 = vsub.s32 0, %v159
    %v161 = vrot.slane %v96, %v160
    %vm162 = vcmp.eq.f32.partialorder %v128, %v133
    %vm163 = vcmp.eq.f32.partialorder %v129, %v137
    %vm164 = vcmp.eq.f32.partialorder %v128, %v141
    %vm165 = vcmp.eq.f32.partialorder %v129, %v145
    %vm166 = vcmp.eq.f32.partialorder %v128, %v149
    %vm167 = vcmp.eq.f32.partialorder %v129, %v153
    %vm168 = vcmp.eq.f32.partialorder %v128, %v157
    %vm169 = vcmp.eq.f32.partialorder %v129, %v161
    %v170 = vsel %vm162, 1, 0
    %v171 = vsel %vm163, 1, 0
    %v172 = vsel %vm164, 1, 0
    %v173 = vsel %vm165, 1, 0
    %v174 = vsel %vm166, 1, 0
    %v175 = vsel %vm167, 1, 0
    %v176 = vsel %vm168, 1, 0
    %v177 = vsel %vm169, 1, 0
    %v178 = vcvt.s32.f32 %v170
    %v179 = vcvt.s32.f32 %v171
    %v180 = vcvt.s32.f32 %v172
    %v181 = vcvt.s32.f32 %v173
    %v182 = vcvt.s32.f32 %v174
    %v183 = vcvt.s32.f32 %v175
    %v184 = vcvt.s32.f32 %v176
    %v185 = vcvt.s32.f32 %v177
    %v186 = vpack.c.bf16 %v178, %v178
    %v187 = vpack.c.bf16 %v179, %v179
    %v188 = vpack.c.bf16 %v180, %v180
    %v189 = vpack.c.bf16 %v181, %v181
    %v190 = vpack.c.bf16 %v182, %v182
    %v191 = vpack.c.bf16 %v183, %v183
    %v192 = vpack.c.bf16 %v184, %v184
    %v193 = vpack.c.bf16 %v185, %v185
    %v195 = vpack.i.b16 %v186, %v186
    %v197 = vlaneseq
    %v198 = vshrl.u32 %v197, 7
    %v199 = vsub.s32 0, %v198
    %v200 = vrot.slane %v195, %v199
    %v202 = vpack.i.b16 %v187, %v187
    %v204 = vlaneseq
    %v205 = vshrl.u32 %v204, 7
    %v206 = vsub.s32 0, %v205
    %v207 = vrot.slane %v202, %v206
    %v209 = vpack.i.b16 %v188, %v188
    %v211 = vlaneseq
    %v212 = vshrl.u32 %v211, 7
    %v213 = vsub.s32 0, %v212
    %v214 = vrot.slane %v209, %v213
    %v216 = vpack.i.b16 %v189, %v189
    %v218 = vlaneseq
    %v219 = vshrl.u32 %v218, 7
    %v220 = vsub.s32 0, %v219
    %v221 = vrot.slane %v216, %v220
    %v223 = vpack.i.b16 %v190, %v190
    %v225 = vlaneseq
    %v226 = vshrl.u32 %v225, 7
    %v227 = vsub.s32 0, %v226
    %v228 = vrot.slane %v223, %v227
    %v230 = vpack.i.b16 %v191, %v191
    %v232 = vlaneseq
    %v233 = vshrl.u32 %v232, 7
    %v234 = vsub.s32 0, %v233
    %v235 = vrot.slane %v230, %v234
    %v237 = vpack.i.b16 %v192, %v192
    %v239 = vlaneseq
    %v240 = vshrl.u32 %v239, 7
    %v241 = vsub.s32 0, %v240
    %v242 = vrot.slane %v237, %v241
    %v244 = vpack.i.b16 %v193, %v193
    %v246 = vlaneseq
    %v247 = vshrl.u32 %v246, 7
    %v248 = vsub.s32 0, %v247
    %v249 = vrot.slane %v244, %v248
    %v258 = vunpack.c.l.b16 %v200
    %v259 = vunpack.c.l.b16 %v207
    %v260 = vunpack.c.l.b16 %v214
    %v261 = vunpack.c.l.b16 %v221
    %v262 = vunpack.c.l.b16 %v228
    %v263 = vunpack.c.l.b16 %v235
    %v264 = vunpack.c.l.b16 %v242
    %v265 = vunpack.c.l.b16 %v249
    %v266 = vpack.c.b16 %v259, %v258
    %v267 = vpack.c.b16 %v261, %v260
    %v268 = vpack.c.b16 %v263, %v262
    %v269 = vpack.c.b16 %v265, %v264
    %v274 = vmul.bf16 %v77, %v266
    %v275 = vmul.bf16 %v78, %v267
    %v276 = vmul.bf16 %v79, %v268
    %v277 = vmul.bf16 %v80, %v269
    %v278 = vmul.bf16 %v81, %v266
    %v279 = vmul.bf16 %v82, %v267
    %v280 = vmul.bf16 %v83, %v268
    %v281 = vmul.bf16 %v84, %v269
    %v282 = vshrl.u32 %v186, 16
    %v283 = vpack.i.b16 %v282, %v282
    %v285 = vlaneseq
    %v286 = vshrl.u32 %v285, 7
    %v287 = vsub.s32 0, %v286
    %v288 = vrot.slane %v283, %v287
    %v289 = vshrl.u32 %v187, 16
    %v290 = vpack.i.b16 %v289, %v289
    %v292 = vlaneseq
    %v293 = vshrl.u32 %v292, 7
    %v294 = vsub.s32 0, %v293
    %v295 = vrot.slane %v290, %v294
    %v296 = vshrl.u32 %v188, 16
    %v297 = vpack.i.b16 %v296, %v296
    %v299 = vlaneseq
    %v300 = vshrl.u32 %v299, 7
    %v301 = vsub.s32 0, %v300
    %v302 = vrot.slane %v297, %v301
    %v303 = vshrl.u32 %v189, 16
    %v304 = vpack.i.b16 %v303, %v303
    %v306 = vlaneseq
    %v307 = vshrl.u32 %v306, 7
    %v308 = vsub.s32 0, %v307
    %v309 = vrot.slane %v304, %v308
    %v310 = vshrl.u32 %v190, 16
    %v311 = vpack.i.b16 %v310, %v310
    %v313 = vlaneseq
    %v314 = vshrl.u32 %v313, 7
    %v315 = vsub.s32 0, %v314
    %v316 = vrot.slane %v311, %v315
    %v317 = vshrl.u32 %v191, 16
    %v318 = vpack.i.b16 %v317, %v317
    %v320 = vlaneseq
    %v321 = vshrl.u32 %v320, 7
    %v322 = vsub.s32 0, %v321
    %v323 = vrot.slane %v318, %v322
    %v324 = vshrl.u32 %v192, 16
    %v325 = vpack.i.b16 %v324, %v324
    %v327 = vlaneseq
    %v328 = vshrl.u32 %v327, 7
    %v329 = vsub.s32 0, %v328
    %v330 = vrot.slane %v325, %v329
    %v331 = vshrl.u32 %v193, 16
    %v332 = vpack.i.b16 %v331, %v331
    %v334 = vlaneseq
    %v335 = vshrl.u32 %v334, 7
    %v336 = vsub.s32 0, %v335
    %v337 = vrot.slane %v332, %v336
    %v346 = vunpack.c.l.b16 %v288
    %v347 = vunpack.c.l.b16 %v295
    %v348 = vunpack.c.l.b16 %v302
    %v349 = vunpack.c.l.b16 %v309
    %v350 = vunpack.c.l.b16 %v316
    %v351 = vunpack.c.l.b16 %v323
    %v352 = vunpack.c.l.b16 %v330
    %v353 = vunpack.c.l.b16 %v337
    %v354 = vpack.c.b16 %v347, %v346
    %v355 = vpack.c.b16 %v349, %v348
    %v356 = vpack.c.b16 %v351, %v350
    %v357 = vpack.c.b16 %v353, %v352
    %v362 = vmul.bf16 %v77, %v354
    %v363 = vmul.bf16 %v78, %v355
    %v364 = vmul.bf16 %v79, %v356
    %v365 = vmul.bf16 %v80, %v357
    %v366 = vmul.bf16 %v81, %v354
    %v367 = vmul.bf16 %v82, %v355
    %v368 = vmul.bf16 %v83, %v356
    %v369 = vmul.bf16 %v84, %v357
    %v378 = vunpack.c.l.b16 %v274
    %v379 = vunpack.c.h.b16 %v274
    %v380 = vunpack.c.l.b16 %v275
    %v381 = vunpack.c.h.b16 %v275
    %v382 = vunpack.c.l.b16 %v276
    %v383 = vunpack.c.h.b16 %v276
    %v384 = vunpack.c.l.b16 %v277
    %v385 = vunpack.c.h.b16 %v277
    %v386 = vunpack.c.l.b16 %v278
    %v387 = vunpack.c.h.b16 %v278
    %v388 = vunpack.c.l.b16 %v279
    %v389 = vunpack.c.h.b16 %v279
    %v390 = vunpack.c.l.b16 %v280
    %v391 = vunpack.c.h.b16 %v280
    %v392 = vunpack.c.l.b16 %v281
    %v393 = vunpack.c.h.b16 %v281
    %v394 = vpack.c.b16 %v386, %v378
    %v395 = vpack.c.b16 %v387, %v379
    %v396 = vpack.c.b16 %v388, %v380
    %v397 = vpack.c.b16 %v389, %v381
    %v398 = vpack.c.b16 %v390, %v382
    %v399 = vpack.c.b16 %v391, %v383
    %v400 = vpack.c.b16 %v392, %v384
    %v401 = vpack.c.b16 %v393, %v385
    %v418 = vunpack.c.l.b16 %v362
    %v419 = vunpack.c.h.b16 %v362
    %v420 = vunpack.c.l.b16 %v363
    %v421 = vunpack.c.h.b16 %v363
    %v422 = vunpack.c.l.b16 %v364
    %v423 = vunpack.c.h.b16 %v364
    %v424 = vunpack.c.l.b16 %v365
    %v425 = vunpack.c.h.b16 %v365
    %v426 = vunpack.c.l.b16 %v366
    %v427 = vunpack.c.h.b16 %v366
    %v428 = vunpack.c.l.b16 %v367
    %v429 = vunpack.c.h.b16 %v367
    %v430 = vunpack.c.l.b16 %v368
    %v431 = vunpack.c.h.b16 %v368
    %v432 = vunpack.c.l.b16 %v369
    %v433 = vunpack.c.h.b16 %v369
    %v434 = vpack.c.b16 %v426, %v418
    %v435 = vpack.c.b16 %v427, %v419
    %v436 = vpack.c.b16 %v428, %v420
    %v437 = vpack.c.b16 %v429, %v421
    %v438 = vpack.c.b16 %v430, %v422
    %v439 = vpack.c.b16 %v431, %v423
    %v440 = vpack.c.b16 %v432, %v424
    %v441 = vpack.c.b16 %v433, %v425
    %v450 = vld [vmem:[%s2] sm:$0xf]
    %v451 = vld [vmem:[%s2 + $0x4] sm:$0xf]
    %v452 = vld [vmem:[%s2 + $0x8] sm:$0xf]
    %v453 = vld [vmem:[%s2 + $0xc] sm:$0xf]
    %v454 = vld [vmem:[%s2 + $0x10] sm:$0xf]
    %v455 = vld [vmem:[%s2 + $0x14] sm:$0xf]
    %v456 = vld [vmem:[%s2 + $0x18] sm:$0xf]
    %v457 = vld [vmem:[%s2 + $0x1c] sm:$0xf]
    %v458 = vld [vmem:[%s2 + $0x20] sm:$0xf]
    %v459 = vld [vmem:[%s2 + $0x24] sm:$0xf]
    %v460 = vld [vmem:[%s2 + $0x28] sm:$0xf]
    %v461 = vld [vmem:[%s2 + $0x2c] sm:$0xf]
    %v462 = vld [vmem:[%s2 + $0x30] sm:$0xf]
    %v463 = vld [vmem:[%s2 + $0x34] sm:$0xf]
    %v464 = vld [vmem:[%s2 + $0x38] sm:$0xf]
    %v465 = vld [vmem:[%s2 + $0x3c] sm:$0xf]
    %v466 = vld [vmem:[%s2 + $0x40] sm:$0xf]
    %v467 = vld [vmem:[%s2 + $0x44] sm:$0xf]
    %v468 = vld [vmem:[%s2 + $0x48] sm:$0xf]
    %v469 = vld [vmem:[%s2 + $0x4c] sm:$0xf]
    %v470 = vld [vmem:[%s2 + $0x50] sm:$0xf]
    %v471 = vld [vmem:[%s2 + $0x54] sm:$0xf]
    %v472 = vld [vmem:[%s2 + $0x58] sm:$0xf]
    %v473 = vld [vmem:[%s2 + $0x5c] sm:$0xf]
    %v474 = vld [vmem:[%s2 + $0x60] sm:$0xf]
    %v475 = vld [vmem:[%s2 + $0x64] sm:$0xf]
    %v476 = vld [vmem:[%s2 + $0x68] sm:$0xf]
    %v477 = vld [vmem:[%s2 + $0x6c] sm:$0xf]
    %v478 = vld [vmem:[%s2 + $0x70] sm:$0xf]
    %v479 = vld [vmem:[%s2 + $0x74] sm:$0xf]
    %v480 = vld [vmem:[%s2 + $0x78] sm:$0xf]
    %v481 = vld [vmem:[%s2 + $0x7c] sm:$0xf]
    %v482 = vld [vmem:[%s2 + $0x80] sm:$0xf]
    %v483 = vld [vmem:[%s2 + $0x84] sm:$0xf]
    %v484 = vld [vmem:[%s2 + $0x88] sm:$0xf]
    %v485 = vld [vmem:[%s2 + $0x8c] sm:$0xf]
    %v486 = vld [vmem:[%s2 + $0x90] sm:$0xf]
    %v487 = vld [vmem:[%s2 + $0x94] sm:$0xf]
    %v488 = vld [vmem:[%s2 + $0x98] sm:$0xf]
    %v489 = vld [vmem:[%s2 + $0x9c] sm:$0xf]
    %v490 = vld [vmem:[%s2 + $0xa0] sm:$0xf]
    %v491 = vld [vmem:[%s2 + $0xa4] sm:$0xf]
    %v492 = vld [vmem:[%s2 + $0xa8] sm:$0xf]
    %v493 = vld [vmem:[%s2 + $0xac] sm:$0xf]
    %v494 = vld [vmem:[%s2 + $0xb0] sm:$0xf]
    %v495 = vld [vmem:[%s2 + $0xb4] sm:$0xf]
    %v496 = vld [vmem:[%s2 + $0xb8] sm:$0xf]
    %v497 = vld [vmem:[%s2 + $0xbc] sm:$0xf]
    %v498 = vld [vmem:[%s2 + $0xc0] sm:$0xf]
    %v499 = vld [vmem:[%s2 + $0xc4] sm:$0xf]
    %v500 = vld [vmem:[%s2 + $0xc8] sm:$0xf]
    %v501 = vld [vmem:[%s2 + $0xcc] sm:$0xf]
    %v502 = vld [vmem:[%s2 + $0xd0] sm:$0xf]
    %v503 = vld [vmem:[%s2 + $0xd4] sm:$0xf]
    %v504 = vld [vmem:[%s2 + $0xd8] sm:$0xf]
    %v505 = vld [vmem:[%s2 + $0xdc] sm:$0xf]
    %v506 = vld [vmem:[%s2 + $0xe0] sm:$0xf]
    %v507 = vld [vmem:[%s2 + $0xe4] sm:$0xf]
    %v508 = vld [vmem:[%s2 + $0xe8] sm:$0xf]
    %v509 = vld [vmem:[%s2 + $0xec] sm:$0xf]
    %v510 = vld [vmem:[%s2 + $0xf0] sm:$0xf]
    %v511 = vld [vmem:[%s2 + $0xf4] sm:$0xf]
    %v512 = vld [vmem:[%s2 + $0xf8] sm:$0xf]
    %v513 = vld [vmem:[%s2 + $0xfc] sm:$0xf]
    %v514 = vld [vmem:[%s2 + $0x100] sm:$0xf]
    %v515 = vld [vmem:[%s2 + $0x104] sm:$0xf]
    %v516 = vld [vmem:[%s2 + $0x108] sm:$0xf]
    %v517 = vld [vmem:[%s2 + $0x10c] sm:$0xf]
    %v518 = vld [vmem:[%s2 + $0x110] sm:$0xf]
    %v519 = vld [vmem:[%s2 + $0x114] sm:$0xf]
    %v520 = vld [vmem:[%s2 + $0x118] sm:$0xf]
    %v521 = vld [vmem:[%s2 + $0x11c] sm:$0xf]
    %v522 = vld [vmem:[%s2 + $0x120] sm:$0xf]
    %v523 = vld [vmem:[%s2 + $0x124] sm:$0xf]
    %v524 = vld [vmem:[%s2 + $0x128] sm:$0xf]
    %v525 = vld [vmem:[%s2 + $0x12c] sm:$0xf]
    %v526 = vld [vmem:[%s2 + $0x130] sm:$0xf]
    %v527 = vld [vmem:[%s2 + $0x134] sm:$0xf]
    %v528 = vld [vmem:[%s2 + $0x138] sm:$0xf]
    %v529 = vld [vmem:[%s2 + $0x13c] sm:$0xf]
    %v530 = vld [vmem:[%s2 + $0x140] sm:$0xf]
    %v531 = vld [vmem:[%s2 + $0x144] sm:$0xf]
    %v532 = vld [vmem:[%s2 + $0x148] sm:$0xf]
    %v533 = vld [vmem:[%s2 + $0x14c] sm:$0xf]
    %v534 = vld [vmem:[%s2 + $0x150] sm:$0xf]
    %v535 = vld [vmem:[%s2 + $0x154] sm:$0xf]
    %v536 = vld [vmem:[%s2 + $0x158] sm:$0xf]
    %v537 = vld [vmem:[%s2 + $0x15c] sm:$0xf]
    %v538 = vld [vmem:[%s2 + $0x160] sm:$0xf]
    %v539 = vld [vmem:[%s2 + $0x164] sm:$0xf]
    %v540 = vld [vmem:[%s2 + $0x168] sm:$0xf]
    %v541 = vld [vmem:[%s2 + $0x16c] sm:$0xf]
    %v542 = vld [vmem:[%s2 + $0x170] sm:$0xf]
    %v543 = vld [vmem:[%s2 + $0x174] sm:$0xf]
    %v544 = vld [vmem:[%s2 + $0x178] sm:$0xf]
    %v545 = vld [vmem:[%s2 + $0x17c] sm:$0xf]
    %v546 = vld [vmem:[%s2 + $0x180] sm:$0xf]
    %v547 = vld [vmem:[%s2 + $0x184] sm:$0xf]
    %v548 = vld [vmem:[%s2 + $0x188] sm:$0xf]
    %v549 = vld [vmem:[%s2 + $0x18c] sm:$0xf]
    %v550 = vld [vmem:[%s2 + $0x190] sm:$0xf]
    %v551 = vld [vmem:[%s2 + $0x194] sm:$0xf]
    %v552 = vld [vmem:[%s2 + $0x198] sm:$0xf]
    %v553 = vld [vmem:[%s2 + $0x19c] sm:$0xf]
    %v554 = vld [vmem:[%s2 + $0x1a0] sm:$0xf]
    %v555 = vld [vmem:[%s2 + $0x1a4] sm:$0xf]
    %v556 = vld [vmem:[%s2 + $0x1a8] sm:$0xf]
    %v557 = vld [vmem:[%s2 + $0x1ac] sm:$0xf]
    %v558 = vld [vmem:[%s2 + $0x1b0] sm:$0xf]
    %v559 = vld [vmem:[%s2 + $0x1b4] sm:$0xf]
    %v560 = vld [vmem:[%s2 + $0x1b8] sm:$0xf]
    %v561 = vld [vmem:[%s2 + $0x1bc] sm:$0xf]
    %v562 = vld [vmem:[%s2 + $0x1c0] sm:$0xf]
    %v563 = vld [vmem:[%s2 + $0x1c4] sm:$0xf]
    %v564 = vld [vmem:[%s2 + $0x1c8] sm:$0xf]
    %v565 = vld [vmem:[%s2 + $0x1cc] sm:$0xf]
    %v566 = vld [vmem:[%s2 + $0x1d0] sm:$0xf]
    %v567 = vld [vmem:[%s2 + $0x1d4] sm:$0xf]
    %v568 = vld [vmem:[%s2 + $0x1d8] sm:$0xf]
    %v569 = vld [vmem:[%s2 + $0x1dc] sm:$0xf]
    %v570 = vld [vmem:[%s2 + $0x1e0] sm:$0xf]
    %v571 = vld [vmem:[%s2 + $0x1e4] sm:$0xf]
    %v572 = vld [vmem:[%s2 + $0x1e8] sm:$0xf]
    %v573 = vld [vmem:[%s2 + $0x1ec] sm:$0xf]
    %v574 = vld [vmem:[%s2 + $0x1f0] sm:$0xf]
    %v575 = vld [vmem:[%s2 + $0x1f4] sm:$0xf]
    %v576 = vld [vmem:[%s2 + $0x1f8] sm:$0xf]
    %v577 = vld [vmem:[%s2 + $0x1fc] sm:$0xf]
    %v578 = vld [vmem:[%s3 + $0xfc] sm:$0x1]
    %v579 = vunpack.c.l.bf16 %v578
    %v580 = vlaneseq
    %v581 = vshrl.u32 %v580, 7
    %v582 = vsub.s32 0, %v581
    %v583 = vrot.slane %v579, %v582
    %v712 = vunpack.c.l.b16 %v450
    %v713 = vunpack.c.l.b16 %v451
    %v714 = vunpack.c.l.b16 %v452
    %v715 = vunpack.c.l.b16 %v453
    %v716 = vunpack.c.l.b16 %v454
    %v717 = vunpack.c.l.b16 %v455
    %v718 = vunpack.c.l.b16 %v456
    %v719 = vunpack.c.l.b16 %v457
    %v720 = vunpack.c.l.b16 %v458
    %v721 = vunpack.c.l.b16 %v459
    %v722 = vunpack.c.l.b16 %v460
    %v723 = vunpack.c.l.b16 %v461
    %v724 = vunpack.c.l.b16 %v462
    %v725 = vunpack.c.l.b16 %v463
    %v726 = vunpack.c.l.b16 %v464
    %v727 = vunpack.c.l.b16 %v465
    %v728 = vunpack.c.l.b16 %v466
    %v729 = vunpack.c.l.b16 %v467
    %v730 = vunpack.c.l.b16 %v468
    %v731 = vunpack.c.l.b16 %v469
    %v732 = vunpack.c.l.b16 %v470
    %v733 = vunpack.c.l.b16 %v471
    %v734 = vunpack.c.l.b16 %v472
    %v735 = vunpack.c.l.b16 %v473
    %v736 = vunpack.c.l.b16 %v474
    %v737 = vunpack.c.l.b16 %v475
    %v738 = vunpack.c.l.b16 %v476
    %v739 = vunpack.c.l.b16 %v477
    %v740 = vunpack.c.l.b16 %v478
    %v741 = vunpack.c.l.b16 %v479
    %v742 = vunpack.c.l.b16 %v480
    %v743 = vunpack.c.l.b16 %v481
    %v744 = vunpack.c.l.b16 %v482
    %v745 = vunpack.c.l.b16 %v483
    %v746 = vunpack.c.l.b16 %v484
    %v747 = vunpack.c.l.b16 %v485
    %v748 = vunpack.c.l.b16 %v486
    %v749 = vunpack.c.l.b16 %v487
    %v750 = vunpack.c.l.b16 %v488
    %v751 = vunpack.c.l.b16 %v489
    %v752 = vunpack.c.l.b16 %v490
    %v753 = vunpack.c.l.b16 %v491
    %v754 = vunpack.c.l.b16 %v492
    %v755 = vunpack.c.l.b16 %v493
    %v756 = vunpack.c.l.b16 %v494
    %v757 = vunpack.c.l.b16 %v495
    %v758 = vunpack.c.l.b16 %v496
    %v759 = vunpack.c.l.b16 %v497
    %v760 = vunpack.c.l.b16 %v498
    %v761 = vunpack.c.l.b16 %v499
    %v762 = vunpack.c.l.b16 %v500
    %v763 = vunpack.c.l.b16 %v501
    %v764 = vunpack.c.l.b16 %v502
    %v765 = vunpack.c.l.b16 %v503
    %v766 = vunpack.c.l.b16 %v504
    %v767 = vunpack.c.l.b16 %v505
    %v768 = vunpack.c.l.b16 %v506
    %v769 = vunpack.c.l.b16 %v507
    %v770 = vunpack.c.l.b16 %v508
    %v771 = vunpack.c.l.b16 %v509
    %v772 = vunpack.c.l.b16 %v510
    %v773 = vunpack.c.l.b16 %v511
    %v774 = vunpack.c.l.b16 %v512
    %v775 = vunpack.c.l.b16 %v513
    %v776 = vunpack.c.l.b16 %v514
    %v777 = vunpack.c.l.b16 %v515
    %v778 = vunpack.c.l.b16 %v516
    %v779 = vunpack.c.l.b16 %v517
    %v780 = vunpack.c.l.b16 %v518
    %v781 = vunpack.c.l.b16 %v519
    %v782 = vunpack.c.l.b16 %v520
    %v783 = vunpack.c.l.b16 %v521
    %v784 = vunpack.c.l.b16 %v522
    %v785 = vunpack.c.l.b16 %v523
    %v786 = vunpack.c.l.b16 %v524
    %v787 = vunpack.c.l.b16 %v525
    %v788 = vunpack.c.l.b16 %v526
    %v789 = vunpack.c.l.b16 %v527
    %v790 = vunpack.c.l.b16 %v528
    %v791 = vunpack.c.l.b16 %v529
    %v792 = vunpack.c.l.b16 %v530
    %v793 = vunpack.c.l.b16 %v531
    %v794 = vunpack.c.l.b16 %v532
    %v795 = vunpack.c.l.b16 %v533
    %v796 = vunpack.c.l.b16 %v534
    %v797 = vunpack.c.l.b16 %v535
    %v798 = vunpack.c.l.b16 %v536
    %v799 = vunpack.c.l.b16 %v537
    %v800 = vunpack.c.l.b16 %v538
    %v801 = vunpack.c.l.b16 %v539
    %v802 = vunpack.c.l.b16 %v540
    %v803 = vunpack.c.l.b16 %v541
    %v804 = vunpack.c.l.b16 %v542
    %v805 = vunpack.c.l.b16 %v543
    %v806 = vunpack.c.l.b16 %v544
    %v807 = vunpack.c.l.b16 %v545
    %v808 = vunpack.c.l.b16 %v546
    %v809 = vunpack.c.l.b16 %v547
    %v810 = vunpack.c.l.b16 %v548
    %v811 = vunpack.c.l.b16 %v549
    %v812 = vunpack.c.l.b16 %v550
    %v813 = vunpack.c.l.b16 %v551
    %v814 = vunpack.c.l.b16 %v552
    %v815 = vunpack.c.l.b16 %v553
    %v816 = vunpack.c.l.b16 %v554
    %v817 = vunpack.c.l.b16 %v555
    %v818 = vunpack.c.l.b16 %v556
    %v819 = vunpack.c.l.b16 %v557
    %v820 = vunpack.c.l.b16 %v558
    %v821 = vunpack.c.l.b16 %v559
    %v822 = vunpack.c.l.b16 %v560
    %v823 = vunpack.c.l.b16 %v561
    %v824 = vunpack.c.l.b16 %v562
    %v825 = vunpack.c.l.b16 %v563
    %v826 = vunpack.c.l.b16 %v564
    %v827 = vunpack.c.l.b16 %v565
    %v828 = vunpack.c.l.b16 %v566
    %v829 = vunpack.c.l.b16 %v567
    %v830 = vunpack.c.l.b16 %v568
    %v831 = vunpack.c.l.b16 %v569
    %v832 = vunpack.c.l.b16 %v570
    %v833 = vunpack.c.l.b16 %v571
    %v834 = vunpack.c.l.b16 %v572
    %v835 = vunpack.c.l.b16 %v573
    %v836 = vunpack.c.l.b16 %v574
    %v837 = vunpack.c.l.b16 %v575
    %v838 = vunpack.c.l.b16 %v576
    %v839 = vunpack.c.l.b16 %v577
    %v840 = vpack.c.b16 %v713, %v712
    %v841 = vpack.c.b16 %v715, %v714
    %v842 = vpack.c.b16 %v717, %v716
    %v843 = vpack.c.b16 %v719, %v718
    %v844 = vpack.c.b16 %v721, %v720
    %v845 = vpack.c.b16 %v723, %v722
    %v846 = vpack.c.b16 %v725, %v724
    %v847 = vpack.c.b16 %v727, %v726
    %v848 = vpack.c.b16 %v729, %v728
    %v849 = vpack.c.b16 %v731, %v730
    %v850 = vpack.c.b16 %v733, %v732
    %v851 = vpack.c.b16 %v735, %v734
    %v852 = vpack.c.b16 %v737, %v736
    %v853 = vpack.c.b16 %v739, %v738
    %v854 = vpack.c.b16 %v741, %v740
    %v855 = vpack.c.b16 %v743, %v742
    %v856 = vpack.c.b16 %v745, %v744
    %v857 = vpack.c.b16 %v747, %v746
    %v858 = vpack.c.b16 %v749, %v748
    %v859 = vpack.c.b16 %v751, %v750
    %v860 = vpack.c.b16 %v753, %v752
    %v861 = vpack.c.b16 %v755, %v754
    %v862 = vpack.c.b16 %v757, %v756
    %v863 = vpack.c.b16 %v759, %v758
    %v864 = vpack.c.b16 %v761, %v760
    %v865 = vpack.c.b16 %v763, %v762
    %v866 = vpack.c.b16 %v765, %v764
    %v867 = vpack.c.b16 %v767, %v766
    %v868 = vpack.c.b16 %v769, %v768
    %v869 = vpack.c.b16 %v771, %v770
    %v870 = vpack.c.b16 %v773, %v772
    %v871 = vpack.c.b16 %v775, %v774
    %v872 = vpack.c.b16 %v777, %v776
    %v873 = vpack.c.b16 %v779, %v778
    %v874 = vpack.c.b16 %v781, %v780
    %v875 = vpack.c.b16 %v783, %v782
    %v876 = vpack.c.b16 %v785, %v784
    %v877 = vpack.c.b16 %v787, %v786
    %v878 = vpack.c.b16 %v789, %v788
    %v879 = vpack.c.b16 %v791, %v790
    %v880 = vpack.c.b16 %v793, %v792
    %v881 = vpack.c.b16 %v795, %v794
    %v882 = vpack.c.b16 %v797, %v796
    %v883 = vpack.c.b16 %v799, %v798
    %v884 = vpack.c.b16 %v801, %v800
    %v885 = vpack.c.b16 %v803, %v802
    %v886 = vpack.c.b16 %v805, %v804
    %v887 = vpack.c.b16 %v807, %v806
    %v888 = vpack.c.b16 %v809, %v808
    %v889 = vpack.c.b16 %v811, %v810
    %v890 = vpack.c.b16 %v813, %v812
    %v891 = vpack.c.b16 %v815, %v814
    %v892 = vpack.c.b16 %v817, %v816
    %v893 = vpack.c.b16 %v819, %v818
    %v894 = vpack.c.b16 %v821, %v820
    %v895 = vpack.c.b16 %v823, %v822
    %v896 = vpack.c.b16 %v825, %v824
    %v897 = vpack.c.b16 %v827, %v826
    %v898 = vpack.c.b16 %v829, %v828
    %v899 = vpack.c.b16 %v831, %v830
    %v900 = vpack.c.b16 %v833, %v832
    %v901 = vpack.c.b16 %v835, %v834
    %v902 = vpack.c.b16 %v837, %v836
    %v903 = vpack.c.b16 %v839, %v838
    %968 = vmatprep.subr.bf16.mxu0 0
    %969 = vmatpush1.bf16.msra.mxu0 %v847
    %970 = vmatprep.subr.bf16.mxu0 0
    %971 = vmatpush1.bf16.msra.mxu0 %v846
    %972 = vmatprep.subr.bf16.mxu0 0
    %973 = vmatpush1.bf16.msra.mxu0 %v845
    %974 = vmatprep.subr.bf16.mxu0 0
    %975 = vmatpush1.bf16.msra.mxu0 %v844
    %976 = vmatprep.subr.bf16.mxu0 0
    %977 = vmatpush1.bf16.msra.mxu0 %v843
    %978 = vmatprep.subr.bf16.mxu0 0
    %979 = vmatpush1.bf16.msra.mxu0 %v842
    %980 = vmatprep.subr.bf16.mxu0 0
    %981 = vmatpush1.bf16.msra.mxu0 %v841
    %982 = vmatprep.subr.bf16.mxu0 0
    %983 = vmatpush1.bf16.msra.mxu0 %v840
    %984 = vmatprep.subr.bf16.mxu0 0
    %985 = vmatpush2.bf16.msra.mxu0 %v855
    %986 = vmatprep.subr.bf16.mxu0 0
    %987 = vmatpush2.bf16.msra.mxu0 %v854
    %988 = vmatprep.subr.bf16.mxu0 0
    %989 = vmatpush2.bf16.msra.mxu0 %v853
    %990 = vmatprep.subr.bf16.mxu0 0
    %991 = vmatpush2.bf16.msra.mxu0 %v852
    %992 = vmatprep.subr.bf16.mxu0 0
    %993 = vmatpush2.bf16.msra.mxu0 %v851
    %994 = vmatprep.subr.bf16.mxu0 0
    %995 = vmatpush2.bf16.msra.mxu0 %v850
    %996 = vmatprep.subr.bf16.mxu0 0
    %997 = vmatpush2.bf16.msra.mxu0 %v849
    %998 = vmatprep.subr.bf16.mxu0 0
    %999 = vmatpush2.bf16.msra.mxu0 %v848
    %1000 = vmatprep.mubr.bf16.mxu0 %v395
    %1001 = vmatmul.mubr.bf16.gmra.mxu0 %v394
    %v1002 = vpop.f32.mrf.mxu0
    %v1003 = vadd.f32 %v583, %v1002
    %v1004 = vpop.f32.mrf.mxu0
    %v1005 = vpop.f32.mrf.mxu0
    %v1006 = vadd.f32 %v583, %v1005
    %v1007 = vpop.f32.mrf.mxu0
    %1008 = vmatprep.mubr.bf16.mxu0 %v435
    %1009 = vmatmul.mubr.bf16.gmra.mxu0 %v434
    %v1010 = vpop.f32.mrf.mxu0
    %v1011 = vadd.f32 %v583, %v1010
    %v1012 = vpop.f32.mrf.mxu0
    %v1013 = vpop.f32.mrf.mxu0
    %v1014 = vadd.f32 %v583, %v1013
    %v1015 = vpop.f32.mrf.mxu0
    %1016 = vdwg.mxu0
    %1017 = vmatprep.subr.bf16.mxu0 0
    %1018 = vmatpush1.bf16.msra.mxu0 %v863
    %1019 = vmatprep.subr.bf16.mxu0 0
    %1020 = vmatpush1.bf16.msra.mxu0 %v862
    %1021 = vmatprep.subr.bf16.mxu0 0
    %1022 = vmatpush1.bf16.msra.mxu0 %v861
    %1023 = vmatprep.subr.bf16.mxu0 0
    %1024 = vmatpush1.bf16.msra.mxu0 %v860
    %1025 = vmatprep.subr.bf16.mxu0 0
    %1026 = vmatpush1.bf16.msra.mxu0 %v859
    %1027 = vmatprep.subr.bf16.mxu0 0
    %1028 = vmatpush1.bf16.msra.mxu0 %v858
    %1029 = vmatprep.subr.bf16.mxu0 0
    %1030 = vmatpush1.bf16.msra.mxu0 %v857
    %1031 = vmatprep.subr.bf16.mxu0 0
    %1032 = vmatpush1.bf16.msra.mxu0 %v856
    %1033 = vmatprep.subr.bf16.mxu0 0
    %1034 = vmatpush2.bf16.msra.mxu0 %v871
    %1035 = vmatprep.subr.bf16.mxu0 0
    %1036 = vmatpush2.bf16.msra.mxu0 %v870
    %1037 = vmatprep.subr.bf16.mxu0 0
    %1038 = vmatpush2.bf16.msra.mxu0 %v869
    %1039 = vmatprep.subr.bf16.mxu0 0
    %1040 = vmatpush2.bf16.msra.mxu0 %v868
    %1041 = vmatprep.subr.bf16.mxu0 0
    %1042 = vmatpush2.bf16.msra.mxu0 %v867
    %1043 = vmatprep.subr.bf16.mxu0 0
    %1044 = vmatpush2.bf16.msra.mxu0 %v866
    %1045 = vmatprep.subr.bf16.mxu0 0
    %1046 = vmatpush2.bf16.msra.mxu0 %v865
    %1047 = vmatprep.subr.bf16.mxu0 0
    %1048 = vmatpush2.bf16.msra.mxu0 %v864
    %1049 = vmatprep.mubr.bf16.mxu0 %v397
    %1050 = vmatmul.mubr.bf16.gmra.mxu0 %v396
    %v1051 = vpop.f32.mrf.mxu0
    %v1052 = vadd.f32 %v1003, %v1051
    %v1053 = vpop.f32.mrf.mxu0
    %v1054 = vpop.f32.mrf.mxu0
    %v1055 = vadd.f32 %v1006, %v1054
    %v1056 = vpop.f32.mrf.mxu0
    %1057 = vmatprep.mubr.bf16.mxu0 %v437
    %1058 = vmatmul.mubr.bf16.gmra.mxu0 %v436
    %v1059 = vpop.f32.mrf.mxu0
    %v1060 = vadd.f32 %v1011, %v1059
    %v1061 = vpop.f32.mrf.mxu0
    %v1062 = vpop.f32.mrf.mxu0
    %v1063 = vadd.f32 %v1014, %v1062
    %v1064 = vpop.f32.mrf.mxu0
    %1065 = vdwg.mxu0
    %1066 = vmatprep.subr.bf16.mxu0 0
    %1067 = vmatpush1.bf16.msra.mxu0 %v879
    %1068 = vmatprep.subr.bf16.mxu0 0
    %1069 = vmatpush1.bf16.msra.mxu0 %v878
    %1070 = vmatprep.subr.bf16.mxu0 0
    %1071 = vmatpush1.bf16.msra.mxu0 %v877
    %1072 = vmatprep.subr.bf16.mxu0 0
    %1073 = vmatpush1.bf16.msra.mxu0 %v876
    %1074 = vmatprep.subr.bf16.mxu0 0
    %1075 = vmatpush1.bf16.msra.mxu0 %v875
    %1076 = vmatprep.subr.bf16.mxu0 0
    %1077 = vmatpush1.bf16.msra.mxu0 %v874
    %1078 = vmatprep.subr.bf16.mxu0 0
    %1079 = vmatpush1.bf16.msra.mxu0 %v873
    %1080 = vmatprep.subr.bf16.mxu0 0
    %1081 = vmatpush1.bf16.msra.mxu0 %v872
    %1082 = vmatprep.subr.bf16.mxu0 0
    %1083 = vmatpush2.bf16.msra.mxu0 %v887
    %1084 = vmatprep.subr.bf16.mxu0 0
    %1085 = vmatpush2.bf16.msra.mxu0 %v886
    %1086 = vmatprep.subr.bf16.mxu0 0
    %1087 = vmatpush2.bf16.msra.mxu0 %v885
    %1088 = vmatprep.subr.bf16.mxu0 0
    %1089 = vmatpush2.bf16.msra.mxu0 %v884
    %1090 = vmatprep.subr.bf16.mxu0 0
    %1091 = vmatpush2.bf16.msra.mxu0 %v883
    %1092 = vmatprep.subr.bf16.mxu0 0
    %1093 = vmatpush2.bf16.msra.mxu0 %v882
    %1094 = vmatprep.subr.bf16.mxu0 0
    %1095 = vmatpush2.bf16.msra.mxu0 %v881
    %1096 = vmatprep.subr.bf16.mxu0 0
    %1097 = vmatpush2.bf16.msra.mxu0 %v880
    %1098 = vmatprep.mubr.bf16.mxu0 %v399
    %1099 = vmatmul.mubr.bf16.gmra.mxu0 %v398
    %v1100 = vpop.f32.mrf.mxu0
    %v1101 = vadd.f32 %v1052, %v1100
    %v1102 = vpop.f32.mrf.mxu0
    %v1103 = vpop.f32.mrf.mxu0
    %v1104 = vadd.f32 %v1055, %v1103
    %v1105 = vpop.f32.mrf.mxu0
    %1106 = vmatprep.mubr.bf16.mxu0 %v439
    %1107 = vmatmul.mubr.bf16.gmra.mxu0 %v438
    %v1108 = vpop.f32.mrf.mxu0
    %v1109 = vadd.f32 %v1060, %v1108
    %v1110 = vpop.f32.mrf.mxu0
    %v1111 = vpop.f32.mrf.mxu0
    %v1112 = vadd.f32 %v1063, %v1111
    %v1113 = vpop.f32.mrf.mxu0
    %1114 = vdwg.mxu0
    %1115 = vmatprep.subr.bf16.mxu0 0
    %1116 = vmatpush1.bf16.msra.mxu0 %v895
    %1117 = vmatprep.subr.bf16.mxu0 0
    %1118 = vmatpush1.bf16.msra.mxu0 %v894
    %1119 = vmatprep.subr.bf16.mxu0 0
    %1120 = vmatpush1.bf16.msra.mxu0 %v893
    %1121 = vmatprep.subr.bf16.mxu0 0
    %1122 = vmatpush1.bf16.msra.mxu0 %v892
    %1123 = vmatprep.subr.bf16.mxu0 0
    %1124 = vmatpush1.bf16.msra.mxu0 %v891
    %1125 = vmatprep.subr.bf16.mxu0 0
    %1126 = vmatpush1.bf16.msra.mxu0 %v890
    %1127 = vmatprep.subr.bf16.mxu0 0
    %1128 = vmatpush1.bf16.msra.mxu0 %v889
    %1129 = vmatprep.subr.bf16.mxu0 0
    %1130 = vmatpush1.bf16.msra.mxu0 %v888
    %1131 = vmatprep.subr.bf16.mxu0 0
    %1132 = vmatpush2.bf16.msra.mxu0 %v903
    %1133 = vmatprep.subr.bf16.mxu0 0
    %1134 = vmatpush2.bf16.msra.mxu0 %v902
    %1135 = vmatprep.subr.bf16.mxu0 0
    %1136 = vmatpush2.bf16.msra.mxu0 %v901
    %1137 = vmatprep.subr.bf16.mxu0 0
    %1138 = vmatpush2.bf16.msra.mxu0 %v900
    %1139 = vmatprep.subr.bf16.mxu0 0
    %1140 = vmatpush2.bf16.msra.mxu0 %v899
    %1141 = vmatprep.subr.bf16.mxu0 0
    %1142 = vmatpush2.bf16.msra.mxu0 %v898
    %1143 = vmatprep.subr.bf16.mxu0 0
    %1144 = vmatpush2.bf16.msra.mxu0 %v897
    %1145 = vmatprep.subr.bf16.mxu0 0
    %1146 = vmatpush2.bf16.msra.mxu0 %v896
    %1147 = vmatprep.mubr.bf16.mxu0 %v401
    %1148 = vmatmul.mubr.bf16.gmra.mxu0 %v400
    %v1149 = vpop.f32.mrf.mxu0
    %v1150 = vadd.f32 %v1101, %v1149
    %v1151 = vpop.f32.mrf.mxu0
    %v1152 = vpop.f32.mrf.mxu0
    %v1153 = vadd.f32 %v1104, %v1152
    %v1154 = vpop.f32.mrf.mxu0
    %1155 = vmatprep.mubr.bf16.mxu0 %v441
    %1156 = vmatmul.mubr.bf16.gmra.mxu0 %v440
    %v1157 = vpop.f32.mrf.mxu0
    %v1158 = vadd.f32 %v1109, %v1157
    %v1159 = vpop.f32.mrf.mxu0
    %v1160 = vpop.f32.mrf.mxu0
    %v1161 = vadd.f32 %v1112, %v1160
    %v1162 = vpop.f32.mrf.mxu0
    %1163 = vdwg.mxu0
    %v1164 = vmax.f32 %v1150, 0.0
    %v1165 = vmax.f32 %v1153, 0.0
    %v1166 = vmax.f32 %v1158, 0.0
    %v1167 = vmax.f32 %v1161, 0.0
    %vm1168 = vcmask 261120
    %1169 = vst.msk [vmem:[#allocation2] sm:$0xff] %vm1168, %v1164
    %1170 = vst.msk [vmem:[#allocation2 + $0x8] sm:$0xff] %vm1168, %v1165
    %1171 = vst.msk [vmem:[#allocation2 + $0x10] sm:$0xff] %vm1168, %v1166
    %1172 = vst.msk [vmem:[#allocation2 + $0x18] sm:$0xff] %vm1168, %v1167
    %vm1173 = vcmask 254976
    %1174 = vst.msk [vmem:[#allocation2 + $0x20] sm:$0x3] %vm1173, %v76
    %v1175 = vld [vmem:[#allocation2] sm:$0xff]
    %v1176 = vld [vmem:[#allocation2 + $0x8] sm:$0xff]
    %v1177 = vld [vmem:[#allocation2 + $0x10] sm:$0xff]
    %v1178 = vld [vmem:[#allocation2 + $0x18] sm:$0xff]
    %v1179 = vld [vmem:[#allocation2 + $0x20] sm:$0x3]
    %v1180 = vld [vmem:[%s3 + $0xe4] sm:$0xf]
    %v1181 = vld [vmem:[%s3 + $0xe8] sm:$0xf]
    %v1182 = vld [vmem:[%s3 + $0xec] sm:$0xf]
    %v1183 = vld [vmem:[%s3 + $0xf0] sm:$0xf]
    %v1184 = vld [vmem:[%s3 + $0xf4] sm:$0x1]
    %v1185 = vunpack.c.l.bf16 %v1180
    %v1186 = vunpack.c.l.bf16 %v1181
    %v1187 = vunpack.c.l.bf16 %v1182
    %v1188 = vunpack.c.l.bf16 %v1183
    %v1189 = vunpack.c.l.bf16 %v1184
    %v1190 = vpack.c.bf16 %v1176, %v1175
    %v1191 = vpack.c.bf16 %v1178, %v1177
    %v1192 = vpack.c.bf16 %v1179, %v1179
    %v1193 = vld [vmem:[%s3 + $0x4] sm:$0xf]
    %v1194 = vld [vmem:[%s3 + $0x8] sm:$0xf]
    %v1195 = vld [vmem:[%s3 + $0xc] sm:$0xf]
    %v1196 = vld [vmem:[%s3 + $0x10] sm:$0xf]
    %v1197 = vld [vmem:[%s3 + $0xfc] sm:$0x4]
    %v1198 = vunpack.c.l.bf16 %v1197
    %v1199 = vlaneseq
    %v1200 = vshrl.u32 %v1199, 7
    %v1201 = vsub.s32 4, %v1200
    %v1202 = vrot.slane %v1198, %v1201
    %v1207 = vunpack.c.l.b16 %v1193
    %v1208 = vunpack.c.l.b16 %v1194
    %v1209 = vunpack.c.l.b16 %v1195
    %v1210 = vunpack.c.l.b16 %v1196
    %v1211 = vpack.c.b16 %v1208, %v1207
    %v1212 = vpack.c.b16 %v1210, %v1209
    %v1216 = vsel %vm1168, %v1190, 0
    %v1219 = vsel %vm1168, %v1191, 0
    %v1222 = vsel %vm1168, %v1192, 0
    %1224 = vmatprep.subr.bf16.mxu0 0
    %1225 = vmatpush1.bf16.msra.mxu0 0
    %1226 = vmatprep.subr.bf16.mxu0 0
    %1227 = vmatpush1.bf16.msra.mxu0 0
    %1228 = vmatprep.subr.bf16.mxu0 0
    %1229 = vmatpush1.bf16.msra.mxu0 0
    %1230 = vmatprep.subr.bf16.mxu0 0
    %1231 = vmatpush1.bf16.msra.mxu0 0
    %1232 = vmatprep.subr.bf16.mxu0 0
    %1233 = vmatpush1.bf16.msra.mxu0 0
    %1234 = vmatprep.subr.bf16.mxu0 0
    %1235 = vmatpush1.bf16.msra.mxu0 0
    %1236 = vmatprep.subr.bf16.mxu0 0
    %1237 = vmatpush1.bf16.msra.mxu0 %v1212
    %1238 = vmatprep.subr.bf16.mxu0 0
    %1239 = vmatpush1.bf16.msra.mxu0 %v1211
    %1240 = vmatprep.subr.bf16.mxu0 0
    %1241 = vmatpush2.bf16.msra.mxu0 0
    %1242 = vmatprep.subr.bf16.mxu0 0
    %1243 = vmatpush2.bf16.msra.mxu0 0
    %1244 = vmatprep.subr.bf16.mxu0 0
    %1245 = vmatpush2.bf16.msra.mxu0 0
    %1246 = vmatprep.subr.bf16.mxu0 0
    %1247 = vmatpush2.bf16.msra.mxu0 0
    %1248 = vmatprep.subr.bf16.mxu0 0
    %1249 = vmatpush2.bf16.msra.mxu0 0
    %1250 = vmatprep.subr.bf16.mxu0 0
    %1251 = vmatpush2.bf16.msra.mxu0 0
    %1252 = vmatprep.subr.bf16.mxu0 0
    %1253 = vmatpush2.bf16.msra.mxu0 0
    %1254 = vmatprep.subr.bf16.mxu0 0
    %1255 = vmatpush2.bf16.msra.mxu0 0
    %1256 = vmatprep.mubr.bf16.mxu0 0
    %1257 = vmatmul.mubr.bf16.gmra.mxu0 %v1216
    %v1258 = vpop.f32.mrf.mxu0
    %v1259 = vadd.f32 %v1202, %v1258
    %v1260 = vpop.f32.mrf.mxu0
    %v1261 = vpop.f32.mrf.mxu0
    %v1262 = vadd.f32 %v1202, %v1261
    %v1263 = vpop.f32.mrf.mxu0
    %1264 = vmatprep.mubr.bf16.mxu0 0
    %1265 = vmatmul.mubr.bf16.gmra.mxu0 %v1219
    %v1266 = vpop.f32.mrf.mxu0
    %v1267 = vadd.f32 %v1202, %v1266
    %v1268 = vpop.f32.mrf.mxu0
    %v1269 = vpop.f32.mrf.mxu0
    %v1270 = vadd.f32 %v1202, %v1269
    %v1271 = vpop.f32.mrf.mxu0
    %1272 = vmatprep.mubr.bf16.mxu0 0
    %1273 = vmatmul.mubr.bf16.gmra.mxu0 %v1222
    %v1274 = vpop.f32.mrf.mxu0
    %v1275 = vadd.f32 %v1202, %v1274
    %v1276 = vpop.f32.mrf.mxu0
    %v1277 = vpop.f32.mrf.mxu0
    %v1278 = vpop.f32.mrf.mxu0
    %1279 = vdwg.mxu0
    %v1280 = vpack.c.bf16 %v1262, %v1259
    %v1281 = vpack.c.bf16 %v1270, %v1267
    %v1282 = vpack.c.bf16 %v1275, %v1275
    %v1283 = vld [vmem:[%s3 + $0x14] sm:$0xf]
    %v1284 = vld [vmem:[%s3 + $0x18] sm:$0xf]
    %v1285 = vld [vmem:[%s3 + $0x1c] sm:$0xf]
    %v1286 = vld [vmem:[%s3 + $0x20] sm:$0xf]
    %1290 = vrot.lane.b32.xlu0 %v1280, 96
    %v1291 = vpop.permute.xlu0 %1290
    %1292 = vrot.lane.b32.xlu0 %v1281, 96
    %v1293 = vpop.permute.xlu0 %1292
    %1294 = vrot.lane.b32.xlu0 %v1282, 96
    %v1295 = vpop.permute.xlu0 %1294
    %vm1296 = vcmask 130048
    %v1298 = vsel %vm1296, %v1280, 0
    %v1301 = vsel %vm1296, %v1281, 0
    %v1304 = vsel %vm1296, %v1282, 0
    %v1307 = vsel %vm1296, %v1291, 0
    %v1310 = vsel %vm1296, %v1293, 0
    %v1313 = vsel %vm1296, %v1295, 0
    %1315 = vmatprep.subr.bf16.mxu0 0
    %1316 = vmatpush1.bf16.xpose.msra.mxu0 0
    %1317 = vmatprep.subr.bf16.mxu0 0
    %1318 = vmatpush1.bf16.xpose.msra.mxu0 0
    %1319 = vmatprep.subr.bf16.mxu0 0
    %1320 = vmatpush1.bf16.xpose.msra.mxu0 0
    %1321 = vmatprep.subr.bf16.mxu0 0
    %1322 = vmatpush1.bf16.xpose.msra.mxu0 0
    %1323 = vmatprep.subr.bf16.mxu0 0
    %1324 = vmatpush1.bf16.xpose.msra.mxu0 0
    %1325 = vmatprep.subr.bf16.mxu0 0
    %1326 = vmatpush1.bf16.xpose.msra.mxu0 %v1313
    %1327 = vmatprep.subr.bf16.mxu0 0
    %1328 = vmatpush1.bf16.xpose.msra.mxu0 %v1310
    %1329 = vmatprep.subr.bf16.mxu0 0
    %1330 = vmatpush1.bf16.xpose.msra.mxu0 %v1307
    %1331 = vmatprep.subr.bf16.mxu0 0
    %1332 = vmatpush2.bf16.xpose.msra.mxu0 0
    %1333 = vmatprep.subr.bf16.mxu0 0
    %1334 = vmatpush2.bf16.xpose.msra.mxu0 0
    %1335 = vmatprep.subr.bf16.mxu0 0
    %1336 = vmatpush2.bf16.xpose.msra.mxu0 0
    %1337 = vmatprep.subr.bf16.mxu0 0
    %1338 = vmatpush2.bf16.xpose.msra.mxu0 0
    %1339 = vmatprep.subr.bf16.mxu0 0
    %1340 = vmatpush2.bf16.xpose.msra.mxu0 0
    %1341 = vmatprep.subr.bf16.mxu0 0
    %1342 = vmatpush2.bf16.xpose.msra.mxu0 0
    %1343 = vmatprep.subr.bf16.mxu0 0
    %1344 = vmatpush2.bf16.xpose.msra.mxu0 0
    %1345 = vmatprep.subr.bf16.mxu0 0
    %1346 = vmatpush2.bf16.xpose.msra.mxu0 0
    %1347 = vmatprep.mubr.bf16.mxu0 0
    %1348 = vmatmul.mubr.bf16.gmra.mxu0 %v1298
    %v1349 = vpop.f32.mrf.mxu0
    %v1350 = vadd.f32 0.0, %v1349
    %v1351 = vpop.f32.mrf.mxu0
    %v1352 = vpop.f32.mrf.mxu0
    %v1353 = vadd.f32 0.0, %v1352
    %v1354 = vpop.f32.mrf.mxu0
    %1355 = vmatprep.mubr.bf16.mxu0 0
    %1356 = vmatmul.mubr.bf16.gmra.mxu0 %v1301
    %v1357 = vpop.f32.mrf.mxu0
    %v1358 = vadd.f32 0.0, %v1357
    %v1359 = vpop.f32.mrf.mxu0
    %v1360 = vpop.f32.mrf.mxu0
    %v1361 = vadd.f32 0.0, %v1360
    %v1362 = vpop.f32.mrf.mxu0
    %1363 = vmatprep.mubr.bf16.mxu0 0
    %1364 = vmatmul.mubr.bf16.gmra.mxu0 %v1304
    %v1365 = vpop.f32.mrf.mxu0
    %v1366 = vadd.f32 0.0, %v1365
    %v1367 = vpop.f32.mrf.mxu0
    %v1368 = vpop.f32.mrf.mxu0
    %v1369 = vpop.f32.mrf.mxu0
    %1370 = vdwg.mxu0
    %v1371 = vmul.f32 %v1350, 0.25
    %v1372 = vmul.f32 %v1353, 0.25
    %v1373 = vmul.f32 %v1358, 0.25
    %v1374 = vmul.f32 %v1361, 0.25
    %v1375 = vmul.f32 %v1366, 0.25
    %v1376 = vadd.f32 %v1371, %v1185
    %v1377 = vadd.f32 %v1372, %v1186
    %v1378 = vadd.f32 %v1373, %v1187
    %v1379 = vadd.f32 %v1374, %v1188
    %v1380 = vadd.f32 %v1375, %v1189
    %vm1381 = vcmask 277504
    %v1382 = vsel %vm1381, %v1376, -inf
    %1383 = vmax.xlane.f32.xlu0 %v1382
    %v1384 = vpop.xlane.xlu0 %1383
    %v1385 = vsel %vm1381, %v1377, -inf
    %1386 = vmax.xlane.f32.xlu0 %v1385
    %v1387 = vpop.xlane.xlu0 %1386
    %v1388 = vsel %vm1381, %v1378, -inf
    %1389 = vmax.xlane.f32.xlu0 %v1388
    %v1390 = vpop.xlane.xlu0 %1389
    %v1391 = vsel %vm1381, %v1379, -inf
    %1392 = vmax.xlane.f32.xlu0 %v1391
    %v1393 = vpop.xlane.xlu0 %1392
    %vm1394 = vcmask 271360
    %v1395 = vsel %vm1394, %v1380, -inf
    %1396 = vmax.xlane.f32.xlu0 %v1395
    %v1397 = vpop.xlane.xlu0 %1396
    %v1398 = vsub.f32 %v1376, %v1384
    %v1399 = vsub.f32 %v1377, %v1387
    %v1400 = vsub.f32 %v1378, %v1390
    %v1401 = vsub.f32 %v1379, %v1393
    %v1402 = vsub.f32 %v1380, %v1397
    %v1403 = vmul.f32 %v1398, 1.442695
    %v1404 = vpow.pop %v1403
    %v1405 = vmul.f32 %v1399, 1.442695
    %v1406 = vpow.pop %v1405
    %v1407 = vmul.f32 %v1400, 1.442695
    %v1408 = vpow.pop %v1407
    %v1409 = vmul.f32 %v1401, 1.442695
    %v1410 = vpow.pop %v1409
    %v1411 = vmul.f32 %v1402, 1.442695
    %v1412 = vpow.pop %v1411
    %v1413 = vsel %vm1381, %v1404, 0.0
    %1414 = vadd.xlane.f32.xlu0 %v1413
    %v1415 = vpop.xlane.xlu0 %1414
    %v1416 = vsel %vm1381, %v1406, 0.0
    %1417 = vadd.xlane.f32.xlu0 %v1416
    %v1418 = vpop.xlane.xlu0 %1417
    %v1419 = vsel %vm1381, %v1408, 0.0
    %1420 = vadd.xlane.f32.xlu0 %v1419
    %v1421 = vpop.xlane.xlu0 %1420
    %v1422 = vsel %vm1381, %v1410, 0.0
    %1423 = vadd.xlane.f32.xlu0 %v1422
    %v1424 = vpop.xlane.xlu0 %1423
    %v1425 = vsel %vm1394, %v1412, 0.0
    %1426 = vadd.xlane.f32.xlu0 %v1425
    %v1427 = vpop.xlane.xlu0 %1426
    %v1428 = vrcp.pop %v1415
    %v1429 = vrcp.pop %v1418
    %v1430 = vrcp.pop %v1421
    %v1431 = vrcp.pop %v1424
    %v1432 = vrcp.pop %v1427
    %v1433 = vmul.f32 %v1404, %v1428
    %v1434 = vmul.f32 %v1406, %v1429
    %v1435 = vmul.f32 %v1408, %v1430
    %v1436 = vmul.f32 %v1410, %v1431
    %v1437 = vmul.f32 %v1412, %v1432
    %v1438 = vpack.c.bf16 %v1434, %v1433
    %v1439 = vpack.c.bf16 %v1436, %v1435
    %v1440 = vpack.c.bf16 %v1437, %v1437
    %1441 = vrot.lane.b32.xlu0 %v1280, 64
    %v1442 = vpop.permute.xlu0 %1441
    %1443 = vrot.lane.b32.xlu0 %v1281, 64
    %v1444 = vpop.permute.xlu0 %1443
    %1445 = vrot.lane.b32.xlu0 %v1282, 64
    %v1446 = vpop.permute.xlu0 %1445
    %v1450 = vsel %vm1381, %v1438, 0
    %v1453 = vsel %vm1381, %v1439, 0
    %v1456 = vsel %vm1381, %v1440, 0
    %vm1458 = vcmask 1040384
    %v1460 = vsel %vm1458, %v1446, 0
    %1462 = vmatprep.subr.bf16.mxu0 0
    %1463 = vmatpush1.bf16.msra.mxu0 0
    %1464 = vmatprep.subr.bf16.mxu0 0
    %1465 = vmatpush1.bf16.msra.mxu0 0
    %1466 = vmatprep.subr.bf16.mxu0 0
    %1467 = vmatpush1.bf16.msra.mxu0 0
    %1468 = vmatprep.subr.bf16.mxu0 0
    %1469 = vmatpush1.bf16.msra.mxu0 0
    %1470 = vmatprep.subr.bf16.mxu0 0
    %1471 = vmatpush1.bf16.msra.mxu0 0
    %1472 = vmatprep.subr.bf16.mxu0 0
    %1473 = vmatpush1.bf16.msra.mxu0 %v1460
    %1474 = vmatprep.subr.bf16.mxu0 0
    %1475 = vmatpush1.bf16.msra.mxu0 %v1444
    %1476 = vmatprep.subr.bf16.mxu0 0
    %1477 = vmatpush1.bf16.msra.mxu0 %v1442
    %1478 = vmatprep.subr.bf16.mxu0 0
    %1479 = vmatpush2.bf16.msra.mxu0 0
    %1480 = vmatprep.subr.bf16.mxu0 0
    %1481 = vmatpush2.bf16.msra.mxu0 0
    %1482 = vmatprep.subr.bf16.mxu0 0
    %1483 = vmatpush2.bf16.msra.mxu0 0
    %1484 = vmatprep.subr.bf16.mxu0 0
    %1485 = vmatpush2.bf16.msra.mxu0 0
    %1486 = vmatprep.subr.bf16.mxu0 0
    %1487 = vmatpush2.bf16.msra.mxu0 0
    %1488 = vmatprep.subr.bf16.mxu0 0
    %1489 = vmatpush2.bf16.msra.mxu0 0
    %1490 = vmatprep.subr.bf16.mxu0 0
    %1491 = vmatpush2.bf16.msra.mxu0 0
    %1492 = vmatprep.subr.bf16.mxu0 0
    %1493 = vmatpush2.bf16.msra.mxu0 0
    %1494 = vmatprep.mubr.bf16.mxu0 0
    %1495 = vmatmul.mubr.bf16.gmra.mxu0 %v1450
    %v1496 = vpop.f32.mrf.mxu0
    %v1497 = vadd.f32 0.0, %v1496
    %v1498 = vpop.f32.mrf.mxu0
    %v1499 = vpop.f32.mrf.mxu0
    %v1500 = vadd.f32 0.0, %v1499
    %v1501 = vpop.f32.mrf.mxu0
    %1502 = vmatprep.mubr.bf16.mxu0 0
    %1503 = vmatmul.mubr.bf16.gmra.mxu0 %v1453
    %v1504 = vpop.f32.mrf.mxu0
    %v1505 = vadd.f32 0.0, %v1504
    %v1506 = vpop.f32.mrf.mxu0
    %v1507 = vpop.f32.mrf.mxu0
    %v1508 = vadd.f32 0.0, %v1507
    %v1509 = vpop.f32.mrf.mxu0
    %1510 = vmatprep.mubr.bf16.mxu0 0
    %1511 = vmatmul.mubr.bf16.gmra.mxu0 %v1456
    %v1512 = vpop.f32.mrf.mxu0
    %v1513 = vadd.f32 0.0, %v1512
    %v1514 = vpop.f32.mrf.mxu0
    %v1515 = vpop.f32.mrf.mxu0
    %v1516 = vpop.f32.mrf.mxu0
    %1517 = vdwg.mxu0
    %v1518 = vpack.c.bf16 %v1500, %v1497
    %v1519 = vpack.c.bf16 %v1508, %v1505
    %v1520 = vpack.c.bf16 %v1513, %v1513
    %1521 = vrot.lane.b32.xlu0 %v1280, 112
    %v1522 = vpop.permute.xlu0 %1521
    %1523 = vrot.lane.b32.xlu0 %v1281, 112
    %v1524 = vpop.permute.xlu0 %1523
    %1525 = vrot.lane.b32.xlu0 %v1282, 112
    %v1526 = vpop.permute.xlu0 %1525
    %1527 = vrot.lane.b32.xlu0 %v1280, 80
    %v1528 = vpop.permute.xlu0 %1527
    %1529 = vrot.lane.b32.xlu0 %v1281, 80
    %v1530 = vpop.permute.xlu0 %1529
    %1531 = vrot.lane.b32.xlu0 %v1282, 80
    %v1532 = vpop.permute.xlu0 %1531
    %v1534 = vsel %vm1296, %v1522, 0
    %v1537 = vsel %vm1296, %v1524, 0
    %v1540 = vsel %vm1296, %v1526, 0
    %v1543 = vsel %vm1296, %v1528, 0
    %v1546 = vsel %vm1296, %v1530, 0
    %v1549 = vsel %vm1296, %v1532, 0
    %1551 = vmatprep.subr.bf16.mxu0 0
    %1552 = vmatpush1.bf16.xpose.msra.mxu0 0
    %1553 = vmatprep.subr.bf16.mxu0 0
    %1554 = vmatpush1.bf16.xpose.msra.mxu0 0
    %1555 = vmatprep.subr.bf16.mxu0 0
    %1556 = vmatpush1.bf16.xpose.msra.mxu0 0
    %1557 = vmatprep.subr.bf16.mxu0 0
    %1558 = vmatpush1.bf16.xpose.msra.mxu0 0
    %1559 = vmatprep.subr.bf16.mxu0 0
    %1560 = vmatpush1.bf16.xpose.msra.mxu0 0
    %1561 = vmatprep.subr.bf16.mxu0 0
    %1562 = vmatpush1.bf16.xpose.msra.mxu0 %v1549
    %1563 = vmatprep.subr.bf16.mxu0 0
    %1564 = vmatpush1.bf16.xpose.msra.mxu0 %v1546
    %1565 = vmatprep.subr.bf16.mxu0 0
    %1566 = vmatpush1.bf16.xpose.msra.mxu0 %v1543
    %1567 = vmatprep.subr.bf16.mxu0 0
    %1568 = vmatpush2.bf16.xpose.msra.mxu0 0
    %1569 = vmatprep.subr.bf16.mxu0 0
    %1570 = vmatpush2.bf16.xpose.msra.mxu0 0
    %1571 = vmatprep.subr.bf16.mxu0 0
    %1572 = vmatpush2.bf16.xpose.msra.mxu0 0
    %1573 = vmatprep.subr.bf16.mxu0 0
    %1574 = vmatpush2.bf16.xpose.msra.mxu0 0
    %1575 = vmatprep.subr.bf16.mxu0 0
    %1576 = vmatpush2.bf16.xpose.msra.mxu0 0
    %1577 = vmatprep.subr.bf16.mxu0 0
    %1578 = vmatpush2.bf16.xpose.msra.mxu0 0
    %1579 = vmatprep.subr.bf16.mxu0 0
    %1580 = vmatpush2.bf16.xpose.msra.mxu0 0
    %1581 = vmatprep.subr.bf16.mxu0 0
    %1582 = vmatpush2.bf16.xpose.msra.mxu0 0
    %1583 = vmatprep.mubr.bf16.mxu0 0
    %1584 = vmatmul.mubr.bf16.gmra.mxu0 %v1534
    %v1585 = vpop.f32.mrf.mxu0
    %v1586 = vadd.f32 0.0, %v1585
    %v1587 = vpop.f32.mrf.mxu0
    %v1588 = vpop.f32.mrf.mxu0
    %v1589 = vadd.f32 0.0, %v1588
    %v1590 = vpop.f32.mrf.mxu0
    %1591 = vmatprep.mubr.bf16.mxu0 0
    %1592 = vmatmul.mubr.bf16.gmra.mxu0 %v1537
    %v1593 = vpop.f32.mrf.mxu0
    %v1594 = vadd.f32 0.0, %v1593
    %v1595 = vpop.f32.mrf.mxu0
    %v1596 = vpop.f32.mrf.mxu0
    %v1597 = vadd.f32 0.0, %v1596
    %v1598 = vpop.f32.mrf.mxu0
    %1599 = vmatprep.mubr.bf16.mxu0 0
    %1600 = vmatmul.mubr.bf16.gmra.mxu0 %v1540
    %v1601 = vpop.f32.mrf.mxu0
    %v1602 = vadd.f32 0.0, %v1601
    %v1603 = vpop.f32.mrf.mxu0
    %v1604 = vpop.f32.mrf.mxu0
    %v1605 = vpop.f32.mrf.mxu0
    %1606 = vdwg.mxu0
    %v1607 = vmul.f32 %v1586, 0.25
    %v1608 = vmul.f32 %v1589, 0.25
    %v1609 = vmul.f32 %v1594, 0.25
    %v1610 = vmul.f32 %v1597, 0.25
    %v1611 = vmul.f32 %v1602, 0.25
    %v1612 = vadd.f32 %v1607, %v1185
    %v1613 = vadd.f32 %v1608, %v1186
    %v1614 = vadd.f32 %v1609, %v1187
    %v1615 = vadd.f32 %v1610, %v1188
    %v1616 = vadd.f32 %v1611, %v1189
    %v1617 = vsel %vm1381, %v1612, -inf
    %1618 = vmax.xlane.f32.xlu0 %v1617
    %v1619 = vpop.xlane.xlu0 %1618
    %v1620 = vsel %vm1381, %v1613, -inf
    %1621 = vmax.xlane.f32.xlu0 %v1620
    %v1622 = vpop.xlane.xlu0 %1621
    %v1623 = vsel %vm1381, %v1614, -inf
    %1624 = vmax.xlane.f32.xlu0 %v1623
    %v1625 = vpop.xlane.xlu0 %1624
    %v1626 = vsel %vm1381, %v1615, -inf
    %1627 = vmax.xlane.f32.xlu0 %v1626
    %v1628 = vpop.xlane.xlu0 %1627
    %v1629 = vsel %vm1394, %v1616, -inf
    %1630 = vmax.xlane.f32.xlu0 %v1629
    %v1631 = vpop.xlane.xlu0 %1630
    %v1632 = vsub.f32 %v1612, %v1619
    %v1633 = vsub.f32 %v1613, %v1622
    %v1634 = vsub.f32 %v1614, %v1625
    %v1635 = vsub.f32 %v1615, %v1628
    %v1636 = vsub.f32 %v1616, %v1631
    %v1637 = vmul.f32 %v1632, 1.442695
    %v1638 = vpow.pop %v1637
    %v1639 = vmul.f32 %v1633, 1.442695
    %v1640 = vpow.pop %v1639
    %v1641 = vmul.f32 %v1634, 1.442695
    %v1642 = vpow.pop %v1641
    %v1643 = vmul.f32 %v1635, 1.442695
    %v1644 = vpow.pop %v1643
    %v1645 = vmul.f32 %v1636, 1.442695
    %v1646 = vpow.pop %v1645
    %v1647 = vsel %vm1381, %v1638, 0.0
    %1648 = vadd.xlane.f32.xlu0 %v1647
    %v1649 = vpop.xlane.xlu0 %1648
    %v1650 = vsel %vm1381, %v1640, 0.0
    %1651 = vadd.xlane.f32.xlu0 %v1650
    %v1652 = vpop.xlane.xlu0 %1651
    %v1653 = vsel %vm1381, %v1642, 0.0
    %1654 = vadd.xlane.f32.xlu0 %v1653
    %v1655 = vpop.xlane.xlu0 %1654
    %v1656 = vsel %vm1381, %v1644, 0.0
    %1657 = vadd.xlane.f32.xlu0 %v1656
    %v1658 = vpop.xlane.xlu0 %1657
    %v1659 = vsel %vm1394, %v1646, 0.0
    %1660 = vadd.xlane.f32.xlu0 %v1659
    %v1661 = vpop.xlane.xlu0 %1660
    %v1662 = vrcp.pop %v1649
    %v1663 = vrcp.pop %v1652
    %v1664 = vrcp.pop %v1655
    %v1665 = vrcp.pop %v1658
    %v1666 = vrcp.pop %v1661
    %v1667 = vmul.f32 %v1638, %v1662
    %v1668 = vmul.f32 %v1640, %v1663
    %v1669 = vmul.f32 %v1642, %v1664
    %v1670 = vmul.f32 %v1644, %v1665
    %v1671 = vmul.f32 %v1646, %v1666
    %v1672 = vpack.c.bf16 %v1668, %v1667
    %v1673 = vpack.c.bf16 %v1670, %v1669
    %v1674 = vpack.c.bf16 %v1671, %v1671
    %1675 = vrot.lane.b32.xlu0 %v1280, 48
    %v1676 = vpop.permute.xlu0 %1675
    %1677 = vrot.lane.b32.xlu0 %v1281, 48
    %v1678 = vpop.permute.xlu0 %1677
    %1679 = vrot.lane.b32.xlu0 %v1282, 48
    %v1680 = vpop.permute.xlu0 %1679
    %v1684 = vsel %vm1381, %v1672, 0
    %v1687 = vsel %vm1381, %v1673, 0
    %v1690 = vsel %vm1381, %v1674, 0
    %v1693 = vsel %vm1458, %v1680, 0
    %1695 = vmatprep.subr.bf16.mxu0 0
    %1696 = vmatpush1.bf16.msra.mxu0 0
    %1697 = vmatprep.subr.bf16.mxu0 0
    %1698 = vmatpush1.bf16.msra.mxu0 0
    %1699 = vmatprep.subr.bf16.mxu0 0
    %1700 = vmatpush1.bf16.msra.mxu0 0
    %1701 = vmatprep.subr.bf16.mxu0 0
    %1702 = vmatpush1.bf16.msra.mxu0 0
    %1703 = vmatprep.subr.bf16.mxu0 0
    %1704 = vmatpush1.bf16.msra.mxu0 0
    %1705 = vmatprep.subr.bf16.mxu0 0
    %1706 = vmatpush1.bf16.msra.mxu0 %v1693
    %1707 = vmatprep.subr.bf16.mxu0 0
    %1708 = vmatpush1.bf16.msra.mxu0 %v1678
    %1709 = vmatprep.subr.bf16.mxu0 0
    %1710 = vmatpush1.bf16.msra.mxu0 %v1676
    %1711 = vmatprep.subr.bf16.mxu0 0
    %1712 = vmatpush2.bf16.msra.mxu0 0
    %1713 = vmatprep.subr.bf16.mxu0 0
    %1714 = vmatpush2.bf16.msra.mxu0 0
    %1715 = vmatprep.subr.bf16.mxu0 0
    %1716 = vmatpush2.bf16.msra.mxu0 0
    %1717 = vmatprep.subr.bf16.mxu0 0
    %1718 = vmatpush2.bf16.msra.mxu0 0
    %1719 = vmatprep.subr.bf16.mxu0 0
    %1720 = vmatpush2.bf16.msra.mxu0 0
    %1721 = vmatprep.subr.bf16.mxu0 0
    %1722 = vmatpush2.bf16.msra.mxu0 0
    %1723 = vmatprep.subr.bf16.mxu0 0
    %1724 = vmatpush2.bf16.msra.mxu0 0
    %1725 = vmatprep.subr.bf16.mxu0 0
    %1726 = vmatpush2.bf16.msra.mxu0 0
    %1727 = vmatprep.mubr.bf16.mxu0 0
    %1728 = vmatmul.mubr.bf16.gmra.mxu0 %v1684
    %v1729 = vpop.f32.mrf.mxu0
    %v1730 = vadd.f32 0.0, %v1729
    %v1731 = vpop.f32.mrf.mxu0
    %v1732 = vpop.f32.mrf.mxu0
    %v1733 = vadd.f32 0.0, %v1732
    %v1734 = vpop.f32.mrf.mxu0
    %1735 = vmatprep.mubr.bf16.mxu0 0
    %1736 = vmatmul.mubr.bf16.gmra.mxu0 %v1687
    %v1737 = vpop.f32.mrf.mxu0
    %v1738 = vadd.f32 0.0, %v1737
    %v1739 = vpop.f32.mrf.mxu0
    %v1740 = vpop.f32.mrf.mxu0
    %v1741 = vadd.f32 0.0, %v1740
    %v1742 = vpop.f32.mrf.mxu0
    %1743 = vmatprep.mubr.bf16.mxu0 0
    %1744 = vmatmul.mubr.bf16.gmra.mxu0 %v1690
    %v1745 = vpop.f32.mrf.mxu0
    %v1746 = vadd.f32 0.0, %v1745
    %v1747 = vpop.f32.mrf.mxu0
    %v1748 = vpop.f32.mrf.mxu0
    %v1749 = vpop.f32.mrf.mxu0
    %1750 = vdwg.mxu0
    %v1751 = vpack.c.bf16 %v1733, %v1730
    %v1752 = vpack.c.bf16 %v1741, %v1738
    %v1753 = vpack.c.bf16 %v1746, %v1746
    %v1756 = vunpack.c.l.b16 %v1285
    %v1757 = vunpack.c.l.b16 %v1286
    %v1758 = vpack.c.b16 %v1757, %v1756
    %v1761 = vsel %vm1296, %v1751, 0
    %v1764 = vsel %vm1296, %v1752, 0
    %v1767 = vsel %vm1296, %v1753, 0
    %1769 = vmatprep.subr.bf16.mxu0 0
    %1770 = vmatpush1.bf16.msra.mxu0 0
    %1771 = vmatprep.subr.bf16.mxu0 0
    %1772 = vmatpush1.bf16.msra.mxu0 0
    %1773 = vmatprep.subr.bf16.mxu0 0
    %1774 = vmatpush1.bf16.msra.mxu0 0
    %1775 = vmatprep.subr.bf16.mxu0 0
    %1776 = vmatpush1.bf16.msra.mxu0 0
    %1777 = vmatprep.subr.bf16.mxu0 0
    %1778 = vmatpush1.bf16.msra.mxu0 0
    %1779 = vmatprep.subr.bf16.mxu0 0
    %1780 = vmatpush1.bf16.msra.mxu0 0
    %1781 = vmatprep.subr.bf16.mxu0 0
    %1782 = vmatpush1.bf16.msra.mxu0 0
    %1783 = vmatprep.subr.bf16.mxu0 0
    %1784 = vmatpush1.bf16.msra.mxu0 %v1758
    %1785 = vmatprep.subr.bf16.mxu0 0
    %1786 = vmatpush2.bf16.msra.mxu0 0
    %1787 = vmatprep.subr.bf16.mxu0 0
    %1788 = vmatpush2.bf16.msra.mxu0 0
    %1789 = vmatprep.subr.bf16.mxu0 0
    %1790 = vmatpush2.bf16.msra.mxu0 0
    %1791 = vmatprep.subr.bf16.mxu0 0
    %1792 = vmatpush2.bf16.msra.mxu0 0
    %1793 = vmatprep.subr.bf16.mxu0 0
    %1794 = vmatpush2.bf16.msra.mxu0 0
    %1795 = vmatprep.subr.bf16.mxu0 0
    %1796 = vmatpush2.bf16.msra.mxu0 0
    %1797 = vmatprep.subr.bf16.mxu0 0
    %1798 = vmatpush2.bf16.msra.mxu0 0
    %1799 = vmatprep.subr.bf16.mxu0 0
    %1800 = vmatpush2.bf16.msra.mxu0 0
    %1801 = vmatprep.mubr.bf16.mxu0 0
    %1802 = vmatmul.mubr.bf16.gmra.mxu0 %v1761
    %v1803 = vpop.f32.mrf.mxu0
    %v1804 = vadd.f32 0.0, %v1803
    %v1805 = vpop.f32.mrf.mxu0
    %v1806 = vpop.f32.mrf.mxu0
    %v1807 = vadd.f32 0.0, %v1806
    %v1808 = vpop.f32.mrf.mxu0
    %1809 = vmatprep.mubr.bf16.mxu0 0
    %1810 = vmatmul.mubr.bf16.gmra.mxu0 %v1764
    %v1811 = vpop.f32.mrf.mxu0
    %v1812 = vadd.f32 0.0, %v1811
    %v1813 = vpop.f32.mrf.mxu0
    %v1814 = vpop.f32.mrf.mxu0
    %v1815 = vadd.f32 0.0, %v1814
    %v1816 = vpop.f32.mrf.mxu0
    %1817 = vmatprep.mubr.bf16.mxu0 0
    %1818 = vmatmul.mubr.bf16.gmra.mxu0 %v1767
    %v1819 = vpop.f32.mrf.mxu0
    %v1820 = vadd.f32 0.0, %v1819
    %v1821 = vpop.f32.mrf.mxu0
    %v1822 = vpop.f32.mrf.mxu0
    %v1823 = vpop.f32.mrf.mxu0
    %1824 = vdwg.mxu0
    %v1827 = vunpack.c.l.b16 %v1283
    %v1828 = vunpack.c.l.b16 %v1284
    %v1829 = vpack.c.b16 %v1828, %v1827
    %v1832 = vsel %vm1296, %v1518, 0
    %v1835 = vsel %vm1296, %v1519, 0
    %v1838 = vsel %vm1296, %v1520, 0
    %1840 = vmatprep.subr.bf16.mxu0 0
    %1841 = vmatpush1.bf16.msra.mxu0 0
    %1842 = vmatprep.subr.bf16.mxu0 0
    %1843 = vmatpush1.bf16.msra.mxu0 0
    %1844 = vmatprep.subr.bf16.mxu0 0
    %1845 = vmatpush1.bf16.msra.mxu0 0
    %1846 = vmatprep.subr.bf16.mxu0 0
    %1847 = vmatpush1.bf16.msra.mxu0 0
    %1848 = vmatprep.subr.bf16.mxu0 0
    %1849 = vmatpush1.bf16.msra.mxu0 0
    %1850 = vmatprep.subr.bf16.mxu0 0
    %1851 = vmatpush1.bf16.msra.mxu0 0
    %1852 = vmatprep.subr.bf16.mxu0 0
    %1853 = vmatpush1.bf16.msra.mxu0 0
    %1854 = vmatprep.subr.bf16.mxu0 0
    %1855 = vmatpush1.bf16.msra.mxu0 %v1829
    %1856 = vmatprep.subr.bf16.mxu0 0
    %1857 = vmatpush2.bf16.msra.mxu0 0
    %1858 = vmatprep.subr.bf16.mxu0 0
    %1859 = vmatpush2.bf16.msra.mxu0 0
    %1860 = vmatprep.subr.bf16.mxu0 0
    %1861 = vmatpush2.bf16.msra.mxu0 0
    %1862 = vmatprep.subr.bf16.mxu0 0
    %1863 = vmatpush2.bf16.msra.mxu0 0
    %1864 = vmatprep.subr.bf16.mxu0 0
    %1865 = vmatpush2.bf16.msra.mxu0 0
    %1866 = vmatprep.subr.bf16.mxu0 0
    %1867 = vmatpush2.bf16.msra.mxu0 0
    %1868 = vmatprep.subr.bf16.mxu0 0
    %1869 = vmatpush2.bf16.msra.mxu0 0
    %1870 = vmatprep.subr.bf16.mxu0 0
    %1871 = vmatpush2.bf16.msra.mxu0 0
    %1872 = vmatprep.mubr.bf16.mxu0 0
    %1873 = vmatmul.mubr.bf16.gmra.mxu0 %v1832
    %v1874 = vpop.f32.mrf.mxu0
    %v1875 = vadd.f32 %v1804, %v1874
    %v1876 = vpop.f32.mrf.mxu0
    %v1877 = vpop.f32.mrf.mxu0
    %v1878 = vadd.f32 %v1807, %v1877
    %v1879 = vpop.f32.mrf.mxu0
    %1880 = vmatprep.mubr.bf16.mxu0 0
    %1881 = vmatmul.mubr.bf16.gmra.mxu0 %v1835
    %v1882 = vpop.f32.mrf.mxu0
    %v1883 = vadd.f32 %v1812, %v1882
    %v1884 = vpop.f32.mrf.mxu0
    %v1885 = vpop.f32.mrf.mxu0
    %v1886 = vadd.f32 %v1815, %v1885
    %v1887 = vpop.f32.mrf.mxu0
    %1888 = vmatprep.mubr.bf16.mxu0 0
    %1889 = vmatmul.mubr.bf16.gmra.mxu0 %v1838
    %v1890 = vpop.f32.mrf.mxu0
    %v1891 = vadd.f32 %v1820, %v1890
    %v1892 = vpop.f32.mrf.mxu0
    %v1893 = vpop.f32.mrf.mxu0
    %v1894 = vpop.f32.mrf.mxu0
    %1895 = vdwg.mxu0
    %v1896 = vadd.f32 %v1175, %v1875
    %v1897 = vadd.f32 %v1176, %v1878
    %v1898 = vadd.f32 %v1177, %v1883
    %v1899 = vadd.f32 %v1178, %v1886
    %v1900 = vadd.f32 %v1179, %v1891
    %v1901 = vlaneseq
    %v1902 = vshrl.u32 %v1901, 7
    %v1903 = vsub.s32 5, %v1902
    %v1904 = vrot.slane %v1198, %v1903
    %v1905 = vadd.f32 %v1896, %v1904
    %v1906 = vadd.f32 %v1897, %v1904
    %v1907 = vadd.f32 %v1898, %v1904
    %v1908 = vadd.f32 %v1899, %v1904
    %v1909 = vadd.f32 %v1900, %v1904
    %v1910 = vld [vmem:[%s3 + $0xfc] sm:$0x8]
    %v1911 = vunpack.c.l.bf16 %v1910
    %v1912 = vsel %vm1168, %v1905, 0.0
    %1913 = vadd.xlane.f32.xlu0 %v1912
    %v1914 = vpop.xlane.xlu0 %1913
    %v1915 = vsel %vm1168, %v1906, 0.0
    %1916 = vadd.xlane.f32.xlu0 %v1915
    %v1917 = vpop.xlane.xlu0 %1916
    %v1918 = vsel %vm1168, %v1907, 0.0
    %1919 = vadd.xlane.f32.xlu0 %v1918
    %v1920 = vpop.xlane.xlu0 %1919
    %v1921 = vsel %vm1168, %v1908, 0.0
    %1922 = vadd.xlane.f32.xlu0 %v1921
    %v1923 = vpop.xlane.xlu0 %1922
    %v1924 = vsel %vm1173, %v1909, 0.0
    %1925 = vadd.xlane.f32.xlu0 %v1924
    %v1926 = vpop.xlane.xlu0 %1925
    %v1927 = vrcp.pop 32.0
    %v1928 = vmul.f32 %v1914, %v1927
    %v1929 = vmul.f32 %v1917, %v1927
    %v1930 = vmul.f32 %v1920, %v1927
    %v1931 = vmul.f32 %v1923, %v1927
    %v1932 = vmul.f32 %v1926, %v1927
    %v1933 = vsub.f32 %v1905, %v1928
    %v1934 = vsub.f32 %v1906, %v1929
    %v1935 = vsub.f32 %v1907, %v1930
    %v1936 = vsub.f32 %v1908, %v1931
    %v1937 = vsub.f32 %v1909, %v1932
    %v1938 = vmul.f32 %v1933, %v1933
    %v1939 = vmul.f32 %v1934, %v1934
    %v1940 = vmul.f32 %v1935, %v1935
    %v1941 = vmul.f32 %v1936, %v1936
    %v1942 = vmul.f32 %v1937, %v1937
    %v1943 = vsel %vm1168, %v1938, 0.0
    %1944 = vadd.xlane.f32.xlu0 %v1943
    %v1945 = vpop.xlane.xlu0 %1944
    %v1946 = vsel %vm1168, %v1939, 0.0
    %1947 = vadd.xlane.f32.xlu0 %v1946
    %v1948 = vpop.xlane.xlu0 %1947
    %v1949 = vsel %vm1168, %v1940, 0.0
    %1950 = vadd.xlane.f32.xlu0 %v1949
    %v1951 = vpop.xlane.xlu0 %1950
    %v1952 = vsel %vm1168, %v1941, 0.0
    %1953 = vadd.xlane.f32.xlu0 %v1952
    %v1954 = vpop.xlane.xlu0 %1953
    %v1955 = vsel %vm1173, %v1942, 0.0
    %1956 = vadd.xlane.f32.xlu0 %v1955
    %v1957 = vpop.xlane.xlu0 %1956
    %v1958 = vmul.f32 %v1945, %v1927
    %v1959 = vmul.f32 %v1948, %v1927
    %v1960 = vmul.f32 %v1951, %v1927
    %v1961 = vmul.f32 %v1954, %v1927
    %v1962 = vmul.f32 %v1957, %v1927
    %v1963 = vadd.f32 %v1958, 1e-05
    %v1964 = vadd.f32 %v1959, 1e-05
    %v1965 = vadd.f32 %v1960, 1e-05
    %v1966 = vadd.f32 %v1961, 1e-05
    %v1967 = vadd.f32 %v1962, 1e-05
    %v1968 = vrsqrt.pop %v1963
    %v1969 = vrsqrt.pop %v1964
    %v1970 = vrsqrt.pop %v1965
    %v1971 = vrsqrt.pop %v1966
    %v1972 = vrsqrt.pop %v1967
    %v1973 = vmul.f32 %v1933, %v1968
    %v1974 = vmul.f32 %v1934, %v1969
    %v1975 = vmul.f32 %v1935, %v1970
    %v1976 = vmul.f32 %v1936, %v1971
    %v1977 = vmul.f32 %v1937, %v1972
    %v1978 = vlaneseq
    %v1979 = vshrl.u32 %v1978, 7
    %v1980 = vsub.s32 6, %v1979
    %v1981 = vrot.slane %v1911, %v1980
    %v1982 = vmul.f32 %v1973, %v1981
    %v1983 = vmul.f32 %v1974, %v1981
    %v1984 = vmul.f32 %v1975, %v1981
    %v1985 = vmul.f32 %v1976, %v1981
    %v1986 = vmul.f32 %v1977, %v1981
    %v1987 = vlaneseq
    %v1988 = vshrl.u32 %v1987, 7
    %v1989 = vsub.s32 7, %v1988
    %v1990 = vrot.slane %v1911, %v1989
    %v1991 = vadd.f32 %v1982, %v1990
    %v1992 = vadd.f32 %v1983, %v1990
    %v1993 = vadd.f32 %v1984, %v1990
    %v1994 = vadd.f32 %v1985, %v1990
    %v1995 = vadd.f32 %v1986, %v1990
    %v1996 = vpack.c.bf16 %v1992, %v1991
    %v1997 = vpack.c.bf16 %v1994, %v1993
    %v1998 = vpack.c.bf16 %v1995, %v1995
    %v1999 = vld [vmem:[%s3 + $0x24] sm:$0xf]
    %v2000 = vld [vmem:[%s3 + $0x28] sm:$0xf]
    %v2001 = vld [vmem:[%s3 + $0x2c] sm:$0xf]
    %v2002 = vld [vmem:[%s3 + $0x30] sm:$0xf]
    %v2003 = vld [vmem:[%s3 + $0x100] sm:$0x1]
    %v2004 = vunpack.c.l.bf16 %v2003
    %v2005 = vlaneseq
    %v2006 = vshrl.u32 %v2005, 7
    %v2007 = vsub.s32 0, %v2006
    %v2008 = vrot.slane %v2004, %v2007
    %v2013 = vunpack.c.l.b16 %v1999
    %v2014 = vunpack.c.l.b16 %v2000
    %v2015 = vunpack.c.l.b16 %v2001
    %v2016 = vunpack.c.l.b16 %v2002
    %v2017 = vpack.c.b16 %v2014, %v2013
    %v2018 = vpack.c.b16 %v2016, %v2015
    %v2022 = vsel %vm1168, %v1996, 0
    %v2025 = vsel %vm1168, %v1997, 0
    %v2028 = vsel %vm1168, %v1998, 0
    %2030 = vmatprep.subr.bf16.mxu0 0
    %2031 = vmatpush1.bf16.msra.mxu0 0
    %2032 = vmatprep.subr.bf16.mxu0 0
    %2033 = vmatpush1.bf16.msra.mxu0 0
    %2034 = vmatprep.subr.bf16.mxu0 0
    %2035 = vmatpush1.bf16.msra.mxu0 0
    %2036 = vmatprep.subr.bf16.mxu0 0
    %2037 = vmatpush1.bf16.msra.mxu0 0
    %2038 = vmatprep.subr.bf16.mxu0 0
    %2039 = vmatpush1.bf16.msra.mxu0 0
    %2040 = vmatprep.subr.bf16.mxu0 0
    %2041 = vmatpush1.bf16.msra.mxu0 0
    %2042 = vmatprep.subr.bf16.mxu0 0
    %2043 = vmatpush1.bf16.msra.mxu0 %v2018
    %2044 = vmatprep.subr.bf16.mxu0 0
    %2045 = vmatpush1.bf16.msra.mxu0 %v2017
    %2046 = vmatprep.subr.bf16.mxu0 0
    %2047 = vmatpush2.bf16.msra.mxu0 0
    %2048 = vmatprep.subr.bf16.mxu0 0
    %2049 = vmatpush2.bf16.msra.mxu0 0
    %2050 = vmatprep.subr.bf16.mxu0 0
    %2051 = vmatpush2.bf16.msra.mxu0 0
    %2052 = vmatprep.subr.bf16.mxu0 0
    %2053 = vmatpush2.bf16.msra.mxu0 0
    %2054 = vmatprep.subr.bf16.mxu0 0
    %2055 = vmatpush2.bf16.msra.mxu0 0
    %2056 = vmatprep.subr.bf16.mxu0 0
    %2057 = vmatpush2.bf16.msra.mxu0 0
    %2058 = vmatprep.subr.bf16.mxu0 0
    %2059 = vmatpush2.bf16.msra.mxu0 0
    %2060 = vmatprep.subr.bf16.mxu0 0
    %2061 = vmatpush2.bf16.msra.mxu0 0
    %2062 = vmatprep.mubr.bf16.mxu0 0
    %2063 = vmatmul.mubr.bf16.gmra.mxu0 %v2022
    %v2064 = vpop.f32.mrf.mxu0
    %v2065 = vadd.f32 %v2008, %v2064
    %v2066 = vpop.f32.mrf.mxu0
    %v2067 = vpop.f32.mrf.mxu0
    %v2068 = vadd.f32 %v2008, %v2067
    %v2069 = vpop.f32.mrf.mxu0
    %2070 = vmatprep.mubr.bf16.mxu0 0
    %2071 = vmatmul.mubr.bf16.gmra.mxu0 %v2025
    %v2072 = vpop.f32.mrf.mxu0
    %v2073 = vadd.f32 %v2008, %v2072
    %v2074 = vpop.f32.mrf.mxu0
    %v2075 = vpop.f32.mrf.mxu0
    %v2076 = vadd.f32 %v2008, %v2075
    %v2077 = vpop.f32.mrf.mxu0
    %2078 = vmatprep.mubr.bf16.mxu0 0
    %2079 = vmatmul.mubr.bf16.gmra.mxu0 %v2028
    %v2080 = vpop.f32.mrf.mxu0
    %v2081 = vadd.f32 %v2008, %v2080
    %v2082 = vpop.f32.mrf.mxu0
    %v2083 = vpop.f32.mrf.mxu0
    %v2084 = vpop.f32.mrf.mxu0
    %2085 = vdwg.mxu0
    %v2086 = vmax.f32 %v2065, 0.0
    %v2087 = vmax.f32 %v2068, 0.0
    %v2088 = vmax.f32 %v2073, 0.0
    %v2089 = vmax.f32 %v2076, 0.0
    %v2090 = vmax.f32 %v2081, 0.0
    %v2091 = vpack.c.bf16 %v2087, %v2086
    %v2092 = vpack.c.bf16 %v2089, %v2088
    %v2093 = vpack.c.bf16 %v2090, %v2090
    %v2094 = vld [vmem:[%s3 + $0x34] sm:$0xf]
    %v2095 = vld [vmem:[%s3 + $0x38] sm:$0xf]
    %v2096 = vld [vmem:[%s3 + $0x3c] sm:$0xf]
    %v2097 = vld [vmem:[%s3 + $0x40] sm:$0xf]
    %v2098 = vld [vmem:[%s3 + $0x44] sm:$0xf]
    %v2099 = vld [vmem:[%s3 + $0x48] sm:$0xf]
    %v2100 = vld [vmem:[%s3 + $0x4c] sm:$0xf]
    %v2101 = vld [vmem:[%s3 + $0x50] sm:$0xf]
    %v2102 = vlaneseq
    %v2103 = vshrl.u32 %v2102, 7
    %v2104 = vsub.s32 1, %v2103
    %v2105 = vrot.slane %v2004, %v2104
    %v2114 = vunpack.c.l.b16 %v2094
    %v2115 = vunpack.c.l.b16 %v2095
    %v2116 = vunpack.c.l.b16 %v2096
    %v2117 = vunpack.c.l.b16 %v2097
    %v2118 = vunpack.c.l.b16 %v2098
    %v2119 = vunpack.c.l.b16 %v2099
    %v2120 = vunpack.c.l.b16 %v2100
    %v2121 = vunpack.c.l.b16 %v2101
    %v2122 = vpack.c.b16 %v2115, %v2114
    %v2123 = vpack.c.b16 %v2117, %v2116
    %v2124 = vpack.c.b16 %v2119, %v2118
    %v2125 = vpack.c.b16 %v2121, %v2120
    %vm2130 = vcmask 523264
    %v2132 = vsel %vm2130, %v2091, 0
    %v2135 = vsel %vm2130, %v2092, 0
    %v2138 = vsel %vm2130, %v2093, 0
    %2140 = vmatprep.subr.bf16.mxu0 0
    %2141 = vmatpush1.bf16.msra.mxu0 0
    %2142 = vmatprep.subr.bf16.mxu0 0
    %2143 = vmatpush1.bf16.msra.mxu0 0
    %2144 = vmatprep.subr.bf16.mxu0 0
    %2145 = vmatpush1.bf16.msra.mxu0 0
    %2146 = vmatprep.subr.bf16.mxu0 0
    %2147 = vmatpush1.bf16.msra.mxu0 0
    %2148 = vmatprep.subr.bf16.mxu0 0
    %2149 = vmatpush1.bf16.msra.mxu0 %v2125
    %2150 = vmatprep.subr.bf16.mxu0 0
    %2151 = vmatpush1.bf16.msra.mxu0 %v2124
    %2152 = vmatprep.subr.bf16.mxu0 0
    %2153 = vmatpush1.bf16.msra.mxu0 %v2123
    %2154 = vmatprep.subr.bf16.mxu0 0
    %2155 = vmatpush1.bf16.msra.mxu0 %v2122
    %2156 = vmatprep.subr.bf16.mxu0 0
    %2157 = vmatpush2.bf16.msra.mxu0 0
    %2158 = vmatprep.subr.bf16.mxu0 0
    %2159 = vmatpush2.bf16.msra.mxu0 0
    %2160 = vmatprep.subr.bf16.mxu0 0
    %2161 = vmatpush2.bf16.msra.mxu0 0
    %2162 = vmatprep.subr.bf16.mxu0 0
    %2163 = vmatpush2.bf16.msra.mxu0 0
    %2164 = vmatprep.subr.bf16.mxu0 0
    %2165 = vmatpush2.bf16.msra.mxu0 0
    %2166 = vmatprep.subr.bf16.mxu0 0
    %2167 = vmatpush2.bf16.msra.mxu0 0
    %2168 = vmatprep.subr.bf16.mxu0 0
    %2169 = vmatpush2.bf16.msra.mxu0 0
    %2170 = vmatprep.subr.bf16.mxu0 0
    %2171 = vmatpush2.bf16.msra.mxu0 0
    %2172 = vmatprep.mubr.bf16.mxu0 0
    %2173 = vmatmul.mubr.bf16.gmra.mxu0 %v2132
    %v2174 = vpop.f32.mrf.mxu0
    %v2175 = vadd.f32 %v2105, %v2174
    %v2176 = vpop.f32.mrf.mxu0
    %v2177 = vpop.f32.mrf.mxu0
    %v2178 = vadd.f32 %v2105, %v2177
    %v2179 = vpop.f32.mrf.mxu0
    %2180 = vmatprep.mubr.bf16.mxu0 0
    %2181 = vmatmul.mubr.bf16.gmra.mxu0 %v2135
    %v2182 = vpop.f32.mrf.mxu0
    %v2183 = vadd.f32 %v2105, %v2182
    %v2184 = vpop.f32.mrf.mxu0
    %v2185 = vpop.f32.mrf.mxu0
    %v2186 = vadd.f32 %v2105, %v2185
    %v2187 = vpop.f32.mrf.mxu0
    %2188 = vmatprep.mubr.bf16.mxu0 0
    %2189 = vmatmul.mubr.bf16.gmra.mxu0 %v2138
    %v2190 = vpop.f32.mrf.mxu0
    %v2191 = vadd.f32 %v2105, %v2190
    %v2192 = vpop.f32.mrf.mxu0
    %v2193 = vpop.f32.mrf.mxu0
    %v2194 = vpop.f32.mrf.mxu0
    %2195 = vdwg.mxu0
    %v2196 = vadd.f32 %v1991, %v2175
    %v2197 = vadd.f32 %v1992, %v2178
    %v2198 = vadd.f32 %v1993, %v2183
    %v2199 = vadd.f32 %v1994, %v2186
    %v2200 = vadd.f32 %v1995, %v2191
    %v2201 = vld [vmem:[%s3 + $0x100] sm:$0x2]
    %v2202 = vunpack.c.l.bf16 %v2201
    %v2203 = vsel %vm1168, %v2196, 0.0
    %2204 = vadd.xlane.f32.xlu0 %v2203
    %v2205 = vpop.xlane.xlu0 %2204
    %v2206 = vsel %vm1168, %v2197, 0.0
    %2207 = vadd.xlane.f32.xlu0 %v2206
    %v2208 = vpop.xlane.xlu0 %2207
    %v2209 = vsel %vm1168, %v2198, 0.0
    %2210 = vadd.xlane.f32.xlu0 %v2209
    %v2211 = vpop.xlane.xlu0 %2210
    %v2212 = vsel %vm1168, %v2199, 0.0
    %2213 = vadd.xlane.f32.xlu0 %v2212
    %v2214 = vpop.xlane.xlu0 %2213
    %v2215 = vsel %vm1173, %v2200, 0.0
    %2216 = vadd.xlane.f32.xlu0 %v2215
    %v2217 = vpop.xlane.xlu0 %2216
    %v2218 = vmul.f32 %v2205, %v1927
    %v2219 = vmul.f32 %v2208, %v1927
    %v2220 = vmul.f32 %v2211, %v1927
    %v2221 = vmul.f32 %v2214, %v1927
    %v2222 = vmul.f32 %v2217, %v1927
    %v2223 = vsub.f32 %v2196, %v2218
    %v2224 = vsub.f32 %v2197, %v2219
    %v2225 = vsub.f32 %v2198, %v2220
    %v2226 = vsub.f32 %v2199, %v2221
    %v2227 = vsub.f32 %v2200, %v2222
    %v2228 = vmul.f32 %v2223, %v2223
    %v2229 = vmul.f32 %v2224, %v2224
    %v2230 = vmul.f32 %v2225, %v2225
    %v2231 = vmul.f32 %v2226, %v2226
    %v2232 = vmul.f32 %v2227, %v2227
    %v2233 = vsel %vm1168, %v2228, 0.0
    %2234 = vadd.xlane.f32.xlu0 %v2233
    %v2235 = vpop.xlane.xlu0 %2234
    %v2236 = vsel %vm1168, %v2229, 0.0
    %2237 = vadd.xlane.f32.xlu0 %v2236
    %v2238 = vpop.xlane.xlu0 %2237
    %v2239 = vsel %vm1168, %v2230, 0.0
    %2240 = vadd.xlane.f32.xlu0 %v2239
    %v2241 = vpop.xlane.xlu0 %2240
    %v2242 = vsel %vm1168, %v2231, 0.0
    %2243 = vadd.xlane.f32.xlu0 %v2242
    %v2244 = vpop.xlane.xlu0 %2243
    %v2245 = vsel %vm1173, %v2232, 0.0
    %2246 = vadd.xlane.f32.xlu0 %v2245
    %v2247 = vpop.xlane.xlu0 %2246
    %v2248 = vmul.f32 %v2235, %v1927
    %v2249 = vmul.f32 %v2238, %v1927
    %v2250 = vmul.f32 %v2241, %v1927
    %v2251 = vmul.f32 %v2244, %v1927
    %v2252 = vmul.f32 %v2247, %v1927
    %v2253 = vadd.f32 %v2248, 1e-05
    %v2254 = vadd.f32 %v2249, 1e-05
    %v2255 = vadd.f32 %v2250, 1e-05
    %v2256 = vadd.f32 %v2251, 1e-05
    %v2257 = vadd.f32 %v2252, 1e-05
    %v2258 = vrsqrt.pop %v2253
    %v2259 = vrsqrt.pop %v2254
    %v2260 = vrsqrt.pop %v2255
    %v2261 = vrsqrt.pop %v2256
    %v2262 = vrsqrt.pop %v2257
    %v2263 = vmul.f32 %v2223, %v2258
    %v2264 = vmul.f32 %v2224, %v2259
    %v2265 = vmul.f32 %v2225, %v2260
    %v2266 = vmul.f32 %v2226, %v2261
    %v2267 = vmul.f32 %v2227, %v2262
    %v2268 = vlaneseq
    %v2269 = vshrl.u32 %v2268, 7
    %v2270 = vsub.s32 2, %v2269
    %v2271 = vrot.slane %v2202, %v2270
    %v2272 = vmul.f32 %v2263, %v2271
    %v2273 = vmul.f32 %v2264, %v2271
    %v2274 = vmul.f32 %v2265, %v2271
    %v2275 = vmul.f32 %v2266, %v2271
    %v2276 = vmul.f32 %v2267, %v2271
    %v2277 = vlaneseq
    %v2278 = vshrl.u32 %v2277, 7
    %v2279 = vsub.s32 3, %v2278
    %v2280 = vrot.slane %v2202, %v2279
    %v2281 = vadd.f32 %v2272, %v2280
    %v2282 = vadd.f32 %v2273, %v2280
    %v2283 = vadd.f32 %v2274, %v2280
    %v2284 = vadd.f32 %v2275, %v2280
    %v2285 = vadd.f32 %v2276, %v2280
    %v2286 = vpack.c.bf16 %v2282, %v2281
    %v2287 = vpack.c.bf16 %v2284, %v2283
    %v2288 = vpack.c.bf16 %v2285, %v2285
    %v2289 = vld [vmem:[%s3 + $0x54] sm:$0xf]
    %v2290 = vld [vmem:[%s3 + $0x58] sm:$0xf]
    %v2291 = vld [vmem:[%s3 + $0x5c] sm:$0xf]
    %v2292 = vld [vmem:[%s3 + $0x60] sm:$0xf]
    %v2293 = vld [vmem:[%s3 + $0x100] sm:$0x4]
    %v2294 = vunpack.c.l.bf16 %v2293
    %v2295 = vlaneseq
    %v2296 = vshrl.u32 %v2295, 7
    %v2297 = vsub.s32 4, %v2296
    %v2298 = vrot.slane %v2294, %v2297
    %v2303 = vunpack.c.l.b16 %v2289
    %v2304 = vunpack.c.l.b16 %v2290
    %v2305 = vunpack.c.l.b16 %v2291
    %v2306 = vunpack.c.l.b16 %v2292
    %v2307 = vpack.c.b16 %v2304, %v2303
    %v2308 = vpack.c.b16 %v2306, %v2305
    %v2312 = vsel %vm1168, %v2286, 0
    %v2315 = vsel %vm1168, %v2287, 0
    %v2318 = vsel %vm1168, %v2288, 0
    %2320 = vmatprep.subr.bf16.mxu0 0
    %2321 = vmatpush1.bf16.msra.mxu0 0
    %2322 = vmatprep.subr.bf16.mxu0 0
    %2323 = vmatpush1.bf16.msra.mxu0 0
    %2324 = vmatprep.subr.bf16.mxu0 0
    %2325 = vmatpush1.bf16.msra.mxu0 0
    %2326 = vmatprep.subr.bf16.mxu0 0
    %2327 = vmatpush1.bf16.msra.mxu0 0
    %2328 = vmatprep.subr.bf16.mxu0 0
    %2329 = vmatpush1.bf16.msra.mxu0 0
    %2330 = vmatprep.subr.bf16.mxu0 0
    %2331 = vmatpush1.bf16.msra.mxu0 0
    %2332 = vmatprep.subr.bf16.mxu0 0
    %2333 = vmatpush1.bf16.msra.mxu0 %v2308
    %2334 = vmatprep.subr.bf16.mxu0 0
    %2335 = vmatpush1.bf16.msra.mxu0 %v2307
    %2336 = vmatprep.subr.bf16.mxu0 0
    %2337 = vmatpush2.bf16.msra.mxu0 0
    %2338 = vmatprep.subr.bf16.mxu0 0
    %2339 = vmatpush2.bf16.msra.mxu0 0
    %2340 = vmatprep.subr.bf16.mxu0 0
    %2341 = vmatpush2.bf16.msra.mxu0 0
    %2342 = vmatprep.subr.bf16.mxu0 0
    %2343 = vmatpush2.bf16.msra.mxu0 0
    %2344 = vmatprep.subr.bf16.mxu0 0
    %2345 = vmatpush2.bf16.msra.mxu0 0
    %2346 = vmatprep.subr.bf16.mxu0 0
    %2347 = vmatpush2.bf16.msra.mxu0 0
    %2348 = vmatprep.subr.bf16.mxu0 0
    %2349 = vmatpush2.bf16.msra.mxu0 0
    %2350 = vmatprep.subr.bf16.mxu0 0
    %2351 = vmatpush2.bf16.msra.mxu0 0
    %2352 = vmatprep.mubr.bf16.mxu0 0
    %2353 = vmatmul.mubr.bf16.gmra.mxu0 %v2312
    %v2354 = vpop.f32.mrf.mxu0
    %v2355 = vadd.f32 %v2298, %v2354
    %v2356 = vpop.f32.mrf.mxu0
    %v2357 = vpop.f32.mrf.mxu0
    %v2358 = vadd.f32 %v2298, %v2357
    %v2359 = vpop.f32.mrf.mxu0
    %2360 = vmatprep.mubr.bf16.mxu0 0
    %2361 = vmatmul.mubr.bf16.gmra.mxu0 %v2315
    %v2362 = vpop.f32.mrf.mxu0
    %v2363 = vadd.f32 %v2298, %v2362
    %v2364 = vpop.f32.mrf.mxu0
    %v2365 = vpop.f32.mrf.mxu0
    %v2366 = vadd.f32 %v2298, %v2365
    %v2367 = vpop.f32.mrf.mxu0
    %2368 = vmatprep.mubr.bf16.mxu0 0
    %2369 = vmatmul.mubr.bf16.gmra.mxu0 %v2318
    %v2370 = vpop.f32.mrf.mxu0
    %v2371 = vadd.f32 %v2298, %v2370
    %v2372 = vpop.f32.mrf.mxu0
    %v2373 = vpop.f32.mrf.mxu0
    %v2374 = vpop.f32.mrf.mxu0
    %2375 = vdwg.mxu0
    %v2376 = vpack.c.bf16 %v2358, %v2355
    %v2377 = vpack.c.bf16 %v2366, %v2363
    %v2378 = vpack.c.bf16 %v2371, %v2371
    %v2379 = vld [vmem:[%s3 + $0x64] sm:$0xf]
    %v2380 = vld [vmem:[%s3 + $0x68] sm:$0xf]
    %v2381 = vld [vmem:[%s3 + $0x6c] sm:$0xf]
    %v2382 = vld [vmem:[%s3 + $0x70] sm:$0xf]
    %2386 = vrot.lane.b32.xlu0 %v2376, 96
    %v2387 = vpop.permute.xlu0 %2386
    %2388 = vrot.lane.b32.xlu0 %v2377, 96
    %v2389 = vpop.permute.xlu0 %2388
    %2390 = vrot.lane.b32.xlu0 %v2378, 96
    %v2391 = vpop.permute.xlu0 %2390
    %v2393 = vsel %vm1296, %v2376, 0
    %v2396 = vsel %vm1296, %v2377, 0
    %v2399 = vsel %vm1296, %v2378, 0
    %v2402 = vsel %vm1296, %v2387, 0
    %v2405 = vsel %vm1296, %v2389, 0
    %v2408 = vsel %vm1296, %v2391, 0
    %2410 = vmatprep.subr.bf16.mxu0 0
    %2411 = vmatpush1.bf16.xpose.msra.mxu0 0
    %2412 = vmatprep.subr.bf16.mxu0 0
    %2413 = vmatpush1.bf16.xpose.msra.mxu0 0
    %2414 = vmatprep.subr.bf16.mxu0 0
    %2415 = vmatpush1.bf16.xpose.msra.mxu0 0
    %2416 = vmatprep.subr.bf16.mxu0 0
    %2417 = vmatpush1.bf16.xpose.msra.mxu0 0
    %2418 = vmatprep.subr.bf16.mxu0 0
    %2419 = vmatpush1.bf16.xpose.msra.mxu0 0
    %2420 = vmatprep.subr.bf16.mxu0 0
    %2421 = vmatpush1.bf16.xpose.msra.mxu0 %v2408
    %2422 = vmatprep.subr.bf16.mxu0 0
    %2423 = vmatpush1.bf16.xpose.msra.mxu0 %v2405
    %2424 = vmatprep.subr.bf16.mxu0 0
    %2425 = vmatpush1.bf16.xpose.msra.mxu0 %v2402
    %2426 = vmatprep.subr.bf16.mxu0 0
    %2427 = vmatpush2.bf16.xpose.msra.mxu0 0
    %2428 = vmatprep.subr.bf16.mxu0 0
    %2429 = vmatpush2.bf16.xpose.msra.mxu0 0
    %2430 = vmatprep.subr.bf16.mxu0 0
    %2431 = vmatpush2.bf16.xpose.msra.mxu0 0
    %2432 = vmatprep.subr.bf16.mxu0 0
    %2433 = vmatpush2.bf16.xpose.msra.mxu0 0
    %2434 = vmatprep.subr.bf16.mxu0 0
    %2435 = vmatpush2.bf16.xpose.msra.mxu0 0
    %2436 = vmatprep.subr.bf16.mxu0 0
    %2437 = vmatpush2.bf16.xpose.msra.mxu0 0
    %2438 = vmatprep.subr.bf16.mxu0 0
    %2439 = vmatpush2.bf16.xpose.msra.mxu0 0
    %2440 = vmatprep.subr.bf16.mxu0 0
    %2441 = vmatpush2.bf16.xpose.msra.mxu0 0
    %2442 = vmatprep.mubr.bf16.mxu0 0
    %2443 = vmatmul.mubr.bf16.gmra.mxu0 %v2393
    %v2444 = vpop.f32.mrf.mxu0
    %v2445 = vadd.f32 0.0, %v2444
    %v2446 = vpop.f32.mrf.mxu0
    %v2447 = vpop.f32.mrf.mxu0
    %v2448 = vadd.f32 0.0, %v2447
    %v2449 = vpop.f32.mrf.mxu0
    %2450 = vmatprep.mubr.bf16.mxu0 0
    %2451 = vmatmul.mubr.bf16.gmra.mxu0 %v2396
    %v2452 = vpop.f32.mrf.mxu0
    %v2453 = vadd.f32 0.0, %v2452
    %v2454 = vpop.f32.mrf.mxu0
    %v2455 = vpop.f32.mrf.mxu0
    %v2456 = vadd.f32 0.0, %v2455
    %v2457 = vpop.f32.mrf.mxu0
    %2458 = vmatprep.mubr.bf16.mxu0 0
    %2459 = vmatmul.mubr.bf16.gmra.mxu0 %v2399
    %v2460 = vpop.f32.mrf.mxu0
    %v2461 = vadd.f32 0.0, %v2460
    %v2462 = vpop.f32.mrf.mxu0
    %v2463 = vpop.f32.mrf.mxu0
    %v2464 = vpop.f32.mrf.mxu0
    %2465 = vdwg.mxu0
    %v2466 = vmul.f32 %v2445, 0.25
    %v2467 = vmul.f32 %v2448, 0.25
    %v2468 = vmul.f32 %v2453, 0.25
    %v2469 = vmul.f32 %v2456, 0.25
    %v2470 = vmul.f32 %v2461, 0.25
    %v2471 = vadd.f32 %v2466, %v1185
    %v2472 = vadd.f32 %v2467, %v1186
    %v2473 = vadd.f32 %v2468, %v1187
    %v2474 = vadd.f32 %v2469, %v1188
    %v2475 = vadd.f32 %v2470, %v1189
    %v2476 = vsel %vm1381, %v2471, -inf
    %2477 = vmax.xlane.f32.xlu0 %v2476
    %v2478 = vpop.xlane.xlu0 %2477
    %v2479 = vsel %vm1381, %v2472, -inf
    %2480 = vmax.xlane.f32.xlu0 %v2479
    %v2481 = vpop.xlane.xlu0 %2480
    %v2482 = vsel %vm1381, %v2473, -inf
    %2483 = vmax.xlane.f32.xlu0 %v2482
    %v2484 = vpop.xlane.xlu0 %2483
    %v2485 = vsel %vm1381, %v2474, -inf
    %2486 = vmax.xlane.f32.xlu0 %v2485
    %v2487 = vpop.xlane.xlu0 %2486
    %v2488 = vsel %vm1394, %v2475, -inf
    %2489 = vmax.xlane.f32.xlu0 %v2488
    %v2490 = vpop.xlane.xlu0 %2489
    %v2491 = vsub.f32 %v2471, %v2478
    %v2492 = vsub.f32 %v2472, %v2481
    %v2493 = vsub.f32 %v2473, %v2484
    %v2494 = vsub.f32 %v2474, %v2487
    %v2495 = vsub.f32 %v2475, %v2490
    %v2496 = vmul.f32 %v2491, 1.442695
    %v2497 = vpow.pop %v2496
    %v2498 = vmul.f32 %v2492, 1.442695
    %v2499 = vpow.pop %v2498
    %v2500 = vmul.f32 %v2493, 1.442695
    %v2501 = vpow.pop %v2500
    %v2502 = vmul.f32 %v2494, 1.442695
    %v2503 = vpow.pop %v2502
    %v2504 = vmul.f32 %v2495, 1.442695
    %v2505 = vpow.pop %v2504
    %v2506 = vsel %vm1381, %v2497, 0.0
    %2507 = vadd.xlane.f32.xlu0 %v2506
    %v2508 = vpop.xlane.xlu0 %2507
    %v2509 = vsel %vm1381, %v2499, 0.0
    %2510 = vadd.xlane.f32.xlu0 %v2509
    %v2511 = vpop.xlane.xlu0 %2510
    %v2512 = vsel %vm1381, %v2501, 0.0
    %2513 = vadd.xlane.f32.xlu0 %v2512
    %v2514 = vpop.xlane.xlu0 %2513
    %v2515 = vsel %vm1381, %v2503, 0.0
    %2516 = vadd.xlane.f32.xlu0 %v2515
    %v2517 = vpop.xlane.xlu0 %2516
    %v2518 = vsel %vm1394, %v2505, 0.0
    %2519 = vadd.xlane.f32.xlu0 %v2518
    %v2520 = vpop.xlane.xlu0 %2519
    %v2521 = vrcp.pop %v2508
    %v2522 = vrcp.pop %v2511
    %v2523 = vrcp.pop %v2514
    %v2524 = vrcp.pop %v2517
    %v2525 = vrcp.pop %v2520
    %v2526 = vmul.f32 %v2497, %v2521
    %v2527 = vmul.f32 %v2499, %v2522
    %v2528 = vmul.f32 %v2501, %v2523
    %v2529 = vmul.f32 %v2503, %v2524
    %v2530 = vmul.f32 %v2505, %v2525
    %v2531 = vpack.c.bf16 %v2527, %v2526
    %v2532 = vpack.c.bf16 %v2529, %v2528
    %v2533 = vpack.c.bf16 %v2530, %v2530
    %2534 = vrot.lane.b32.xlu0 %v2376, 64
    %v2535 = vpop.permute.xlu0 %2534
    %2536 = vrot.lane.b32.xlu0 %v2377, 64
    %v2537 = vpop.permute.xlu0 %2536
    %2538 = vrot.lane.b32.xlu0 %v2378, 64
    %v2539 = vpop.permute.xlu0 %2538
    %v2543 = vsel %vm1381, %v2531, 0
    %v2546 = vsel %vm1381, %v2532, 0
    %v2549 = vsel %vm1381, %v2533, 0
    %v2552 = vsel %vm1458, %v2539, 0
    %2554 = vmatprep.subr.bf16.mxu0 0
    %2555 = vmatpush1.bf16.msra.mxu0 0
    %2556 = vmatprep.subr.bf16.mxu0 0
    %2557 = vmatpush1.bf16.msra.mxu0 0
    %2558 = vmatprep.subr.bf16.mxu0 0
    %2559 = vmatpush1.bf16.msra.mxu0 0
    %2560 = vmatprep.subr.bf16.mxu0 0
    %2561 = vmatpush1.bf16.msra.mxu0 0
    %2562 = vmatprep.subr.bf16.mxu0 0
    %2563 = vmatpush1.bf16.msra.mxu0 0
    %2564 = vmatprep.subr.bf16.mxu0 0
    %2565 = vmatpush1.bf16.msra.mxu0 %v2552
    %2566 = vmatprep.subr.bf16.mxu0 0
    %2567 = vmatpush1.bf16.msra.mxu0 %v2537
    %2568 = vmatprep.subr.bf16.mxu0 0
    %2569 = vmatpush1.bf16.msra.mxu0 %v2535
    %2570 = vmatprep.subr.bf16.mxu0 0
    %2571 = vmatpush2.bf16.msra.mxu0 0
    %2572 = vmatprep.subr.bf16.mxu0 0
    %2573 = vmatpush2.bf16.msra.mxu0 0
    %2574 = vmatprep.subr.bf16.mxu0 0
    %2575 = vmatpush2.bf16.msra.mxu0 0
    %2576 = vmatprep.subr.bf16.mxu0 0
    %2577 = vmatpush2.bf16.msra.mxu0 0
    %2578 = vmatprep.subr.bf16.mxu0 0
    %2579 = vmatpush2.bf16.msra.mxu0 0
    %2580 = vmatprep.subr.bf16.mxu0 0
    %2581 = vmatpush2.bf16.msra.mxu0 0
    %2582 = vmatprep.subr.bf16.mxu0 0
    %2583 = vmatpush2.bf16.msra.mxu0 0
    %2584 = vmatprep.subr.bf16.mxu0 0
    %2585 = vmatpush2.bf16.msra.mxu0 0
    %2586 = vmatprep.mubr.bf16.mxu0 0
    %2587 = vmatmul.mubr.bf16.gmra.mxu0 %v2543
    %v2588 = vpop.f32.mrf.mxu0
    %v2589 = vadd.f32 0.0, %v2588
    %v2590 = vpop.f32.mrf.mxu0
    %v2591 = vpop.f32.mrf.mxu0
    %v2592 = vadd.f32 0.0, %v2591
    %v2593 = vpop.f32.mrf.mxu0
    %2594 = vmatprep.mubr.bf16.mxu0 0
    %2595 = vmatmul.mubr.bf16.gmra.mxu0 %v2546
    %v2596 = vpop.f32.mrf.mxu0
    %v2597 = vadd.f32 0.0, %v2596
    %v2598 = vpop.f32.mrf.mxu0
    %v2599 = vpop.f32.mrf.mxu0
    %v2600 = vadd.f32 0.0, %v2599
    %v2601 = vpop.f32.mrf.mxu0
    %2602 = vmatprep.mubr.bf16.mxu0 0
    %2603 = vmatmul.mubr.bf16.gmra.mxu0 %v2549
    %v2604 = vpop.f32.mrf.mxu0
    %v2605 = vadd.f32 0.0, %v2604
    %v2606 = vpop.f32.mrf.mxu0
    %v2607 = vpop.f32.mrf.mxu0
    %v2608 = vpop.f32.mrf.mxu0
    %2609 = vdwg.mxu0
    %v2610 = vpack.c.bf16 %v2592, %v2589
    %v2611 = vpack.c.bf16 %v2600, %v2597
    %v2612 = vpack.c.bf16 %v2605, %v2605
    %2613 = vrot.lane.b32.xlu0 %v2376, 112
    %v2614 = vpop.permute.xlu0 %2613
    %2615 = vrot.lane.b32.xlu0 %v2377, 112
    %v2616 = vpop.permute.xlu0 %2615
    %2617 = vrot.lane.b32.xlu0 %v2378, 112
    %v2618 = vpop.permute.xlu0 %2617
    %2619 = vrot.lane.b32.xlu0 %v2376, 80
    %v2620 = vpop.permute.xlu0 %2619
    %2621 = vrot.lane.b32.xlu0 %v2377, 80
    %v2622 = vpop.permute.xlu0 %2621
    %2623 = vrot.lane.b32.xlu0 %v2378, 80
    %v2624 = vpop.permute.xlu0 %2623
    %v2626 = vsel %vm1296, %v2614, 0
    %v2629 = vsel %vm1296, %v2616, 0
    %v2632 = vsel %vm1296, %v2618, 0
    %v2635 = vsel %vm1296, %v2620, 0
    %v2638 = vsel %vm1296, %v2622, 0
    %v2641 = vsel %vm1296, %v2624, 0
    %2643 = vmatprep.subr.bf16.mxu0 0
    %2644 = vmatpush1.bf16.xpose.msra.mxu0 0
    %2645 = vmatprep.subr.bf16.mxu0 0
    %2646 = vmatpush1.bf16.xpose.msra.mxu0 0
    %2647 = vmatprep.subr.bf16.mxu0 0
    %2648 = vmatpush1.bf16.xpose.msra.mxu0 0
    %2649 = vmatprep.subr.bf16.mxu0 0
    %2650 = vmatpush1.bf16.xpose.msra.mxu0 0
    %2651 = vmatprep.subr.bf16.mxu0 0
    %2652 = vmatpush1.bf16.xpose.msra.mxu0 0
    %2653 = vmatprep.subr.bf16.mxu0 0
    %2654 = vmatpush1.bf16.xpose.msra.mxu0 %v2641
    %2655 = vmatprep.subr.bf16.mxu0 0
    %2656 = vmatpush1.bf16.xpose.msra.mxu0 %v2638
    %2657 = vmatprep.subr.bf16.mxu0 0
    %2658 = vmatpush1.bf16.xpose.msra.mxu0 %v2635
    %2659 = vmatprep.subr.bf16.mxu0 0
    %2660 = vmatpush2.bf16.xpose.msra.mxu0 0
    %2661 = vmatprep.subr.bf16.mxu0 0
    %2662 = vmatpush2.bf16.xpose.msra.mxu0 0
    %2663 = vmatprep.subr.bf16.mxu0 0
    %2664 = vmatpush2.bf16.xpose.msra.mxu0 0
    %2665 = vmatprep.subr.bf16.mxu0 0
    %2666 = vmatpush2.bf16.xpose.msra.mxu0 0
    %2667 = vmatprep.subr.bf16.mxu0 0
    %2668 = vmatpush2.bf16.xpose.msra.mxu0 0
    %2669 = vmatprep.subr.bf16.mxu0 0
    %2670 = vmatpush2.bf16.xpose.msra.mxu0 0
    %2671 = vmatprep.subr.bf16.mxu0 0
    %2672 = vmatpush2.bf16.xpose.msra.mxu0 0
    %2673 = vmatprep.subr.bf16.mxu0 0
    %2674 = vmatpush2.bf16.xpose.msra.mxu0 0
    %2675 = vmatprep.mubr.bf16.mxu0 0
    %2676 = vmatmul.mubr.bf16.gmra.mxu0 %v2626
    %v2677 = vpop.f32.mrf.mxu0
    %v2678 = vadd.f32 0.0, %v2677
    %v2679 = vpop.f32.mrf.mxu0
    %v2680 = vpop.f32.mrf.mxu0
    %v2681 = vadd.f32 0.0, %v2680
    %v2682 = vpop.f32.mrf.mxu0
    %2683 = vmatprep.mubr.bf16.mxu0 0
    %2684 = vmatmul.mubr.bf16.gmra.mxu0 %v2629
    %v2685 = vpop.f32.mrf.mxu0
    %v2686 = vadd.f32 0.0, %v2685
    %v2687 = vpop.f32.mrf.mxu0
    %v2688 = vpop.f32.mrf.mxu0
    %v2689 = vadd.f32 0.0, %v2688
    %v2690 = vpop.f32.mrf.mxu0
    %2691 = vmatprep.mubr.bf16.mxu0 0
    %2692 = vmatmul.mubr.bf16.gmra.mxu0 %v2632
    %v2693 = vpop.f32.mrf.mxu0
    %v2694 = vadd.f32 0.0, %v2693
    %v2695 = vpop.f32.mrf.mxu0
    %v2696 = vpop.f32.mrf.mxu0
    %v2697 = vpop.f32.mrf.mxu0
    %2698 = vdwg.mxu0
    %v2699 = vmul.f32 %v2678, 0.25
    %v2700 = vmul.f32 %v2681, 0.25
    %v2701 = vmul.f32 %v2686, 0.25
    %v2702 = vmul.f32 %v2689, 0.25
    %v2703 = vmul.f32 %v2694, 0.25
    %v2704 = vadd.f32 %v2699, %v1185
    %v2705 = vadd.f32 %v2700, %v1186
    %v2706 = vadd.f32 %v2701, %v1187
    %v2707 = vadd.f32 %v2702, %v1188
    %v2708 = vadd.f32 %v2703, %v1189
    %v2709 = vsel %vm1381, %v2704, -inf
    %2710 = vmax.xlane.f32.xlu0 %v2709
    %v2711 = vpop.xlane.xlu0 %2710
    %v2712 = vsel %vm1381, %v2705, -inf
    %2713 = vmax.xlane.f32.xlu0 %v2712
    %v2714 = vpop.xlane.xlu0 %2713
    %v2715 = vsel %vm1381, %v2706, -inf
    %2716 = vmax.xlane.f32.xlu0 %v2715
    %v2717 = vpop.xlane.xlu0 %2716
    %v2718 = vsel %vm1381, %v2707, -inf
    %2719 = vmax.xlane.f32.xlu0 %v2718
    %v2720 = vpop.xlane.xlu0 %2719
    %v2721 = vsel %vm1394, %v2708, -inf
    %2722 = vmax.xlane.f32.xlu0 %v2721
    %v2723 = vpop.xlane.xlu0 %2722
    %v2724 = vsub.f32 %v2704, %v2711
    %v2725 = vsub.f32 %v2705, %v2714
    %v2726 = vsub.f32 %v2706, %v2717
    %v2727 = vsub.f32 %v2707, %v2720
    %v2728 = vsub.f32 %v2708, %v2723
    %v2729 = vmul.f32 %v2724, 1.442695
    %v2730 = vpow.pop %v2729
    %v2731 = vmul.f32 %v2725, 1.442695
    %v2732 = vpow.pop %v2731
    %v2733 = vmul.f32 %v2726, 1.442695
    %v2734 = vpow.pop %v2733
    %v2735 = vmul.f32 %v2727, 1.442695
    %v2736 = vpow.pop %v2735
    %v2737 = vmul.f32 %v2728, 1.442695
    %v2738 = vpow.pop %v2737
    %v2739 = vsel %vm1381, %v2730, 0.0
    %2740 = vadd.xlane.f32.xlu0 %v2739
    %v2741 = vpop.xlane.xlu0 %2740
    %v2742 = vsel %vm1381, %v2732, 0.0
    %2743 = vadd.xlane.f32.xlu0 %v2742
    %v2744 = vpop.xlane.xlu0 %2743
    %v2745 = vsel %vm1381, %v2734, 0.0
    %2746 = vadd.xlane.f32.xlu0 %v2745
    %v2747 = vpop.xlane.xlu0 %2746
    %v2748 = vsel %vm1381, %v2736, 0.0
    %2749 = vadd.xlane.f32.xlu0 %v2748
    %v2750 = vpop.xlane.xlu0 %2749
    %v2751 = vsel %vm1394, %v2738, 0.0
    %2752 = vadd.xlane.f32.xlu0 %v2751
    %v2753 = vpop.xlane.xlu0 %2752
    %v2754 = vrcp.pop %v2741
    %v2755 = vrcp.pop %v2744
    %v2756 = vrcp.pop %v2747
    %v2757 = vrcp.pop %v2750
    %v2758 = vrcp.pop %v2753
    %v2759 = vmul.f32 %v2730, %v2754
    %v2760 = vmul.f32 %v2732, %v2755
    %v2761 = vmul.f32 %v2734, %v2756
    %v2762 = vmul.f32 %v2736, %v2757
    %v2763 = vmul.f32 %v2738, %v2758
    %v2764 = vpack.c.bf16 %v2760, %v2759
    %v2765 = vpack.c.bf16 %v2762, %v2761
    %v2766 = vpack.c.bf16 %v2763, %v2763
    %2767 = vrot.lane.b32.xlu0 %v2376, 48
    %v2768 = vpop.permute.xlu0 %2767
    %2769 = vrot.lane.b32.xlu0 %v2377, 48
    %v2770 = vpop.permute.xlu0 %2769
    %2771 = vrot.lane.b32.xlu0 %v2378, 48
    %v2772 = vpop.permute.xlu0 %2771
    %v2776 = vsel %vm1381, %v2764, 0
    %v2779 = vsel %vm1381, %v2765, 0
    %v2782 = vsel %vm1381, %v2766, 0
    %v2785 = vsel %vm1458, %v2772, 0
    %2787 = vmatprep.subr.bf16.mxu0 0
    %2788 = vmatpush1.bf16.msra.mxu0 0
    %2789 = vmatprep.subr.bf16.mxu0 0
    %2790 = vmatpush1.bf16.msra.mxu0 0
    %2791 = vmatprep.subr.bf16.mxu0 0
    %2792 = vmatpush1.bf16.msra.mxu0 0
    %2793 = vmatprep.subr.bf16.mxu0 0
    %2794 = vmatpush1.bf16.msra.mxu0 0
    %2795 = vmatprep.subr.bf16.mxu0 0
    %2796 = vmatpush1.bf16.msra.mxu0 0
    %2797 = vmatprep.subr.bf16.mxu0 0
    %2798 = vmatpush1.bf16.msra.mxu0 %v2785
    %2799 = vmatprep.subr.bf16.mxu0 0
    %2800 = vmatpush1.bf16.msra.mxu0 %v2770
    %2801 = vmatprep.subr.bf16.mxu0 0
    %2802 = vmatpush1.bf16.msra.mxu0 %v2768
    %2803 = vmatprep.subr.bf16.mxu0 0
    %2804 = vmatpush2.bf16.msra.mxu0 0
    %2805 = vmatprep.subr.bf16.mxu0 0
    %2806 = vmatpush2.bf16.msra.mxu0 0
    %2807 = vmatprep.subr.bf16.mxu0 0
    %2808 = vmatpush2.bf16.msra.mxu0 0
    %2809 = vmatprep.subr.bf16.mxu0 0
    %2810 = vmatpush2.bf16.msra.mxu0 0
    %2811 = vmatprep.subr.bf16.mxu0 0
    %2812 = vmatpush2.bf16.msra.mxu0 0
    %2813 = vmatprep.subr.bf16.mxu0 0
    %2814 = vmatpush2.bf16.msra.mxu0 0
    %2815 = vmatprep.subr.bf16.mxu0 0
    %2816 = vmatpush2.bf16.msra.mxu0 0
    %2817 = vmatprep.subr.bf16.mxu0 0
    %2818 = vmatpush2.bf16.msra.mxu0 0
    %2819 = vmatprep.mubr.bf16.mxu0 0
    %2820 = vmatmul.mubr.bf16.gmra.mxu0 %v2776
    %v2821 = vpop.f32.mrf.mxu0
    %v2822 = vadd.f32 0.0, %v2821
    %v2823 = vpop.f32.mrf.mxu0
    %v2824 = vpop.f32.mrf.mxu0
    %v2825 = vadd.f32 0.0, %v2824
    %v2826 = vpop.f32.mrf.mxu0
    %2827 = vmatprep.mubr.bf16.mxu0 0
    %2828 = vmatmul.mubr.bf16.gmra.mxu0 %v2779
    %v2829 = vpop.f32.mrf.mxu0
    %v2830 = vadd.f32 0.0, %v2829
    %v2831 = vpop.f32.mrf.mxu0
    %v2832 = vpop.f32.mrf.mxu0
    %v2833 = vadd.f32 0.0, %v2832
    %v2834 = vpop.f32.mrf.mxu0
    %2835 = vmatprep.mubr.bf16.mxu0 0
    %2836 = vmatmul.mubr.bf16.gmra.mxu0 %v2782
    %v2837 = vpop.f32.mrf.mxu0
    %v2838 = vadd.f32 0.0, %v2837
    %v2839 = vpop.f32.mrf.mxu0
    %v2840 = vpop.f32.mrf.mxu0
    %v2841 = vpop.f32.mrf.mxu0
    %2842 = vdwg.mxu0
    %v2843 = vpack.c.bf16 %v2825, %v2822
    %v2844 = vpack.c.bf16 %v2833, %v2830
    %v2845 = vpack.c.bf16 %v2838, %v2838
    %v2848 = vunpack.c.l.b16 %v2381
    %v2849 = vunpack.c.l.b16 %v2382
    %v2850 = vpack.c.b16 %v2849, %v2848
    %v2853 = vsel %vm1296, %v2843, 0
    %v2856 = vsel %vm1296, %v2844, 0
    %v2859 = vsel %vm1296, %v2845, 0
    %2861 = vmatprep.subr.bf16.mxu0 0
    %2862 = vmatpush1.bf16.msra.mxu0 0
    %2863 = vmatprep.subr.bf16.mxu0 0
    %2864 = vmatpush1.bf16.msra.mxu0 0
    %2865 = vmatprep.subr.bf16.mxu0 0
    %2866 = vmatpush1.bf16.msra.mxu0 0
    %2867 = vmatprep.subr.bf16.mxu0 0
    %2868 = vmatpush1.bf16.msra.mxu0 0
    %2869 = vmatprep.subr.bf16.mxu0 0
    %2870 = vmatpush1.bf16.msra.mxu0 0
    %2871 = vmatprep.subr.bf16.mxu0 0
    %2872 = vmatpush1.bf16.msra.mxu0 0
    %2873 = vmatprep.subr.bf16.mxu0 0
    %2874 = vmatpush1.bf16.msra.mxu0 0
    %2875 = vmatprep.subr.bf16.mxu0 0
    %2876 = vmatpush1.bf16.msra.mxu0 %v2850
    %2877 = vmatprep.subr.bf16.mxu0 0
    %2878 = vmatpush2.bf16.msra.mxu0 0
    %2879 = vmatprep.subr.bf16.mxu0 0
    %2880 = vmatpush2.bf16.msra.mxu0 0
    %2881 = vmatprep.subr.bf16.mxu0 0
    %2882 = vmatpush2.bf16.msra.mxu0 0
    %2883 = vmatprep.subr.bf16.mxu0 0
    %2884 = vmatpush2.bf16.msra.mxu0 0
    %2885 = vmatprep.subr.bf16.mxu0 0
    %2886 = vmatpush2.bf16.msra.mxu0 0
    %2887 = vmatprep.subr.bf16.mxu0 0
    %2888 = vmatpush2.bf16.msra.mxu0 0
    %2889 = vmatprep.subr.bf16.mxu0 0
    %2890 = vmatpush2.bf16.msra.mxu0 0
    %2891 = vmatprep.subr.bf16.mxu0 0
    %2892 = vmatpush2.bf16.msra.mxu0 0
    %2893 = vmatprep.mubr.bf16.mxu0 0
    %2894 = vmatmul.mubr.bf16.gmra.mxu0 %v2853
    %v2895 = vpop.f32.mrf.mxu0
    %v2896 = vadd.f32 0.0, %v2895
    %v2897 = vpop.f32.mrf.mxu0
    %v2898 = vpop.f32.mrf.mxu0
    %v2899 = vadd.f32 0.0, %v2898
    %v2900 = vpop.f32.mrf.mxu0
    %2901 = vmatprep.mubr.bf16.mxu0 0
    %2902 = vmatmul.mubr.bf16.gmra.mxu0 %v2856
    %v2903 = vpop.f32.mrf.mxu0
    %v2904 = vadd.f32 0.0, %v2903
    %v2905 = vpop.f32.mrf.mxu0
    %v2906 = vpop.f32.mrf.mxu0
    %v2907 = vadd.f32 0.0, %v2906
    %v2908 = vpop.f32.mrf.mxu0
    %2909 = vmatprep.mubr.bf16.mxu0 0
    %2910 = vmatmul.mubr.bf16.gmra.mxu0 %v2859
    %v2911 = vpop.f32.mrf.mxu0
    %v2912 = vadd.f32 0.0, %v2911
    %v2913 = vpop.f32.mrf.mxu0
    %v2914 = vpop.f32.mrf.mxu0
    %v2915 = vpop.f32.mrf.mxu0
    %2916 = vdwg.mxu0
    %v2919 = vunpack.c.l.b16 %v2379
    %v2920 = vunpack.c.l.b16 %v2380
    %v2921 = vpack.c.b16 %v2920, %v2919
    %v2924 = vsel %vm1296, %v2610, 0
    %v2927 = vsel %vm1296, %v2611, 0
    %v2930 = vsel %vm1296, %v2612, 0
    %2932 = vmatprep.subr.bf16.mxu0 0
    %2933 = vmatpush1.bf16.msra.mxu0 0
    %2934 = vmatprep.subr.bf16.mxu0 0
    %2935 = vmatpush1.bf16.msra.mxu0 0
    %2936 = vmatprep.subr.bf16.mxu0 0
    %2937 = vmatpush1.bf16.msra.mxu0 0
    %2938 = vmatprep.subr.bf16.mxu0 0
    %2939 = vmatpush1.bf16.msra.mxu0 0
    %2940 = vmatprep.subr.bf16.mxu0 0
    %2941 = vmatpush1.bf16.msra.mxu0 0
    %2942 = vmatprep.subr.bf16.mxu0 0
    %2943 = vmatpush1.bf16.msra.mxu0 0
    %2944 = vmatprep.subr.bf16.mxu0 0
    %2945 = vmatpush1.bf16.msra.mxu0 0
    %2946 = vmatprep.subr.bf16.mxu0 0
    %2947 = vmatpush1.bf16.msra.mxu0 %v2921
    %2948 = vmatprep.subr.bf16.mxu0 0
    %2949 = vmatpush2.bf16.msra.mxu0 0
    %2950 = vmatprep.subr.bf16.mxu0 0
    %2951 = vmatpush2.bf16.msra.mxu0 0
    %2952 = vmatprep.subr.bf16.mxu0 0
    %2953 = vmatpush2.bf16.msra.mxu0 0
    %2954 = vmatprep.subr.bf16.mxu0 0
    %2955 = vmatpush2.bf16.msra.mxu0 0
    %2956 = vmatprep.subr.bf16.mxu0 0
    %2957 = vmatpush2.bf16.msra.mxu0 0
    %2958 = vmatprep.subr.bf16.mxu0 0
    %2959 = vmatpush2.bf16.msra.mxu0 0
    %2960 = vmatprep.subr.bf16.mxu0 0
    %2961 = vmatpush2.bf16.msra.mxu0 0
    %2962 = vmatprep.subr.bf16.mxu0 0
    %2963 = vmatpush2.bf16.msra.mxu0 0
    %2964 = vmatprep.mubr.bf16.mxu0 0
    %2965 = vmatmul.mubr.bf16.gmra.mxu0 %v2924
    %v2966 = vpop.f32.mrf.mxu0
    %v2967 = vadd.f32 %v2896, %v2966
    %v2968 = vpop.f32.mrf.mxu0
    %v2969 = vpop.f32.mrf.mxu0
    %v2970 = vadd.f32 %v2899, %v2969
    %v2971 = vpop.f32.mrf.mxu0
    %2972 = vmatprep.mubr.bf16.mxu0 0
    %2973 = vmatmul.mubr.bf16.gmra.mxu0 %v2927
    %v2974 = vpop.f32.mrf.mxu0
    %v2975 = vadd.f32 %v2904, %v2974
    %v2976 = vpop.f32.mrf.mxu0
    %v2977 = vpop.f32.mrf.mxu0
    %v2978 = vadd.f32 %v2907, %v2977
    %v2979 = vpop.f32.mrf.mxu0
    %2980 = vmatprep.mubr.bf16.mxu0 0
    %2981 = vmatmul.mubr.bf16.gmra.mxu0 %v2930
    %v2982 = vpop.f32.mrf.mxu0
    %v2983 = vadd.f32 %v2912, %v2982
    %v2984 = vpop.f32.mrf.mxu0
    %v2985 = vpop.f32.mrf.mxu0
    %v2986 = vpop.f32.mrf.mxu0
    %2987 = vdwg.mxu0
    %v2988 = vadd.f32 %v2281, %v2967
    %v2989 = vadd.f32 %v2282, %v2970
    %v2990 = vadd.f32 %v2283, %v2975
    %v2991 = vadd.f32 %v2284, %v2978
    %v2992 = vadd.f32 %v2285, %v2983
    %v2993 = vlaneseq
    %v2994 = vshrl.u32 %v2993, 7
    %v2995 = vsub.s32 5, %v2994
    %v2996 = vrot.slane %v2294, %v2995
    %v2997 = vadd.f32 %v2988, %v2996
    %v2998 = vadd.f32 %v2989, %v2996
    %v2999 = vadd.f32 %v2990, %v2996
    %v3000 = vadd.f32 %v2991, %v2996
    %v3001 = vadd.f32 %v2992, %v2996
    %v3002 = vld [vmem:[%s3 + $0x100] sm:$0x8]
    %v3003 = vunpack.c.l.bf16 %v3002
    %v3004 = vsel %vm1168, %v2997, 0.0
    %3005 = vadd.xlane.f32.xlu0 %v3004
    %v3006 = vpop.xlane.xlu0 %3005
    %v3007 = vsel %vm1168, %v2998, 0.0
    %3008 = vadd.xlane.f32.xlu0 %v3007
    %v3009 = vpop.xlane.xlu0 %3008
    %v3010 = vsel %vm1168, %v2999, 0.0
    %3011 = vadd.xlane.f32.xlu0 %v3010
    %v3012 = vpop.xlane.xlu0 %3011
    %v3013 = vsel %vm1168, %v3000, 0.0
    %3014 = vadd.xlane.f32.xlu0 %v3013
    %v3015 = vpop.xlane.xlu0 %3014
    %v3016 = vsel %vm1173, %v3001, 0.0
    %3017 = vadd.xlane.f32.xlu0 %v3016
    %v3018 = vpop.xlane.xlu0 %3017
    %v3019 = vmul.f32 %v3006, %v1927
    %v3020 = vmul.f32 %v3009, %v1927
    %v3021 = vmul.f32 %v3012, %v1927
    %v3022 = vmul.f32 %v3015, %v1927
    %v3023 = vmul.f32 %v3018, %v1927
    %v3024 = vsub.f32 %v2997, %v3019
    %v3025 = vsub.f32 %v2998, %v3020
    %v3026 = vsub.f32 %v2999, %v3021
    %v3027 = vsub.f32 %v3000, %v3022
    %v3028 = vsub.f32 %v3001, %v3023
    %v3029 = vmul.f32 %v3024, %v3024
    %v3030 = vmul.f32 %v3025, %v3025
    %v3031 = vmul.f32 %v3026, %v3026
    %v3032 = vmul.f32 %v3027, %v3027
    %v3033 = vmul.f32 %v3028, %v3028
    %v3034 = vsel %vm1168, %v3029, 0.0
    %3035 = vadd.xlane.f32.xlu0 %v3034
    %v3036 = vpop.xlane.xlu0 %3035
    %v3037 = vsel %vm1168, %v3030, 0.0
    %3038 = vadd.xlane.f32.xlu0 %v3037
    %v3039 = vpop.xlane.xlu0 %3038
    %v3040 = vsel %vm1168, %v3031, 0.0
    %3041 = vadd.xlane.f32.xlu0 %v3040
    %v3042 = vpop.xlane.xlu0 %3041
    %v3043 = vsel %vm1168, %v3032, 0.0
    %3044 = vadd.xlane.f32.xlu0 %v3043
    %v3045 = vpop.xlane.xlu0 %3044
    %v3046 = vsel %vm1173, %v3033, 0.0
    %3047 = vadd.xlane.f32.xlu0 %v3046
    %v3048 = vpop.xlane.xlu0 %3047
    %v3049 = vmul.f32 %v3036, %v1927
    %v3050 = vmul.f32 %v3039, %v1927
    %v3051 = vmul.f32 %v3042, %v1927
    %v3052 = vmul.f32 %v3045, %v1927
    %v3053 = vmul.f32 %v3048, %v1927
    %v3054 = vadd.f32 %v3049, 1e-05
    %v3055 = vadd.f32 %v3050, 1e-05
    %v3056 = vadd.f32 %v3051, 1e-05
    %v3057 = vadd.f32 %v3052, 1e-05
    %v3058 = vadd.f32 %v3053, 1e-05
    %v3059 = vrsqrt.pop %v3054
    %v3060 = vrsqrt.pop %v3055
    %v3061 = vrsqrt.pop %v3056
    %v3062 = vrsqrt.pop %v3057
    %v3063 = vrsqrt.pop %v3058
    %v3064 = vmul.f32 %v3024, %v3059
    %v3065 = vmul.f32 %v3025, %v3060
    %v3066 = vmul.f32 %v3026, %v3061
    %v3067 = vmul.f32 %v3027, %v3062
    %v3068 = vmul.f32 %v3028, %v3063
    %v3069 = vlaneseq
    %v3070 = vshrl.u32 %v3069, 7
    %v3071 = vsub.s32 6, %v3070
    %v3072 = vrot.slane %v3003, %v3071
    %v3073 = vmul.f32 %v3064, %v3072
    %v3074 = vmul.f32 %v3065, %v3072
    %v3075 = vmul.f32 %v3066, %v3072
    %v3076 = vmul.f32 %v3067, %v3072
    %v3077 = vmul.f32 %v3068, %v3072
    %v3078 = vlaneseq
    %v3079 = vshrl.u32 %v3078, 7
    %v3080 = vsub.s32 7, %v3079
    %v3081 = vrot.slane %v3003, %v3080
    %v3082 = vadd.f32 %v3073, %v3081
    %v3083 = vadd.f32 %v3074, %v3081
    %v3084 = vadd.f32 %v3075, %v3081
    %v3085 = vadd.f32 %v3076, %v3081
    %v3086 = vadd.f32 %v3077, %v3081
    %v3087 = vpack.c.bf16 %v3083, %v3082
    %v3088 = vpack.c.bf16 %v3085, %v3084
    %v3089 = vpack.c.bf16 %v3086, %v3086
    %v3090 = vld [vmem:[%s3 + $0x74] sm:$0xf]
    %v3091 = vld [vmem:[%s3 + $0x78] sm:$0xf]
    %v3092 = vld [vmem:[%s3 + $0x7c] sm:$0xf]
    %v3093 = vld [vmem:[%s3 + $0x80] sm:$0xf]
    %v3094 = vld [vmem:[%s3 + $0x104] sm:$0x1]
    %v3095 = vunpack.c.l.bf16 %v3094
    %v3096 = vlaneseq
    %v3097 = vshrl.u32 %v3096, 7
    %v3098 = vsub.s32 0, %v3097
    %v3099 = vrot.slane %v3095, %v3098
    %v3104 = vunpack.c.l.b16 %v3090
    %v3105 = vunpack.c.l.b16 %v3091
    %v3106 = vunpack.c.l.b16 %v3092
    %v3107 = vunpack.c.l.b16 %v3093
    %v3108 = vpack.c.b16 %v3105, %v3104
    %v3109 = vpack.c.b16 %v3107, %v3106
    %v3113 = vsel %vm1168, %v3087, 0
    %v3116 = vsel %vm1168, %v3088, 0
    %v3119 = vsel %vm1168, %v3089, 0
    %3121 = vmatprep.subr.bf16.mxu0 0
    %3122 = vmatpush1.bf16.msra.mxu0 0
    %3123 = vmatprep.subr.bf16.mxu0 0
    %3124 = vmatpush1.bf16.msra.mxu0 0
    %3125 = vmatprep.subr.bf16.mxu0 0
    %3126 = vmatpush1.bf16.msra.mxu0 0
    %3127 = vmatprep.subr.bf16.mxu0 0
    %3128 = vmatpush1.bf16.msra.mxu0 0
    %3129 = vmatprep.subr.bf16.mxu0 0
    %3130 = vmatpush1.bf16.msra.mxu0 0
    %3131 = vmatprep.subr.bf16.mxu0 0
    %3132 = vmatpush1.bf16.msra.mxu0 0
    %3133 = vmatprep.subr.bf16.mxu0 0
    %3134 = vmatpush1.bf16.msra.mxu0 %v3109
    %3135 = vmatprep.subr.bf16.mxu0 0
    %3136 = vmatpush1.bf16.msra.mxu0 %v3108
    %3137 = vmatprep.subr.bf16.mxu0 0
    %3138 = vmatpush2.bf16.msra.mxu0 0
    %3139 = vmatprep.subr.bf16.mxu0 0
    %3140 = vmatpush2.bf16.msra.mxu0 0
    %3141 = vmatprep.subr.bf16.mxu0 0
    %3142 = vmatpush2.bf16.msra.mxu0 0
    %3143 = vmatprep.subr.bf16.mxu0 0
    %3144 = vmatpush2.bf16.msra.mxu0 0
    %3145 = vmatprep.subr.bf16.mxu0 0
    %3146 = vmatpush2.bf16.msra.mxu0 0
    %3147 = vmatprep.subr.bf16.mxu0 0
    %3148 = vmatpush2.bf16.msra.mxu0 0
    %3149 = vmatprep.subr.bf16.mxu0 0
    %3150 = vmatpush2.bf16.msra.mxu0 0
    %3151 = vmatprep.subr.bf16.mxu0 0
    %3152 = vmatpush2.bf16.msra.mxu0 0
    %3153 = vmatprep.mubr.bf16.mxu0 0
    %3154 = vmatmul.mubr.bf16.gmra.mxu0 %v3113
    %v3155 = vpop.f32.mrf.mxu0
    %v3156 = vadd.f32 %v3099, %v3155
    %v3157 = vpop.f32.mrf.mxu0
    %v3158 = vpop.f32.mrf.mxu0
    %v3159 = vadd.f32 %v3099, %v3158
    %v3160 = vpop.f32.mrf.mxu0
    %3161 = vmatprep.mubr.bf16.mxu0 0
    %3162 = vmatmul.mubr.bf16.gmra.mxu0 %v3116
    %v3163 = vpop.f32.mrf.mxu0
    %v3164 = vadd.f32 %v3099, %v3163
    %v3165 = vpop.f32.mrf.mxu0
    %v3166 = vpop.f32.mrf.mxu0
    %v3167 = vadd.f32 %v3099, %v3166
    %v3168 = vpop.f32.mrf.mxu0
    %3169 = vmatprep.mubr.bf16.mxu0 0
    %3170 = vmatmul.mubr.bf16.gmra.mxu0 %v3119
    %v3171 = vpop.f32.mrf.mxu0
    %v3172 = vadd.f32 %v3099, %v3171
    %v3173 = vpop.f32.mrf.mxu0
    %v3174 = vpop.f32.mrf.mxu0
    %v3175 = vpop.f32.mrf.mxu0
    %3176 = vdwg.mxu0
    %v3177 = vmax.f32 %v3156, 0.0
    %v3178 = vmax.f32 %v3159, 0.0
    %v3179 = vmax.f32 %v3164, 0.0
    %v3180 = vmax.f32 %v3167, 0.0
    %v3181 = vmax.f32 %v3172, 0.0
    %v3182 = vpack.c.bf16 %v3178, %v3177
    %v3183 = vpack.c.bf16 %v3180, %v3179
    %v3184 = vpack.c.bf16 %v3181, %v3181
    %v3185 = vld [vmem:[%s3 + $0x84] sm:$0xf]
    %v3186 = vld [vmem:[%s3 + $0x88] sm:$0xf]
    %v3187 = vld [vmem:[%s3 + $0x8c] sm:$0xf]
    %v3188 = vld [vmem:[%s3 + $0x90] sm:$0xf]
    %v3189 = vld [vmem:[%s3 + $0x94] sm:$0xf]
    %v3190 = vld [vmem:[%s3 + $0x98] sm:$0xf]
    %v3191 = vld [vmem:[%s3 + $0x9c] sm:$0xf]
    %v3192 = vld [vmem:[%s3 + $0xa0] sm:$0xf]
    %v3193 = vlaneseq
    %v3194 = vshrl.u32 %v3193, 7
    %v3195 = vsub.s32 1, %v3194
    %v3196 = vrot.slane %v3095, %v3195
    %v3205 = vunpack.c.l.b16 %v3185
    %v3206 = vunpack.c.l.b16 %v3186
    %v3207 = vunpack.c.l.b16 %v3187
    %v3208 = vunpack.c.l.b16 %v3188
    %v3209 = vunpack.c.l.b16 %v3189
    %v3210 = vunpack.c.l.b16 %v3190
    %v3211 = vunpack.c.l.b16 %v3191
    %v3212 = vunpack.c.l.b16 %v3192
    %v3213 = vpack.c.b16 %v3206, %v3205
    %v3214 = vpack.c.b16 %v3208, %v3207
    %v3215 = vpack.c.b16 %v3210, %v3209
    %v3216 = vpack.c.b16 %v3212, %v3211
    %v3222 = vsel %vm2130, %v3182, 0
    %v3225 = vsel %vm2130, %v3183, 0
    %v3228 = vsel %vm2130, %v3184, 0
    %3230 = vmatprep.subr.bf16.mxu0 0
    %3231 = vmatpush1.bf16.msra.mxu0 0
    %3232 = vmatprep.subr.bf16.mxu0 0
    %3233 = vmatpush1.bf16.msra.mxu0 0
    %3234 = vmatprep.subr.bf16.mxu0 0
    %3235 = vmatpush1.bf16.msra.mxu0 0
    %3236 = vmatprep.subr.bf16.mxu0 0
    %3237 = vmatpush1.bf16.msra.mxu0 0
    %3238 = vmatprep.subr.bf16.mxu0 0
    %3239 = vmatpush1.bf16.msra.mxu0 %v3216
    %3240 = vmatprep.subr.bf16.mxu0 0
    %3241 = vmatpush1.bf16.msra.mxu0 %v3215
    %3242 = vmatprep.subr.bf16.mxu0 0
    %3243 = vmatpush1.bf16.msra.mxu0 %v3214
    %3244 = vmatprep.subr.bf16.mxu0 0
    %3245 = vmatpush1.bf16.msra.mxu0 %v3213
    %3246 = vmatprep.subr.bf16.mxu0 0
    %3247 = vmatpush2.bf16.msra.mxu0 0
    %3248 = vmatprep.subr.bf16.mxu0 0
    %3249 = vmatpush2.bf16.msra.mxu0 0
    %3250 = vmatprep.subr.bf16.mxu0 0
    %3251 = vmatpush2.bf16.msra.mxu0 0
    %3252 = vmatprep.subr.bf16.mxu0 0
    %3253 = vmatpush2.bf16.msra.mxu0 0
    %3254 = vmatprep.subr.bf16.mxu0 0
    %3255 = vmatpush2.bf16.msra.mxu0 0
    %3256 = vmatprep.subr.bf16.mxu0 0
    %3257 = vmatpush2.bf16.msra.mxu0 0
    %3258 = vmatprep.subr.bf16.mxu0 0
    %3259 = vmatpush2.bf16.msra.mxu0 0
    %3260 = vmatprep.subr.bf16.mxu0 0
    %3261 = vmatpush2.bf16.msra.mxu0 0
    %3262 = vmatprep.mubr.bf16.mxu0 0
    %3263 = vmatmul.mubr.bf16.gmra.mxu0 %v3222
    %v3264 = vpop.f32.mrf.mxu0
    %v3265 = vadd.f32 %v3196, %v3264
    %v3266 = vpop.f32.mrf.mxu0
    %v3267 = vpop.f32.mrf.mxu0
    %v3268 = vadd.f32 %v3196, %v3267
    %v3269 = vpop.f32.mrf.mxu0
    %3270 = vmatprep.mubr.bf16.mxu0 0
    %3271 = vmatmul.mubr.bf16.gmra.mxu0 %v3225
    %v3272 = vpop.f32.mrf.mxu0
    %v3273 = vadd.f32 %v3196, %v3272
    %v3274 = vpop.f32.mrf.mxu0
    %v3275 = vpop.f32.mrf.mxu0
    %v3276 = vadd.f32 %v3196, %v3275
    %v3277 = vpop.f32.mrf.mxu0
    %3278 = vmatprep.mubr.bf16.mxu0 0
    %3279 = vmatmul.mubr.bf16.gmra.mxu0 %v3228
    %v3280 = vpop.f32.mrf.mxu0
    %v3281 = vadd.f32 %v3196, %v3280
    %v3282 = vpop.f32.mrf.mxu0
    %v3283 = vpop.f32.mrf.mxu0
    %v3284 = vpop.f32.mrf.mxu0
    %3285 = vdwg.mxu0
    %v3286 = vadd.f32 %v3082, %v3265
    %v3287 = vadd.f32 %v3083, %v3268
    %v3288 = vadd.f32 %v3084, %v3273
    %v3289 = vadd.f32 %v3085, %v3276
    %v3290 = vadd.f32 %v3086, %v3281
    %v3291 = vld [vmem:[%s3 + $0x104] sm:$0x2]
    %v3292 = vunpack.c.l.bf16 %v3291
    %v3293 = vsel %vm1168, %v3286, 0.0
    %3294 = vadd.xlane.f32.xlu0 %v3293
    %v3295 = vpop.xlane.xlu0 %3294
    %v3296 = vsel %vm1168, %v3287, 0.0
    %3297 = vadd.xlane.f32.xlu0 %v3296
    %v3298 = vpop.xlane.xlu0 %3297
    %v3299 = vsel %vm1168, %v3288, 0.0
    %3300 = vadd.xlane.f32.xlu0 %v3299
    %v3301 = vpop.xlane.xlu0 %3300
    %v3302 = vsel %vm1168, %v3289, 0.0
    %3303 = vadd.xlane.f32.xlu0 %v3302
    %v3304 = vpop.xlane.xlu0 %3303
    %v3305 = vsel %vm1173, %v3290, 0.0
    %3306 = vadd.xlane.f32.xlu0 %v3305
    %v3307 = vpop.xlane.xlu0 %3306
    %v3308 = vmul.f32 %v3295, %v1927
    %v3309 = vmul.f32 %v3298, %v1927
    %v3310 = vmul.f32 %v3301, %v1927
    %v3311 = vmul.f32 %v3304, %v1927
    %v3312 = vmul.f32 %v3307, %v1927
    %v3313 = vsub.f32 %v3286, %v3308
    %v3314 = vsub.f32 %v3287, %v3309
    %v3315 = vsub.f32 %v3288, %v3310
    %v3316 = vsub.f32 %v3289, %v3311
    %v3317 = vsub.f32 %v3290, %v3312
    %v3318 = vmul.f32 %v3313, %v3313
    %v3319 = vmul.f32 %v3314, %v3314
    %v3320 = vmul.f32 %v3315, %v3315
    %v3321 = vmul.f32 %v3316, %v3316
    %v3322 = vmul.f32 %v3317, %v3317
    %v3323 = vsel %vm1168, %v3318, 0.0
    %3324 = vadd.xlane.f32.xlu0 %v3323
    %v3325 = vpop.xlane.xlu0 %3324
    %v3326 = vsel %vm1168, %v3319, 0.0
    %3327 = vadd.xlane.f32.xlu0 %v3326
    %v3328 = vpop.xlane.xlu0 %3327
    %v3329 = vsel %vm1168, %v3320, 0.0
    %3330 = vadd.xlane.f32.xlu0 %v3329
    %v3331 = vpop.xlane.xlu0 %3330
    %v3332 = vsel %vm1168, %v3321, 0.0
    %3333 = vadd.xlane.f32.xlu0 %v3332
    %v3334 = vpop.xlane.xlu0 %3333
    %v3335 = vsel %vm1173, %v3322, 0.0
    %3336 = vadd.xlane.f32.xlu0 %v3335
    %v3337 = vpop.xlane.xlu0 %3336
    %v3338 = vmul.f32 %v3325, %v1927
    %v3339 = vmul.f32 %v3328, %v1927
    %v3340 = vmul.f32 %v3331, %v1927
    %v3341 = vmul.f32 %v3334, %v1927
    %v3342 = vmul.f32 %v3337, %v1927
    %v3343 = vadd.f32 %v3338, 1e-05
    %v3344 = vadd.f32 %v3339, 1e-05
    %v3345 = vadd.f32 %v3340, 1e-05
    %v3346 = vadd.f32 %v3341, 1e-05
    %v3347 = vadd.f32 %v3342, 1e-05
    %v3348 = vrsqrt.pop %v3343
    %v3349 = vrsqrt.pop %v3344
    %v3350 = vrsqrt.pop %v3345
    %v3351 = vrsqrt.pop %v3346
    %v3352 = vrsqrt.pop %v3347
    %v3353 = vmul.f32 %v3313, %v3348
    %v3354 = vmul.f32 %v3314, %v3349
    %v3355 = vmul.f32 %v3315, %v3350
    %v3356 = vmul.f32 %v3316, %v3351
    %v3357 = vmul.f32 %v3317, %v3352
    %v3358 = vlaneseq
    %v3359 = vshrl.u32 %v3358, 7
    %v3360 = vsub.s32 2, %v3359
    %v3361 = vrot.slane %v3292, %v3360
    %v3362 = vmul.f32 %v3353, %v3361
    %v3363 = vmul.f32 %v3354, %v3361
    %v3364 = vmul.f32 %v3355, %v3361
    %v3365 = vmul.f32 %v3356, %v3361
    %v3366 = vmul.f32 %v3357, %v3361
    %v3367 = vlaneseq
    %v3368 = vshrl.u32 %v3367, 7
    %v3369 = vsub.s32 3, %v3368
    %v3370 = vrot.slane %v3292, %v3369
    %v3371 = vadd.f32 %v3362, %v3370
    %v3372 = vadd.f32 %v3363, %v3370
    %v3373 = vadd.f32 %v3364, %v3370
    %v3374 = vadd.f32 %v3365, %v3370
    %v3375 = vadd.f32 %v3366, %v3370
    %v3376 = vld [vmem:[%s3 + $0xf8] sm:$0x7]
    %v3377 = vpack.c.bf16 %v3372, %v3371
    %v3378 = vpack.c.bf16 %v3374, %v3373
    %v3379 = vpack.c.bf16 %v3375, %v3375
    %v3381 = vsel %vm1381, %v3376, 0
    %v3384 = vsel %vm1458, %v3379, 0
    %3386 = vmatprep.subr.bf16.mxu0 0
    %3387 = vmatpush1.bf16.msra.mxu0 0
    %3388 = vmatprep.subr.bf16.mxu0 0
    %3389 = vmatpush1.bf16.msra.mxu0 0
    %3390 = vmatprep.subr.bf16.mxu0 0
    %3391 = vmatpush1.bf16.msra.mxu0 0
    %3392 = vmatprep.subr.bf16.mxu0 0
    %3393 = vmatpush1.bf16.msra.mxu0 0
    %3394 = vmatprep.subr.bf16.mxu0 0
    %3395 = vmatpush1.bf16.msra.mxu0 0
    %3396 = vmatprep.subr.bf16.mxu0 0
    %3397 = vmatpush1.bf16.msra.mxu0 %v3384
    %3398 = vmatprep.subr.bf16.mxu0 0
    %3399 = vmatpush1.bf16.msra.mxu0 %v3378
    %3400 = vmatprep.subr.bf16.mxu0 0
    %3401 = vmatpush1.bf16.msra.mxu0 %v3377
    %3402 = vmatprep.subr.bf16.mxu0 0
    %3403 = vmatpush2.bf16.msra.mxu0 0
    %3404 = vmatprep.subr.bf16.mxu0 0
    %3405 = vmatpush2.bf16.msra.mxu0 0
    %3406 = vmatprep.subr.bf16.mxu0 0
    %3407 = vmatpush2.bf16.msra.mxu0 0
    %3408 = vmatprep.subr.bf16.mxu0 0
    %3409 = vmatpush2.bf16.msra.mxu0 0
    %3410 = vmatprep.subr.bf16.mxu0 0
    %3411 = vmatpush2.bf16.msra.mxu0 0
    %3412 = vmatprep.subr.bf16.mxu0 0
    %3413 = vmatpush2.bf16.msra.mxu0 0
    %3414 = vmatprep.subr.bf16.mxu0 0
    %3415 = vmatpush2.bf16.msra.mxu0 0
    %3416 = vmatprep.subr.bf16.mxu0 0
    %3417 = vmatpush2.bf16.msra.mxu0 0
    %3418 = vmatprep.mubr.bf16.mxu0 0
    %3419 = vmatmul.mubr.bf16.gmra.mxu0 %v3381
    %v3420 = vpop.f32.mrf.mxu0
    %v3421 = vadd.f32 0.0, %v3420
    %v3422 = vpop.f32.mrf.mxu0
    %v3423 = vpop.f32.mrf.mxu0
    %v3424 = vpop.f32.mrf.mxu0
    %3425 = vdwg.mxu0
    %v3426 = vpack.c.bf16 %v3421, %v3421
    %v3427 = vld [vmem:[%s3 + $0xa4] sm:$0xf]
    %v3428 = vld [vmem:[%s3 + $0xa8] sm:$0xf]
    %v3429 = vld [vmem:[%s3 + $0xac] sm:$0xf]
    %v3430 = vld [vmem:[%s3 + $0xb0] sm:$0xf]
    %v3431 = vld [vmem:[%s3 + $0xb4] sm:$0xf]
    %v3432 = vld [vmem:[%s3 + $0xb8] sm:$0xf]
    %v3433 = vld [vmem:[%s3 + $0xbc] sm:$0xf]
    %v3434 = vld [vmem:[%s3 + $0xc0] sm:$0xf]
    %v3435 = vld [vmem:[%s3 + $0xc4] sm:$0xf]
    %v3436 = vld [vmem:[%s3 + $0xc8] sm:$0xf]
    %v3437 = vld [vmem:[%s3 + $0xcc] sm:$0xf]
    %v3438 = vld [vmem:[%s3 + $0xd0] sm:$0xf]
    %v3440 = vrot.slane %v3426, 1
    %v3445 = vunpack.c.l.b16 %v3431
    %v3446 = vunpack.c.l.b16 %v3432
    %v3447 = vunpack.c.l.b16 %v3433
    %v3448 = vunpack.c.l.b16 %v3434
    %v3449 = vpack.c.b16 %v3446, %v3445
    %v3450 = vpack.c.b16 %v3448, %v3447
    %v3454 = vsel %vm1168, %v3440, 0
    %3456 = vmatprep.subr.bf16.mxu0 0
    %3457 = vmatpush1.bf16.msra.mxu0 0
    %3458 = vmatprep.subr.bf16.mxu0 0
    %3459 = vmatpush1.bf16.msra.mxu0 0
    %3460 = vmatprep.subr.bf16.mxu0 0
    %3461 = vmatpush1.bf16.msra.mxu0 0
    %3462 = vmatprep.subr.bf16.mxu0 0
    %3463 = vmatpush1.bf16.msra.mxu0 0
    %3464 = vmatprep.subr.bf16.mxu0 0
    %3465 = vmatpush1.bf16.msra.mxu0 0
    %3466 = vmatprep.subr.bf16.mxu0 0
    %3467 = vmatpush1.bf16.msra.mxu0 0
    %3468 = vmatprep.subr.bf16.mxu0 0
    %3469 = vmatpush1.bf16.msra.mxu0 %v3450
    %3470 = vmatprep.subr.bf16.mxu0 0
    %3471 = vmatpush1.bf16.msra.mxu0 %v3449
    %3472 = vmatprep.subr.bf16.mxu0 0
    %3473 = vmatpush2.bf16.msra.mxu0 0
    %3474 = vmatprep.subr.bf16.mxu0 0
    %3475 = vmatpush2.bf16.msra.mxu0 0
    %3476 = vmatprep.subr.bf16.mxu0 0
    %3477 = vmatpush2.bf16.msra.mxu0 0
    %3478 = vmatprep.subr.bf16.mxu0 0
    %3479 = vmatpush2.bf16.msra.mxu0 0
    %3480 = vmatprep.subr.bf16.mxu0 0
    %3481 = vmatpush2.bf16.msra.mxu0 0
    %3482 = vmatprep.subr.bf16.mxu0 0
    %3483 = vmatpush2.bf16.msra.mxu0 0
    %3484 = vmatprep.subr.bf16.mxu0 0
    %3485 = vmatpush2.bf16.msra.mxu0 0
    %3486 = vmatprep.subr.bf16.mxu0 0
    %3487 = vmatpush2.bf16.msra.mxu0 0
    %3488 = vmatprep.mubr.bf16.mxu0 0
    %3489 = vmatmul.mubr.bf16.gmra.mxu0 %v3454
    %v3490 = vpop.f32.mrf.mxu0
    %v3491 = vadd.f32 0.0, %v3490
    %v3492 = vpop.f32.mrf.mxu0
    %v3493 = vpop.f32.mrf.mxu0
    %v3494 = vpop.f32.mrf.mxu0
    %3495 = vdwg.mxu0
    %v3500 = vunpack.c.l.b16 %v3427
    %v3501 = vunpack.c.l.b16 %v3428
    %v3502 = vunpack.c.l.b16 %v3429
    %v3503 = vunpack.c.l.b16 %v3430
    %v3504 = vpack.c.b16 %v3501, %v3500
    %v3505 = vpack.c.b16 %v3503, %v3502
    %v3509 = vsel %vm1168, %v3426, 0
    %3511 = vmatprep.subr.bf16.mxu0 0
    %3512 = vmatpush1.bf16.msra.mxu0 0
    %3513 = vmatprep.subr.bf16.mxu0 0
    %3514 = vmatpush1.bf16.msra.mxu0 0
    %3515 = vmatprep.subr.bf16.mxu0 0
    %3516 = vmatpush1.bf16.msra.mxu0 0
    %3517 = vmatprep.subr.bf16.mxu0 0
    %3518 = vmatpush1.bf16.msra.mxu0 0
    %3519 = vmatprep.subr.bf16.mxu0 0
    %3520 = vmatpush1.bf16.msra.mxu0 0
    %3521 = vmatprep.subr.bf16.mxu0 0
    %3522 = vmatpush1.bf16.msra.mxu0 0
    %3523 = vmatprep.subr.bf16.mxu0 0
    %3524 = vmatpush1.bf16.msra.mxu0 %v3505
    %3525 = vmatprep.subr.bf16.mxu0 0
    %3526 = vmatpush1.bf16.msra.mxu0 %v3504
    %3527 = vmatprep.subr.bf16.mxu0 0
    %3528 = vmatpush2.bf16.msra.mxu0 0
    %3529 = vmatprep.subr.bf16.mxu0 0
    %3530 = vmatpush2.bf16.msra.mxu0 0
    %3531 = vmatprep.subr.bf16.mxu0 0
    %3532 = vmatpush2.bf16.msra.mxu0 0
    %3533 = vmatprep.subr.bf16.mxu0 0
    %3534 = vmatpush2.bf16.msra.mxu0 0
    %3535 = vmatprep.subr.bf16.mxu0 0
    %3536 = vmatpush2.bf16.msra.mxu0 0
    %3537 = vmatprep.subr.bf16.mxu0 0
    %3538 = vmatpush2.bf16.msra.mxu0 0
    %3539 = vmatprep.subr.bf16.mxu0 0
    %3540 = vmatpush2.bf16.msra.mxu0 0
    %3541 = vmatprep.subr.bf16.mxu0 0
    %3542 = vmatpush2.bf16.msra.mxu0 0
    %3543 = vmatprep.mubr.bf16.mxu0 0
    %3544 = vmatmul.mubr.bf16.gmra.mxu0 %v3509
    %v3545 = vpop.f32.mrf.mxu0
    %v3546 = vadd.f32 %v3491, %v3545
    %v3547 = vpop.f32.mrf.mxu0
    %v3548 = vpop.f32.mrf.mxu0
    %v3549 = vpop.f32.mrf.mxu0
    %3550 = vdwg.mxu0
    %v3551 = vrot.slane %v3426, 2
    %v3556 = vunpack.c.l.b16 %v3435
    %v3557 = vunpack.c.l.b16 %v3436
    %v3558 = vunpack.c.l.b16 %v3437
    %v3559 = vunpack.c.l.b16 %v3438
    %v3560 = vpack.c.b16 %v3557, %v3556
    %v3561 = vpack.c.b16 %v3559, %v3558
    %v3565 = vsel %vm1168, %v3551, 0
    %3567 = vmatprep.subr.bf16.mxu0 0
    %3568 = vmatpush1.bf16.msra.mxu0 0
    %3569 = vmatprep.subr.bf16.mxu0 0
    %3570 = vmatpush1.bf16.msra.mxu0 0
    %3571 = vmatprep.subr.bf16.mxu0 0
    %3572 = vmatpush1.bf16.msra.mxu0 0
    %3573 = vmatprep.subr.bf16.mxu0 0
    %3574 = vmatpush1.bf16.msra.mxu0 0
    %3575 = vmatprep.subr.bf16.mxu0 0
    %3576 = vmatpush1.bf16.msra.mxu0 0
    %3577 = vmatprep.subr.bf16.mxu0 0
    %3578 = vmatpush1.bf16.msra.mxu0 0
    %3579 = vmatprep.subr.bf16.mxu0 0
    %3580 = vmatpush1.bf16.msra.mxu0 %v3561
    %3581 = vmatprep.subr.bf16.mxu0 0
    %3582 = vmatpush1.bf16.msra.mxu0 %v3560
    %3583 = vmatprep.subr.bf16.mxu0 0
    %3584 = vmatpush2.bf16.msra.mxu0 0
    %3585 = vmatprep.subr.bf16.mxu0 0
    %3586 = vmatpush2.bf16.msra.mxu0 0
    %3587 = vmatprep.subr.bf16.mxu0 0
    %3588 = vmatpush2.bf16.msra.mxu0 0
    %3589 = vmatprep.subr.bf16.mxu0 0
    %3590 = vmatpush2.bf16.msra.mxu0 0
    %3591 = vmatprep.subr.bf16.mxu0 0
    %3592 = vmatpush2.bf16.msra.mxu0 0
    %3593 = vmatprep.subr.bf16.mxu0 0
    %3594 = vmatpush2.bf16.msra.mxu0 0
    %3595 = vmatprep.subr.bf16.mxu0 0
    %3596 = vmatpush2.bf16.msra.mxu0 0
    %3597 = vmatprep.subr.bf16.mxu0 0
    %3598 = vmatpush2.bf16.msra.mxu0 0
    %3599 = vmatprep.mubr.bf16.mxu0 0
    %3600 = vmatmul.mubr.bf16.gmra.mxu0 %v3565
    %v3601 = vpop.f32.mrf.mxu0
    %v3602 = vadd.f32 0.0, %v3601
    %v3603 = vpop.f32.mrf.mxu0
    %v3604 = vpop.f32.mrf.mxu0
    %v3605 = vpop.f32.mrf.mxu0
    %3606 = vdwg.mxu0
    %v3607 = vadd.f32 %v3546, %v3602
    %v3608 = vld [vmem:[%s3 + $0xfc] sm:$0x2]
    %v3609 = vunpack.c.l.bf16 %v3608
    %v3610 = vlaneseq
    %v3611 = vshrl.u32 %v3610, 7
    %v3612 = vsub.s32 2, %v3611
    %v3613 = vrot.slane %v3609, %v3612
    %v3614 = vadd.f32 %v3607, %v3613
    %v3615 = vmax.f32 %v3614, 0.0
    %v3616 = vpack.c.bf16 %v3615, %v3615
    %v3617 = vld [vmem:[%s3 + $0xd4] sm:$0xf]
    %v3618 = vld [vmem:[%s3 + $0xd8] sm:$0xf]
    %v3619 = vld [vmem:[%s3 + $0xdc] sm:$0xf]
    %v3620 = vld [vmem:[%s3 + $0xe0] sm:$0xf]
    %v3621 = vlaneseq
    %v3622 = vshrl.u32 %v3621, 7
    %v3623 = vsub.s32 3, %v3622
    %v3624 = vrot.slane %v3609, %v3623
    %v3629 = vunpack.c.l.b16 %v3617
    %v3630 = vunpack.c.l.b16 %v3618
    %v3631 = vunpack.c.l.b16 %v3619
    %v3632 = vunpack.c.l.b16 %v3620
    %v3633 = vpack.c.b16 %v3630, %v3629
    %v3634 = vpack.c.b16 %v3632, %v3631
    %v3638 = vsel %vm1168, %v3616, 0
    %3640 = vmatprep.subr.bf16.mxu0 0
    %3641 = vmatpush1.bf16.msra.mxu0 0
    %3642 = vmatprep.subr.bf16.mxu0 0
    %3643 = vmatpush1.bf16.msra.mxu0 0
    %3644 = vmatprep.subr.bf16.mxu0 0
    %3645 = vmatpush1.bf16.msra.mxu0 0
    %3646 = vmatprep.subr.bf16.mxu0 0
    %3647 = vmatpush1.bf16.msra.mxu0 0
    %3648 = vmatprep.subr.bf16.mxu0 0
    %3649 = vmatpush1.bf16.msra.mxu0 0
    %3650 = vmatprep.subr.bf16.mxu0 0
    %3651 = vmatpush1.bf16.msra.mxu0 0
    %3652 = vmatprep.subr.bf16.mxu0 0
    %3653 = vmatpush1.bf16.msra.mxu0 %v3634
    %3654 = vmatprep.subr.bf16.mxu0 0
    %3655 = vmatpush1.bf16.msra.mxu0 %v3633
    %3656 = vmatprep.subr.bf16.mxu0 0
    %3657 = vmatpush2.bf16.msra.mxu0 0
    %3658 = vmatprep.subr.bf16.mxu0 0
    %3659 = vmatpush2.bf16.msra.mxu0 0
    %3660 = vmatprep.subr.bf16.mxu0 0
    %3661 = vmatpush2.bf16.msra.mxu0 0
    %3662 = vmatprep.subr.bf16.mxu0 0
    %3663 = vmatpush2.bf16.msra.mxu0 0
    %3664 = vmatprep.subr.bf16.mxu0 0
    %3665 = vmatpush2.bf16.msra.mxu0 0
    %3666 = vmatprep.subr.bf16.mxu0 0
    %3667 = vmatpush2.bf16.msra.mxu0 0
    %3668 = vmatprep.subr.bf16.mxu0 0
    %3669 = vmatpush2.bf16.msra.mxu0 0
    %3670 = vmatprep.subr.bf16.mxu0 0
    %3671 = vmatpush2.bf16.msra.mxu0 0
    %3672 = vmatprep.mubr.bf16.mxu0 0
    %3673 = vmatmul.mubr.bf16.gmra.mxu0 %v3638
    %v3674 = vpop.f32.mrf.mxu0
    %v3675 = vadd.f32 %v3624, %v3674
    %v3676 = vpop.f32.mrf.mxu0
    %v3677 = vpop.f32.mrf.mxu0
    %v3678 = vpop.f32.mrf.mxu0
    %3679 = vdwg.mxu0
    %vm3680 = vcmask 41984
    %3681 = vst.msk [vmem:[#allocation3] sm:$0x3] %vm3680, %v3675
    // Predicated region
    $region18: #{forward.1} parent=1 // pred_check
      _
    $region19: #{forward.1} parent=1 // pred_check_branch
      %3683 = sbr.rel (0) target = $region21
    $region20: #{forward.1} parent=1 // pred_region
      %s3685 = ssub.s32 32, 32
      %3686 = vsyncadd [#allocation4], %s3685
      %s3688 = sshll.u32 [#allocation3], 4
      %s3689 = int_to_ptr.vmem [resolvable:$true] %s3688
      %3691 = dma.vmem_to_hbm [thread:$0]  %s3689, 32, %s4, [#allocation4]
    $region21: #{forward.1} parent=1 // pred_fallthru
      _
    // Predicated region
    $region22: #{forward.1} parent=1 // pred_check
      _
    $region23: #{forward.1} parent=1 // pred_check_branch
      %3693 = sbr.rel (0) target = $region25
    $region24: #{forward.1} parent=1 // pred_region
      %3694 = dma.done [#allocation4], 32
    $region25: #{forward.1} parent=1 // pred_fallthru
      _
    %3695 = vsyncpa [#allocation4], 1

</llo_original>
